<compile_context>
chip_gen: v7x
topology: tpu7x:2x2x1
jax: 0.10.0
libtpu: 0.0.40
codegen_flags: <defaults>
</compile_context>

<pallas_src>
import functools

import jax
import jax.numpy as jnp
from jax.experimental import pallas as pl
from jax.experimental.pallas import tpu as pltpu

EPS_LN = 1e-5
EPS_BN = 1e-5


# ------------------------- fused Pallas kernels -------------------------


def _conv_bn_relu_pool_kernel(xp_ref, w_ref, b_ref, o_ref, *, cin, lpool):
    """Conv1d(k=5,s=2,p=2)+BN(eval,folded)+ReLU+MaxPool1d(2,2) for one batch.

    xp_ref : (1, lpool+1, 4*cin)  padded input, sequence regrouped in 4 phases
    w_ref  : (5, cin, E)          BN-folded conv weights, one (cin,E) per tap
    b_ref  : (1, E)               BN-folded bias
    o_ref  : (1, lpool, E)
    """
    xall = xp_ref[0]                        # (lpool+1, 4*cin)
    b = b_ref[...]                          # (1, E)

    def ph(j, lo, hi):                      # phase j (== padded index % 4), rows [lo, hi)
        return xall[lo:hi, j * cin:(j + 1) * cin]

    def mm(a, k):
        return jnp.dot(a, w_ref[k], preferred_element_type=jnp.float32)

    x0a = ph(0, 0, lpool)
    x1a = ph(1, 0, lpool)
    x2a = ph(2, 0, lpool)
    x3a = ph(3, 0, lpool)
    x0b = ph(0, 1, lpool + 1)
    x1b = ph(1, 1, lpool + 1)
    x2b = ph(2, 1, lpool + 1)

    # conv output rows 2p (even) and 2p+1 (odd), p = 0..lpool-1
    y_even = mm(x0a, 0) + mm(x1a, 1) + mm(x2a, 2) + mm(x3a, 3) + mm(x0b, 4)
    y_odd = mm(x2a, 0) + mm(x3a, 1) + mm(x0b, 2) + mm(x1b, 3) + mm(x2b, 4)

    y_even = jnp.maximum(y_even + b, 0.0)   # folded BN + ReLU
    y_odd = jnp.maximum(y_odd + b, 0.0)
    o_ref[0] = jnp.maximum(y_even, y_odd)   # fused MaxPool1d(kernel=2, stride=2)


def _transformer_block_kernel(x_ref, wqkv_ref, bqkv_ref, wo_ref, bo_ref,
                              ln1g_ref, ln1b_ref, wf1_ref, bf1_ref,
                              wf2_ref, bf2_ref, ln2g_ref, ln2b_ref,
                              o_ref, *, num_heads):
    """Entire TransformerBlock (inference) for one batch element, in VMEM."""
    x = x_ref[0]                            # (S, E)
    S, E = x.shape
    dh = E // num_heads

    # packed QKV projection (1/sqrt(dh) already folded into the Q columns)
    qkv = jnp.dot(x, wqkv_ref[...], preferred_element_type=jnp.float32) + bqkv_ref[...]
    q = qkv[:, 0:E]
    k = qkv[:, E:2 * E]
    v = qkv[:, 2 * E:3 * E]

    # per-head scaled-dot-product attention on VMEM-resident slices
    ctx_heads = []
    for hd in range(num_heads):
        sl = slice(hd * dh, (hd + 1) * dh)
        qh, kh, vh = q[:, sl], k[:, sl], v[:, sl]
        s = jax.lax.dot_general(qh, kh, (((1,), (1,)), ((), ())),
                                preferred_element_type=jnp.float32)     # (S, S)
        s = s - jnp.max(s, axis=-1, keepdims=True)
        p = jnp.exp(s)
        p = p * pl.reciprocal(jnp.sum(p, axis=-1, keepdims=True), approx=True)
        ctx_heads.append(jnp.dot(p, vh, preferred_element_type=jnp.float32))
    ctx = jnp.concatenate(ctx_heads, axis=-1)                           # (S, E)

    attn = jnp.dot(ctx, wo_ref[...], preferred_element_type=jnp.float32) + bo_ref[...]

    # residual + LayerNorm1
    z = x + attn
    mu = jnp.mean(z, axis=-1, keepdims=True)
    var = jnp.mean((z - mu) * (z - mu), axis=-1, keepdims=True)
    z = (z - mu) * jax.lax.rsqrt(var + EPS_LN) * ln1g_ref[...] + ln1b_ref[...]

    # feed-forward
    h1 = jnp.dot(z, wf1_ref[...], preferred_element_type=jnp.float32) + bf1_ref[...]
    h1 = jnp.maximum(h1, 0.0)
    f = jnp.dot(h1, wf2_ref[...], preferred_element_type=jnp.float32) + bf2_ref[...]

    # residual + LayerNorm2
    z2 = z + f
    mu2 = jnp.mean(z2, axis=-1, keepdims=True)
    var2 = jnp.mean((z2 - mu2) * (z2 - mu2), axis=-1, keepdims=True)
    o_ref[0] = (z2 - mu2) * jax.lax.rsqrt(var2 + EPS_LN) * ln2g_ref[...] + ln2b_ref[...]


def _pool_classifier_kernel(h_ref, w1_ref, b1_ref, w2_ref, b2_ref, o_ref):
    """mean over sequence + Linear(E,64) + ReLU + Linear(64,1) + Sigmoid."""
    pooled = jnp.mean(h_ref[...], axis=1)                               # (B, E)
    c = jnp.dot(pooled, w1_ref[...], preferred_element_type=jnp.float32) + b1_ref[...]
    c = jnp.maximum(c, 0.0)
    z = jnp.dot(c, w2_ref[...], preferred_element_type=jnp.float32) + b2_ref[...]
    o_ref[...] = 1.0 / (1.0 + jnp.exp(-z))


# ------------------------- wrappers -------------------------


def conv1d_bn_relu_maxpool(x, p, kernel_size=5):
    """Fused projection stage: Conv1d(k=5,s=2,p=2)+BN(eval)+ReLU+MaxPool1d(2,2)."""
    B, S, Cin = x.shape
    E = p["conv_b"].shape[0]
    assert S % 4 == 0, "sequence_length must be divisible by 4"
    L_pool = S // 4

    # Fold eval-mode BatchNorm1d into the conv weight/bias.
    s = p["bn_gamma"] / jnp.sqrt(p["bn_var"] + EPS_BN)
    w_eff = (p["conv_w"] * s[None, :]).reshape(kernel_size, Cin, E)
    b_eff = (p["conv_b"] * s + p["bn_beta"] - p["bn_mean"] * s).reshape(1, E)

    # Pad for the stride-2/pad-2 conv and regroup the sequence into 4 phases so
    # the kernel only needs contiguous row slices (no 5x im2col in HBM).
    xp = jnp.pad(x, ((0, 0), (2, 2), (0, 0)))            # (B, S+4, Cin)
    xph = xp.reshape(B, L_pool + 1, 4 * Cin)             # phases packed on lanes

    return pl.pallas_call(
        functools.partial(_conv_bn_relu_pool_kernel, cin=Cin, lpool=L_pool),
        out_shape=jax.ShapeDtypeStruct((B, L_pool, E), jnp.float32),
        grid=(B,),
        in_specs=[
            pl.BlockSpec((1, L_pool + 1, 4 * Cin), lambda b: (b, 0, 0)),
            pl.BlockSpec((kernel_size, Cin, E), lambda b: (0, 0, 0)),
            pl.BlockSpec((1, E), lambda b: (0, 0)),
        ],
        out_specs=pl.BlockSpec((1, L_pool, E), lambda b: (b, 0, 0)),
        compiler_params=pltpu.CompilerParams(dimension_semantics=("parallel",)),
    )(xph, w_eff, b_eff)


def fused_transformer_block(x, blk, num_heads):
    """One pallas_call per TransformerBlock, gridded over batch."""
    B, S, E = x.shape
    Dh = E // num_heads
    FF = blk["w_ff1"].shape[1]

    # Fold the 1/sqrt(Dh) attention scale into the Q columns of w_in / b_in.
    scale = 1.0 / (Dh ** 0.5)
    col_scale = jnp.concatenate([jnp.full((E,), scale, jnp.float32),
                                 jnp.ones((2 * E,), jnp.float32)])
    w_qkv = blk["w_in"] * col_scale[None, :]
    b_qkv = (blk["b_in"] * col_scale).reshape(1, 3 * E)

    args = (
        x, w_qkv, b_qkv,
        blk["w_out"], blk["b_out"].reshape(1, E),
        blk["ln1_g"].reshape(1, E), blk["ln1_b"].reshape(1, E),
        blk["w_ff1"], blk["b_ff1"].reshape(1, FF),
        blk["w_ff2"], blk["b_ff2"].reshape(1, E),
        blk["ln2_g"].reshape(1, E), blk["ln2_b"].reshape(1, E),
    )

    def full(shape):
        return pl.BlockSpec(shape, lambda b, _s=shape: (0,) * len(_s))

    in_specs = [
        pl.BlockSpec((1, S, E), lambda b: (b, 0, 0)),     # x
        full((E, 3 * E)), full((1, 3 * E)),               # qkv proj
        full((E, E)), full((1, E)),                       # out proj
        full((1, E)), full((1, E)),                       # ln1
        full((E, FF)), full((1, FF)),                     # ff1
        full((FF, E)), full((1, E)),                      # ff2
        full((1, E)), full((1, E)),                       # ln2
    ]

    return pl.pallas_call(
        functools.partial(_transformer_block_kernel, num_heads=num_heads),
        out_shape=jax.ShapeDtypeStruct((B, S, E), jnp.float32),
        grid=(B,),
        in_specs=in_specs,
        out_specs=pl.BlockSpec((1, S, E), lambda b: (b, 0, 0)),
        compiler_params=pltpu.CompilerParams(dimension_semantics=("parallel",)),
    )(*args)


def pool_and_classify(h, params):
    B, S, E = h.shape
    return pl.pallas_call(
        _pool_classifier_kernel,
        out_shape=jax.ShapeDtypeStruct((B, 1), jnp.float32),
    )(h, params["cls_w1"], params["cls_b1"].reshape(1, -1),
      params["cls_w2"], params["cls_b2"].reshape(1, 1))


def transformer_model_forward(x, params, num_heads):
    # Dropout layers are identity at inference time.
    h = conv1d_bn_relu_maxpool(x, params)            # (B, S//4, E)
    for blk in params["blocks"]:
        h = fused_transformer_block(h, blk, num_heads)
    return pool_and_classify(h, params)              # (B, 1)


# ------------------------- parameters -------------------------


def init_params(key, num_leads, embed_dim, ff_dim, num_blocks, kernel_size=5):
    def nrm(k, shape, scale=0.2):
        return scale * jax.random.normal(k, shape, dtype=jnp.float32)

    keys = iter(jax.random.split(key, 64))
    p = {}
    # Conv1d(num_leads -> embed_dim, k=5): weight stored as (K*Cin, E),
    # row index = k*Cin + c  (i.e. PyTorch weight[e, c, k] transposed).
    p["conv_w"] = nrm(next(keys), (kernel_size * num_leads, embed_dim))
    p["conv_b"] = nrm(next(keys), (embed_dim,))
    # BatchNorm1d (eval mode): running stats + affine.
    p["bn_gamma"] = 1.0 + nrm(next(keys), (embed_dim,))
    p["bn_beta"] = nrm(next(keys), (embed_dim,))
    p["bn_mean"] = nrm(next(keys), (embed_dim,))
    p["bn_var"] = 1.0 + jnp.abs(nrm(next(keys), (embed_dim,)))
    blocks = []
    for _ in range(num_blocks):
        blocks.append({
            "w_in": nrm(next(keys), (embed_dim, 3 * embed_dim)),
            "b_in": nrm(next(keys), (3 * embed_dim,)),
            "w_out": nrm(next(keys), (embed_dim, embed_dim)),
            "b_out": nrm(next(keys), (embed_dim,)),
            "ln1_g": 1.0 + nrm(next(keys), (embed_dim,)),
            "ln1_b": nrm(next(keys), (embed_dim,)),
            "w_ff1": nrm(next(keys), (embed_dim, ff_dim)),
            "b_ff1": nrm(next(keys), (ff_dim,)),
            "w_ff2": nrm(next(keys), (ff_dim, embed_dim)),
            "b_ff2": nrm(next(keys), (embed_dim,)),
            "ln2_g": 1.0 + nrm(next(keys), (embed_dim,)),
            "ln2_b": nrm(next(keys), (embed_dim,)),
        })
    p["blocks"] = blocks
    p["cls_w1"] = nrm(next(keys), (embed_dim, 64))
    p["cls_b1"] = nrm(next(keys), (64,))
    p["cls_w2"] = nrm(next(keys), (64, 1))
    p["cls_b2"] = nrm(next(keys), (1,))
    return p


# ------------------------- pure-JAX reference (for verification) -------------------------


def _layernorm_ref(x, g, b):
    mu = jnp.mean(x, axis=-1, keepdims=True)
    var = jnp.mean((x - mu) ** 2, axis=-1, keepdims=True)
    return (x - mu) / jnp.sqrt(var + EPS_LN) * g + b


def reference_forward(x, params, num_heads):
    B, S, Cin = x.shape
    E = params["conv_b"].shape[0]
    K = 5
    # Conv1d(k=5,s=2,p=2) via im2col + BN(eval) + ReLU + MaxPool1d(2,2)
    xp = jnp.pad(x, ((0, 0), (2, 2), (0, 0)))
    L_out = S // 2
    idx = 2 * jnp.arange(L_out)[:, None] + jnp.arange(K)[None, :]
    patches = xp[:, idx, :].reshape(B, L_out, K * Cin)
    y = patches @ params["conv_w"] + params["conv_b"]
    s = params["bn_gamma"] / jnp.sqrt(params["bn_var"] + EPS_BN)
    y = (y - params["bn_mean"]) * s + params["bn_beta"]
    y = jnp.maximum(y, 0.0)
    h = jnp.maximum(y[:, 0::2, :], y[:, 1::2, :])
    # transformer blocks
    Dh = E // num_heads
    for blk in params["blocks"]:
        qkv = h @ blk["w_in"] + blk["b_in"]
        q, k, v = jnp.split(qkv, 3, axis=-1)

        def heads(t):
            return t.reshape(B, -1, num_heads, Dh).transpose(0, 2, 1, 3)

        qh, kh, vh = heads(q), heads(k), heads(v)
        sc = jnp.einsum("bhqd,bhkd->bhqk", qh, kh) / jnp.sqrt(1.0 * Dh)
        p = jax.nn.softmax(sc, axis=-1)
        ctx = jnp.einsum("bhqk,bhkd->bhqd", p, vh)
        ctx = ctx.transpose(0, 2, 1, 3).reshape(B, -1, E)
        attn = ctx @ blk["w_out"] + blk["b_out"]
        h = _layernorm_ref(h + attn, blk["ln1_g"], blk["ln1_b"])
        ff = jnp.maximum(h @ blk["w_ff1"] + blk["b_ff1"], 0.0) @ blk["w_ff2"] + blk["b_ff2"]
        h = _layernorm_ref(h + ff, blk["ln2_g"], blk["ln2_b"])
    pooled = jnp.mean(h, axis=1)
    c = jnp.maximum(pooled @ params["cls_w1"] + params["cls_b1"], 0.0)
    return jax.nn.sigmoid(c @ params["cls_w2"] + params["cls_b2"])


# ------------------------- main -------------------------


if __name__ == "__main__":
    # Small shapes consistent with the module: sequence_length divisible by 4.
    B, SEQ, LEADS = 2, 32, 4
    EMBED, HEADS, FF, NBLOCKS = 32, 4, 64, 2

    key = jax.random.PRNGKey(0)
    kx, kp = jax.random.split(key)
    x = jax.random.normal(kx, (B, SEQ, LEADS), dtype=jnp.float32)
    params = init_params(kp, LEADS, EMBED, FF, NBLOCKS)

    fwd = jax.jit(functools.partial(transformer_model_forward, num_heads=HEADS))
    out = fwd(x, params)
    jax.block_until_ready(out)

    assert out.shape == (B, 1)
    assert bool(jnp.all(jnp.isfinite(out)))

    # Pure-JAX reference check (loose tolerance: approx-reciprocal softmax).
    ref = reference_forward(x, params, HEADS)
    err = float(jnp.max(jnp.abs(out - ref)))
    assert err < 2e-2, f"mismatch vs reference: max abs err = {err}"

    print("KERNEL_OK")
</pallas_src>

<mosaic_0001>
module attributes {stable_mosaic.version = 11 : i64} {
  func.func @_conv_bn_relu_pool_kernel(%arg0: i32, %arg1: memref<1x9x16xf32, #tpu.memory_space<vmem>>, %arg2: memref<5x4x32xf32, #tpu.memory_space<vmem>>, %arg3: memref<1x32xf32, #tpu.memory_space<vmem>>, %arg4: memref<1x8x32xf32, #tpu.memory_space<vmem>>) attributes {dimension_semantics = [#tpu.dimension_semantics<parallel>], iteration_bounds = array<i64: 2>, scalar_prefetch = 0 : i64, scratch_operands = 0 : i64, tpu.core_type = #tpu.core_type<tc>, window_params = [{transform_indices = @transform_0, window_bounds = array<i64: 1, 9, 16>}, {pipeline_mode = #tpu.pipeline_mode<synchronous>, transform_indices = @transform_1, window_bounds = array<i64: 5, 4, 32>}, {pipeline_mode = #tpu.pipeline_mode<synchronous>, transform_indices = @transform_2, window_bounds = array<i64: 1, 32>}, {transform_indices = @transform_3, window_bounds = array<i64: 1, 8, 32>}]} {
    %c0 = arith.constant 0 : index
    %c0_0 = arith.constant 0 : index
    %c0_1 = arith.constant 0 : index
    %0 = vector.load %arg1[%c0, %c0_0, %c0_1] : memref<1x9x16xf32, #tpu.memory_space<vmem>>, vector<1x9x16xf32>
    %1 = vector.shape_cast %0 : vector<1x9x16xf32> to vector<9x16xf32>
    %c0_2 = arith.constant 0 : index
    %c0_3 = arith.constant 0 : index
    %2 = vector.load %arg3[%c0_2, %c0_3] : memref<1x32xf32, #tpu.memory_space<vmem>>, vector<1x32xf32>
    %3 = vector.extract_strided_slice %1 {offsets = [0, 0], sizes = [8, 4], strides = [1, 1]} : vector<9x16xf32> to vector<8x4xf32>
    %4 = vector.extract_strided_slice %1 {offsets = [0, 4], sizes = [8, 4], strides = [1, 1]} : vector<9x16xf32> to vector<8x4xf32>
    %5 = vector.extract_strided_slice %1 {offsets = [0, 8], sizes = [8, 4], strides = [1, 1]} : vector<9x16xf32> to vector<8x4xf32>
    %6 = vector.extract_strided_slice %1 {offsets = [0, 12], sizes = [8, 4], strides = [1, 1]} : vector<9x16xf32> to vector<8x4xf32>
    %7 = vector.extract_strided_slice %1 {offsets = [1, 0], sizes = [8, 4], strides = [1, 1]} : vector<9x16xf32> to vector<8x4xf32>
    %8 = vector.extract_strided_slice %1 {offsets = [1, 4], sizes = [8, 4], strides = [1, 1]} : vector<9x16xf32> to vector<8x4xf32>
    %9 = vector.extract_strided_slice %1 {offsets = [1, 8], sizes = [8, 4], strides = [1, 1]} : vector<9x16xf32> to vector<8x4xf32>
    %c0_4 = arith.constant 0 : index
    %c0_5 = arith.constant 0 : index
    %c0_6 = arith.constant 0 : index
    %10 = vector.load %arg2[%c0_4, %c0_5, %c0_6] : memref<5x4x32xf32, #tpu.memory_space<vmem>>, vector<1x4x32xf32>
    %11 = vector.shape_cast %10 : vector<1x4x32xf32> to vector<4x32xf32>
    %cst = arith.constant dense<0.000000e+00> : vector<8x32xf32>
    %12 = tpu.matmul %3, %11, %cst {dimension_numbers = #tpu.dot_dimension_numbers<[1], [0], [0], [1], [0, 0, 1, 1], [], []>} : vector<8x4xf32>, vector<4x32xf32>, vector<8x32xf32> -> vector<8x32xf32>
    %c1 = arith.constant 1 : index
    %c0_7 = arith.constant 0 : index
    %c0_8 = arith.constant 0 : index
    %13 = vector.load %arg2[%c1, %c0_7, %c0_8] : memref<5x4x32xf32, #tpu.memory_space<vmem>>, vector<1x4x32xf32>
    %14 = vector.shape_cast %13 : vector<1x4x32xf32> to vector<4x32xf32>
    %cst_9 = arith.constant dense<0.000000e+00> : vector<8x32xf32>
    %15 = tpu.matmul %4, %14, %cst_9 {dimension_numbers = #tpu.dot_dimension_numbers<[1], [0], [0], [1], [0, 0, 1, 1], [], []>} : vector<8x4xf32>, vector<4x32xf32>, vector<8x32xf32> -> vector<8x32xf32>
    %16 = arith.addf %12, %15 : vector<8x32xf32>
    %c2 = arith.constant 2 : index
    %c0_10 = arith.constant 0 : index
    %c0_11 = arith.constant 0 : index
    %17 = vector.load %arg2[%c2, %c0_10, %c0_11] : memref<5x4x32xf32, #tpu.memory_space<vmem>>, vector<1x4x32xf32>
    %18 = vector.shape_cast %17 : vector<1x4x32xf32> to vector<4x32xf32>
    %cst_12 = arith.constant dense<0.000000e+00> : vector<8x32xf32>
    %19 = tpu.matmul %5, %18, %cst_12 {dimension_numbers = #tpu.dot_dimension_numbers<[1], [0], [0], [1], [0, 0, 1, 1], [], []>} : vector<8x4xf32>, vector<4x32xf32>, vector<8x32xf32> -> vector<8x32xf32>
    %20 = arith.addf %16, %19 : vector<8x32xf32>
    %c3 = arith.constant 3 : index
    %c0_13 = arith.constant 0 : index
    %c0_14 = arith.constant 0 : index
    %21 = vector.load %arg2[%c3, %c0_13, %c0_14] : memref<5x4x32xf32, #tpu.memory_space<vmem>>, vector<1x4x32xf32>
    %22 = vector.shape_cast %21 : vector<1x4x32xf32> to vector<4x32xf32>
    %cst_15 = arith.constant dense<0.000000e+00> : vector<8x32xf32>
    %23 = tpu.matmul %6, %22, %cst_15 {dimension_numbers = #tpu.dot_dimension_numbers<[1], [0], [0], [1], [0, 0, 1, 1], [], []>} : vector<8x4xf32>, vector<4x32xf32>, vector<8x32xf32> -> vector<8x32xf32>
    %24 = arith.addf %20, %23 : vector<8x32xf32>
    %c4 = arith.constant 4 : index
    %c0_16 = arith.constant 0 : index
    %c0_17 = arith.constant 0 : index
    %25 = vector.load %arg2[%c4, %c0_16, %c0_17] : memref<5x4x32xf32, #tpu.memory_space<vmem>>, vector<1x4x32xf32>
    %26 = vector.shape_cast %25 : vector<1x4x32xf32> to vector<4x32xf32>
    %cst_18 = arith.constant dense<0.000000e+00> : vector<8x32xf32>
    %27 = tpu.matmul %7, %26, %cst_18 {dimension_numbers = #tpu.dot_dimension_numbers<[1], [0], [0], [1], [0, 0, 1, 1], [], []>} : vector<8x4xf32>, vector<4x32xf32>, vector<8x32xf32> -> vector<8x32xf32>
    %28 = arith.addf %24, %27 : vector<8x32xf32>
    %c0_19 = arith.constant 0 : index
    %c0_20 = arith.constant 0 : index
    %c0_21 = arith.constant 0 : index
    %29 = vector.load %arg2[%c0_19, %c0_20, %c0_21] : memref<5x4x32xf32, #tpu.memory_space<vmem>>, vector<1x4x32xf32>
    %30 = vector.shape_cast %29 : vector<1x4x32xf32> to vector<4x32xf32>
    %cst_22 = arith.constant dense<0.000000e+00> : vector<8x32xf32>
    %31 = tpu.matmul %5, %30, %cst_22 {dimension_numbers = #tpu.dot_dimension_numbers<[1], [0], [0], [1], [0, 0, 1, 1], [], []>} : vector<8x4xf32>, vector<4x32xf32>, vector<8x32xf32> -> vector<8x32xf32>
    %c1_23 = arith.constant 1 : index
    %c0_24 = arith.constant 0 : index
    %c0_25 = arith.constant 0 : index
    %32 = vector.load %arg2[%c1_23, %c0_24, %c0_25] : memref<5x4x32xf32, #tpu.memory_space<vmem>>, vector<1x4x32xf32>
    %33 = vector.shape_cast %32 : vector<1x4x32xf32> to vector<4x32xf32>
    %cst_26 = arith.constant dense<0.000000e+00> : vector<8x32xf32>
    %34 = tpu.matmul %6, %33, %cst_26 {dimension_numbers = #tpu.dot_dimension_numbers<[1], [0], [0], [1], [0, 0, 1, 1], [], []>} : vector<8x4xf32>, vector<4x32xf32>, vector<8x32xf32> -> vector<8x32xf32>
    %35 = arith.addf %31, %34 : vector<8x32xf32>
    %c2_27 = arith.constant 2 : index
    %c0_28 = arith.constant 0 : index
    %c0_29 = arith.constant 0 : index
    %36 = vector.load %arg2[%c2_27, %c0_28, %c0_29] : memref<5x4x32xf32, #tpu.memory_space<vmem>>, vector<1x4x32xf32>
    %37 = vector.shape_cast %36 : vector<1x4x32xf32> to vector<4x32xf32>
    %cst_30 = arith.constant dense<0.000000e+00> : vector<8x32xf32>
    %38 = tpu.matmul %7, %37, %cst_30 {dimension_numbers = #tpu.dot_dimension_numbers<[1], [0], [0], [1], [0, 0, 1, 1], [], []>} : vector<8x4xf32>, vector<4x32xf32>, vector<8x32xf32> -> vector<8x32xf32>
    %39 = arith.addf %35, %38 : vector<8x32xf32>
    %c3_31 = arith.constant 3 : index
    %c0_32 = arith.constant 0 : index
    %c0_33 = arith.constant 0 : index
    %40 = vector.load %arg2[%c3_31, %c0_32, %c0_33] : memref<5x4x32xf32, #tpu.memory_space<vmem>>, vector<1x4x32xf32>
    %41 = vector.shape_cast %40 : vector<1x4x32xf32> to vector<4x32xf32>
    %cst_34 = arith.constant dense<0.000000e+00> : vector<8x32xf32>
    %42 = tpu.matmul %8, %41, %cst_34 {dimension_numbers = #tpu.dot_dimension_numbers<[1], [0], [0], [1], [0, 0, 1, 1], [], []>} : vector<8x4xf32>, vector<4x32xf32>, vector<8x32xf32> -> vector<8x32xf32>
    %43 = arith.addf %39, %42 : vector<8x32xf32>
    %c4_35 = arith.constant 4 : index
    %c0_36 = arith.constant 0 : index
    %c0_37 = arith.constant 0 : index
    %44 = vector.load %arg2[%c4_35, %c0_36, %c0_37] : memref<5x4x32xf32, #tpu.memory_space<vmem>>, vector<1x4x32xf32>
    %45 = vector.shape_cast %44 : vector<1x4x32xf32> to vector<4x32xf32>
    %cst_38 = arith.constant dense<0.000000e+00> : vector<8x32xf32>
    %46 = tpu.matmul %9, %45, %cst_38 {dimension_numbers = #tpu.dot_dimension_numbers<[1], [0], [0], [1], [0, 0, 1, 1], [], []>} : vector<8x4xf32>, vector<4x32xf32>, vector<8x32xf32> -> vector<8x32xf32>
    %47 = arith.addf %43, %46 : vector<8x32xf32>
    %48 = vector.broadcast %2 : vector<1x32xf32> to vector<8x32xf32>
    %49 = arith.addf %28, %48 : vector<8x32xf32>
    %cst_39 = arith.constant 0.000000e+00 : f32
    %50 = vector.broadcast %cst_39 : f32 to vector<8x32xf32>
    %51 = arith.maximumf %49, %50 : vector<8x32xf32>
    %52 = vector.broadcast %2 : vector<1x32xf32> to vector<8x32xf32>
    %53 = arith.addf %47, %52 : vector<8x32xf32>
    %cst_40 = arith.constant 0.000000e+00 : f32
    %54 = vector.broadcast %cst_40 : f32 to vector<8x32xf32>
    %55 = arith.maximumf %53, %54 : vector<8x32xf32>
    %56 = arith.maximumf %51, %55 : vector<8x32xf32>
    %c0_41 = arith.constant 0 : index
    %c0_42 = arith.constant 0 : index
    %c0_43 = arith.constant 0 : index
    %57 = vector.load %arg4[%c0_41, %c0_42, %c0_43] : memref<1x8x32xf32, #tpu.memory_space<vmem>>, vector<1x8x32xf32>
    %58 = vector.shape_cast %57 : vector<1x8x32xf32> to vector<8x32xf32>
    %59 = vector.shape_cast %56 : vector<8x32xf32> to vector<1x8x32xf32>
    tpu.vector_store %arg4[%c0_41, %c0_42, %c0_43], %59 {strides = array<i32>} : memref<1x8x32xf32, #tpu.memory_space<vmem>>, vector<1x8x32xf32>,
    return
  }
  func.func @transform_0(%arg0: i32) -> (i32, i32, i32) {
    %c0_i32 = arith.constant 0 : i32
    %c0_i32_0 = arith.constant 0 : i32
    %c0_i32_1 = arith.constant 0 : i32
    return %arg0, %c0_i32, %c0_i32_0 : i32, i32, i32
  }
  func.func @transform_1(%arg0: i32) -> (i32, i32, i32) {
    %c0_i32 = arith.constant 0 : i32
    %c0_i32_0 = arith.constant 0 : i32
    %c0_i32_1 = arith.constant 0 : i32
    %c0_i32_2 = arith.constant 0 : i32
    return %c0_i32, %c0_i32_0, %c0_i32_1 : i32, i32, i32
  }
  func.func @transform_2(%arg0: i32) -> (i32, i32) {
    %c0_i32 = arith.constant 0 : i32
    %c0_i32_0 = arith.constant 0 : i32
    %c0_i32_1 = arith.constant 0 : i32
    return %c0_i32, %c0_i32_0 : i32, i32
  }
  func.func @transform_3(%arg0: i32) -> (i32, i32, i32) {
    %c0_i32 = arith.constant 0 : i32
    %c0_i32_0 = arith.constant 0 : i32
    %c0_i32_1 = arith.constant 0 : i32
    return %arg0, %c0_i32, %c0_i32_0 : i32, i32, i32
  }
}

module attributes {stable_mosaic.version = 11 : i64} {
  func.func @_transformer_block_kernel(%arg0: i32, %arg1: memref<1x8x32xf32, #tpu.memory_space<vmem>>, %arg2: memref<32x96xf32, #tpu.memory_space<vmem>>, %arg3: memref<1x96xf32, #tpu.memory_space<vmem>>, %arg4: memref<32x32xf32, #tpu.memory_space<vmem>>, %arg5: memref<1x32xf32, #tpu.memory_space<vmem>>, %arg6: memref<1x32xf32, #tpu.memory_space<vmem>>, %arg7: memref<1x32xf32, #tpu.memory_space<vmem>>, %arg8: memref<32x64xf32, #tpu.memory_space<vmem>>, %arg9: memref<1x64xf32, #tpu.memory_space<vmem>>, %arg10: memref<64x32xf32, #tpu.memory_space<vmem>>, %arg11: memref<1x32xf32, #tpu.memory_space<vmem>>, %arg12: memref<1x32xf32, #tpu.memory_space<vmem>>, %arg13: memref<1x32xf32, #tpu.memory_space<vmem>>, %arg14: memref<1x8x32xf32, #tpu.memory_space<vmem>>) attributes {dimension_semantics = [#tpu.dimension_semantics<parallel>], iteration_bounds = array<i64: 2>, scalar_prefetch = 0 : i64, scratch_operands = 0 : i64, tpu.core_type = #tpu.core_type<tc>, window_params = [{transform_indices = @transform_0, window_bounds = array<i64: 1, 8, 32>}, {pipeline_mode = #tpu.pipeline_mode<synchronous>, transform_indices = @transform_1, window_bounds = array<i64: 32, 96>}, {pipeline_mode = #tpu.pipeline_mode<synchronous>, transform_indices = @transform_2, window_bounds = array<i64: 1, 96>}, {pipeline_mode = #tpu.pipeline_mode<synchronous>, transform_indices = @transform_3, window_bounds = array<i64: 32, 32>}, {pipeline_mode = #tpu.pipeline_mode<synchronous>, transform_indices = @transform_4, window_bounds = array<i64: 1, 32>}, {pipeline_mode = #tpu.pipeline_mode<synchronous>, transform_indices = @transform_5, window_bounds = array<i64: 1, 32>}, {pipeline_mode = #tpu.pipeline_mode<synchronous>, transform_indices = @transform_6, window_bounds = array<i64: 1, 32>}, {pipeline_mode = #tpu.pipeline_mode<synchronous>, transform_indices = @transform_7, window_bounds = array<i64: 32, 64>}, {pipeline_mode = #tpu.pipeline_mode<synchronous>, transform_indices = @transform_8, window_bounds = array<i64: 1, 64>}, {pipeline_mode = #tpu.pipeline_mode<synchronous>, transform_indices = @transform_9, window_bounds = array<i64: 64, 32>}, {pipeline_mode = #tpu.pipeline_mode<synchronous>, transform_indices = @transform_10, window_bounds = array<i64: 1, 32>}, {pipeline_mode = #tpu.pipeline_mode<synchronous>, transform_indices = @transform_11, window_bounds = array<i64: 1, 32>}, {pipeline_mode = #tpu.pipeline_mode<synchronous>, transform_indices = @transform_12, window_bounds = array<i64: 1, 32>}, {transform_indices = @transform_13, window_bounds = array<i64: 1, 8, 32>}]} {
    %c0 = arith.constant 0 : index
    %c0_0 = arith.constant 0 : index
    %c0_1 = arith.constant 0 : index
    %0 = vector.load %arg1[%c0, %c0_0, %c0_1] : memref<1x8x32xf32, #tpu.memory_space<vmem>>, vector<1x8x32xf32>
    %1 = vector.shape_cast %0 : vector<1x8x32xf32> to vector<8x32xf32>
    %c0_2 = arith.constant 0 : index
    %c0_3 = arith.constant 0 : index
    %2 = vector.load %arg2[%c0_2, %c0_3] : memref<32x96xf32, #tpu.memory_space<vmem>>, vector<32x96xf32>
    %cst = arith.constant dense<0.000000e+00> : vector<8x96xf32>
    %3 = tpu.matmul %1, %2, %cst {dimension_numbers = #tpu.dot_dimension_numbers<[1], [0], [0], [1], [0, 0, 1, 1], [], []>} : vector<8x32xf32>, vector<32x96xf32>, vector<8x96xf32> -> vector<8x96xf32>
    %c0_4 = arith.constant 0 : index
    %c0_5 = arith.constant 0 : index
    %4 = vector.load %arg3[%c0_4, %c0_5] : memref<1x96xf32, #tpu.memory_space<vmem>>, vector<1x96xf32>
    %5 = vector.broadcast %4 : vector<1x96xf32> to vector<8x96xf32>
    %6 = arith.addf %3, %5 : vector<8x96xf32>
    %7 = vector.extract_strided_slice %6 {offsets = [0, 0], sizes = [8, 32], strides = [1, 1]} : vector<8x96xf32> to vector<8x32xf32>
    %8 = vector.extract_strided_slice %6 {offsets = [0, 32], sizes = [8, 32], strides = [1, 1]} : vector<8x96xf32> to vector<8x32xf32>
    %9 = vector.extract_strided_slice %6 {offsets = [0, 64], sizes = [8, 32], strides = [1, 1]} : vector<8x96xf32> to vector<8x32xf32>
    %10 = vector.extract_strided_slice %7 {offsets = [0, 0], sizes = [8, 8], strides = [1, 1]} : vector<8x32xf32> to vector<8x8xf32>
    %11 = vector.extract_strided_slice %8 {offsets = [0, 0], sizes = [8, 8], strides = [1, 1]} : vector<8x32xf32> to vector<8x8xf32>
    %12 = vector.extract_strided_slice %9 {offsets = [0, 0], sizes = [8, 8], strides = [1, 1]} : vector<8x32xf32> to vector<8x8xf32>
    %cst_6 = arith.constant dense<0.000000e+00> : vector<8x8xf32>
    %13 = tpu.matmul %10, %11, %cst_6 {dimension_numbers = #tpu.dot_dimension_numbers<[1], [1], [0], [0], [0, 0, 1, 0], [], []>} : vector<8x8xf32>, vector<8x8xf32>, vector<8x8xf32> -> vector<8x8xf32>
    %cst_7 = arith.constant dense<0xFF800000> : vector<8xf32>
    %14 = vector.multi_reduction <maximumf>, %13, %cst_7 [1] : vector<8x8xf32> to vector<8xf32>
    %15 = vector.shape_cast %14 : vector<8xf32> to vector<8x1xf32>
    %16 = vector.broadcast %15 : vector<8x1xf32> to vector<8x8xf32>
    %17 = arith.subf %13, %16 : vector<8x8xf32>
    %18 = math.exp %17 : vector<8x8xf32>
    %cst_8 = arith.constant dense<0.000000e+00> : vector<8xf32>
    %19 = vector.multi_reduction <add>, %18, %cst_8 [1] : vector<8x8xf32> to vector<8xf32>
    %20 = vector.shape_cast %19 : vector<8xf32> to vector<8x1xf32>
    %21 = tpu.reciprocal %20 {approx = true} : vector<8x1xf32> -> vector<8x1xf32>
    %22 = vector.broadcast %21 : vector<8x1xf32> to vector<8x8xf32>
    %23 = arith.mulf %18, %22 : vector<8x8xf32>
    %cst_9 = arith.constant dense<0.000000e+00> : vector<8x8xf32>
    %24 = tpu.matmul %23, %12, %cst_9 {dimension_numbers = #tpu.dot_dimension_numbers<[1], [0], [0], [1], [0, 0, 1, 1], [], []>} : vector<8x8xf32>, vector<8x8xf32>, vector<8x8xf32> -> vector<8x8xf32>
    %25 = vector.extract_strided_slice %7 {offsets = [0, 8], sizes = [8, 8], strides = [1, 1]} : vector<8x32xf32> to vector<8x8xf32>
    %26 = vector.extract_strided_slice %8 {offsets = [0, 8], sizes = [8, 8], strides = [1, 1]} : vector<8x32xf32> to vector<8x8xf32>
    %27 = vector.extract_strided_slice %9 {offsets = [0, 8], sizes = [8, 8], strides = [1, 1]} : vector<8x32xf32> to vector<8x8xf32>
    %cst_10 = arith.constant dense<0.000000e+00> : vector<8x8xf32>
    %28 = tpu.matmul %25, %26, %cst_10 {dimension_numbers = #tpu.dot_dimension_numbers<[1], [1], [0], [0], [0, 0, 1, 0], [], []>} : vector<8x8xf32>, vector<8x8xf32>, vector<8x8xf32> -> vector<8x8xf32>
    %cst_11 = arith.constant dense<0xFF800000> : vector<8xf32>
    %29 = vector.multi_reduction <maximumf>, %28, %cst_11 [1] : vector<8x8xf32> to vector<8xf32>
    %30 = vector.shape_cast %29 : vector<8xf32> to vector<8x1xf32>
    %31 = vector.broadcast %30 : vector<8x1xf32> to vector<8x8xf32>
    %32 = arith.subf %28, %31 : vector<8x8xf32>
    %33 = math.exp %32 : vector<8x8xf32>
    %cst_12 = arith.constant dense<0.000000e+00> : vector<8xf32>
    %34 = vector.multi_reduction <add>, %33, %cst_12 [1] : vector<8x8xf32> to vector<8xf32>
    %35 = vector.shape_cast %34 : vector<8xf32> to vector<8x1xf32>
    %36 = tpu.reciprocal %35 {approx = true} : vector<8x1xf32> -> vector<8x1xf32>
    %37 = vector.broadcast %36 : vector<8x1xf32> to vector<8x8xf32>
    %38 = arith.mulf %33, %37 : vector<8x8xf32>
    %cst_13 = arith.constant dense<0.000000e+00> : vector<8x8xf32>
    %39 = tpu.matmul %38, %27, %cst_13 {dimension_numbers = #tpu.dot_dimension_numbers<[1], [0], [0], [1], [0, 0, 1, 1], [], []>} : vector<8x8xf32>, vector<8x8xf32>, vector<8x8xf32> -> vector<8x8xf32>
    %40 = vector.extract_strided_slice %7 {offsets = [0, 16], sizes = [8, 8], strides = [1, 1]} : vector<8x32xf32> to vector<8x8xf32>
    %41 = vector.extract_strided_slice %8 {offsets = [0, 16], sizes = [8, 8], strides = [1, 1]} : vector<8x32xf32> to vector<8x8xf32>
    %42 = vector.extract_strided_slice %9 {offsets = [0, 16], sizes = [8, 8], strides = [1, 1]} : vector<8x32xf32> to vector<8x8xf32>
    %cst_14 = arith.constant dense<0.000000e+00> : vector<8x8xf32>
    %43 = tpu.matmul %40, %41, %cst_14 {dimension_numbers = #tpu.dot_dimension_numbers<[1], [1], [0], [0], [0, 0, 1, 0], [], []>} : vector<8x8xf32>, vector<8x8xf32>, vector<8x8xf32> -> vector<8x8xf32>
    %cst_15 = arith.constant dense<0xFF800000> : vector<8xf32>
    %44 = vector.multi_reduction <maximumf>, %43, %cst_15 [1] : vector<8x8xf32> to vector<8xf32>
    %45 = vector.shape_cast %44 : vector<8xf32> to vector<8x1xf32>
    %46 = vector.broadcast %45 : vector<8x1xf32> to vector<8x8xf32>
    %47 = arith.subf %43, %46 : vector<8x8xf32>
    %48 = math.exp %47 : vector<8x8xf32>
    %cst_16 = arith.constant dense<0.000000e+00> : vector<8xf32>
    %49 = vector.multi_reduction <add>, %48, %cst_16 [1] : vector<8x8xf32> to vector<8xf32>
    %50 = vector.shape_cast %49 : vector<8xf32> to vector<8x1xf32>
    %51 = tpu.reciprocal %50 {approx = true} : vector<8x1xf32> -> vector<8x1xf32>
    %52 = vector.broadcast %51 : vector<8x1xf32> to vector<8x8xf32>
    %53 = arith.mulf %48, %52 : vector<8x8xf32>
    %cst_17 = arith.constant dense<0.000000e+00> : vector<8x8xf32>
    %54 = tpu.matmul %53, %42, %cst_17 {dimension_numbers = #tpu.dot_dimension_numbers<[1], [0], [0], [1], [0, 0, 1, 1], [], []>} : vector<8x8xf32>, vector<8x8xf32>, vector<8x8xf32> -> vector<8x8xf32>
    %55 = vector.extract_strided_slice %7 {offsets = [0, 24], sizes = [8, 8], strides = [1, 1]} : vector<8x32xf32> to vector<8x8xf32>
    %56 = vector.extract_strided_slice %8 {offsets = [0, 24], sizes = [8, 8], strides = [1, 1]} : vector<8x32xf32> to vector<8x8xf32>
    %57 = vector.extract_strided_slice %9 {offsets = [0, 24], sizes = [8, 8], strides = [1, 1]} : vector<8x32xf32> to vector<8x8xf32>
    %cst_18 = arith.constant dense<0.000000e+00> : vector<8x8xf32>
    %58 = tpu.matmul %55, %56, %cst_18 {dimension_numbers = #tpu.dot_dimension_numbers<[1], [1], [0], [0], [0, 0, 1, 0], [], []>} : vector<8x8xf32>, vector<8x8xf32>, vector<8x8xf32> -> vector<8x8xf32>
    %cst_19 = arith.constant dense<0xFF800000> : vector<8xf32>
    %59 = vector.multi_reduction <maximumf>, %58, %cst_19 [1] : vector<8x8xf32> to vector<8xf32>
    %60 = vector.shape_cast %59 : vector<8xf32> to vector<8x1xf32>
    %61 = vector.broadcast %60 : vector<8x1xf32> to vector<8x8xf32>
    %62 = arith.subf %58, %61 : vector<8x8xf32>
    %63 = math.exp %62 : vector<8x8xf32>
    %cst_20 = arith.constant dense<0.000000e+00> : vector<8xf32>
    %64 = vector.multi_reduction <add>, %63, %cst_20 [1] : vector<8x8xf32> to vector<8xf32>
    %65 = vector.shape_cast %64 : vector<8xf32> to vector<8x1xf32>
    %66 = tpu.reciprocal %65 {approx = true} : vector<8x1xf32> -> vector<8x1xf32>
    %67 = vector.broadcast %66 : vector<8x1xf32> to vector<8x8xf32>
    %68 = arith.mulf %63, %67 : vector<8x8xf32>
    %cst_21 = arith.constant dense<0.000000e+00> : vector<8x8xf32>
    %69 = tpu.matmul %68, %57, %cst_21 {dimension_numbers = #tpu.dot_dimension_numbers<[1], [0], [0], [1], [0, 0, 1, 1], [], []>} : vector<8x8xf32>, vector<8x8xf32>, vector<8x8xf32> -> vector<8x8xf32>
    %70 = tpu.concatenate %24, %39, %54, %69 in 1 : vector<8x8xf32>, vector<8x8xf32>, vector<8x8xf32>, vector<8x8xf32> -> vector<8x32xf32>
    %c0_22 = arith.constant 0 : index
    %c0_23 = arith.constant 0 : index
    %71 = vector.load %arg4[%c0_22, %c0_23] : memref<32x32xf32, #tpu.memory_space<vmem>>, vector<32x32xf32>
    %cst_24 = arith.constant dense<0.000000e+00> : vector<8x32xf32>
    %72 = tpu.matmul %70, %71, %cst_24 {dimension_numbers = #tpu.dot_dimension_numbers<[1], [0], [0], [1], [0, 0, 1, 1], [], []>} : vector<8x32xf32>, vector<32x32xf32>, vector<8x32xf32> -> vector<8x32xf32>
    %c0_25 = arith.constant 0 : index
    %c0_26 = arith.constant 0 : index
    %73 = vector.load %arg5[%c0_25, %c0_26] : memref<1x32xf32, #tpu.memory_space<vmem>>, vector<1x32xf32>
    %74 = vector.broadcast %73 : vector<1x32xf32> to vector<8x32xf32>
    %75 = arith.addf %72, %74 : vector<8x32xf32>
    %76 = arith.addf %1, %75 : vector<8x32xf32>
    %cst_27 = arith.constant dense<0.000000e+00> : vector<8xf32>
    %77 = vector.multi_reduction <add>, %76, %cst_27 [1] : vector<8x32xf32> to vector<8xf32>
    %78 = vector.shape_cast %77 : vector<8xf32> to vector<8x1xf32>
    %cst_28 = arith.constant 3.200000e+01 : f32
    %79 = vector.broadcast %cst_28 : f32 to vector<8x1xf32>
    %80 = arith.divf %78, %79 : vector<8x1xf32>
    %81 = vector.broadcast %80 : vector<8x1xf32> to vector<8x32xf32>
    %82 = arith.subf %76, %81 : vector<8x32xf32>
    %83 = vector.broadcast %80 : vector<8x1xf32> to vector<8x32xf32>
    %84 = arith.subf %76, %83 : vector<8x32xf32>
    %85 = arith.mulf %82, %84 : vector<8x32xf32>
    %cst_29 = arith.constant dense<0.000000e+00> : vector<8xf32>
    %86 = vector.multi_reduction <add>, %85, %cst_29 [1] : vector<8x32xf32> to vector<8xf32>
    %87 = vector.shape_cast %86 : vector<8xf32> to vector<8x1xf32>
    %cst_30 = arith.constant 3.200000e+01 : f32
    %88 = vector.broadcast %cst_30 : f32 to vector<8x1xf32>
    %89 = arith.divf %87, %88 : vector<8x1xf32>
    %90 = vector.broadcast %80 : vector<8x1xf32> to vector<8x32xf32>
    %91 = arith.subf %76, %90 : vector<8x32xf32>
    %cst_31 = arith.constant 9.99999974E-6 : f32
    %92 = vector.broadcast %cst_31 : f32 to vector<8x1xf32>
    %93 = arith.addf %89, %92 : vector<8x1xf32>
    %94 = math.rsqrt %93 : vector<8x1xf32>
    %95 = vector.broadcast %94 : vector<8x1xf32> to vector<8x32xf32>
    %96 = arith.mulf %91, %95 : vector<8x32xf32>
    %c0_32 = arith.constant 0 : index
    %c0_33 = arith.constant 0 : index
    %97 = vector.load %arg6[%c0_32, %c0_33] : memref<1x32xf32, #tpu.memory_space<vmem>>, vector<1x32xf32>
    %98 = vector.broadcast %97 : vector<1x32xf32> to vector<8x32xf32>
    %99 = arith.mulf %96, %98 : vector<8x32xf32>
    %c0_34 = arith.constant 0 : index
    %c0_35 = arith.constant 0 : index
    %100 = vector.load %arg7[%c0_34, %c0_35] : memref<1x32xf32, #tpu.memory_space<vmem>>, vector<1x32xf32>
    %101 = vector.broadcast %100 : vector<1x32xf32> to vector<8x32xf32>
    %102 = arith.addf %99, %101 : vector<8x32xf32>
    %c0_36 = arith.constant 0 : index
    %c0_37 = arith.constant 0 : index
    %103 = vector.load %arg8[%c0_36, %c0_37] : memref<32x64xf32, #tpu.memory_space<vmem>>, vector<32x64xf32>
    %cst_38 = arith.constant dense<0.000000e+00> : vector<8x64xf32>
    %104 = tpu.matmul %102, %103, %cst_38 {dimension_numbers = #tpu.dot_dimension_numbers<[1], [0], [0], [1], [0, 0, 1, 1], [], []>} : vector<8x32xf32>, vector<32x64xf32>, vector<8x64xf32> -> vector<8x64xf32>
    %c0_39 = arith.constant 0 : index
    %c0_40 = arith.constant 0 : index
    %105 = vector.load %arg9[%c0_39, %c0_40] : memref<1x64xf32, #tpu.memory_space<vmem>>, vector<1x64xf32>
    %106 = vector.broadcast %105 : vector<1x64xf32> to vector<8x64xf32>
    %107 = arith.addf %104, %106 : vector<8x64xf32>
    %cst_41 = arith.constant 0.000000e+00 : f32
    %108 = vector.broadcast %cst_41 : f32 to vector<8x64xf32>
    %109 = arith.maximumf %107, %108 : vector<8x64xf32>
    %c0_42 = arith.constant 0 : index
    %c0_43 = arith.constant 0 : index
    %110 = vector.load %arg10[%c0_42, %c0_43] : memref<64x32xf32, #tpu.memory_space<vmem>>, vector<64x32xf32>
    %cst_44 = arith.constant dense<0.000000e+00> : vector<8x32xf32>
    %111 = tpu.matmul %109, %110, %cst_44 {dimension_numbers = #tpu.dot_dimension_numbers<[1], [0], [0], [1], [0, 0, 1, 1], [], []>} : vector<8x64xf32>, vector<64x32xf32>, vector<8x32xf32> -> vector<8x32xf32>
    %c0_45 = arith.constant 0 : index
    %c0_46 = arith.constant 0 : index
    %112 = vector.load %arg11[%c0_45, %c0_46] : memref<1x32xf32, #tpu.memory_space<vmem>>, vector<1x32xf32>
    %113 = vector.broadcast %112 : vector<1x32xf32> to vector<8x32xf32>
    %114 = arith.addf %111, %113 : vector<8x32xf32>
    %115 = arith.addf %102, %114 : vector<8x32xf32>
    %cst_47 = arith.constant dense<0.000000e+00> : vector<8xf32>
    %116 = vector.multi_reduction <add>, %115, %cst_47 [1] : vector<8x32xf32> to vector<8xf32>
    %117 = vector.shape_cast %116 : vector<8xf32> to vector<8x1xf32>
    %cst_48 = arith.constant 3.200000e+01 : f32
    %118 = vector.broadcast %cst_48 : f32 to vector<8x1xf32>
    %119 = arith.divf %117, %118 : vector<8x1xf32>
    %120 = vector.broadcast %119 : vector<8x1xf32> to vector<8x32xf32>
    %121 = arith.subf %115, %120 : vector<8x32xf32>
    %122 = vector.broadcast %119 : vector<8x1xf32> to vector<8x32xf32>
    %123 = arith.subf %115, %122 : vector<8x32xf32>
    %124 = arith.mulf %121, %123 : vector<8x32xf32>
    %cst_49 = arith.constant dense<0.000000e+00> : vector<8xf32>
    %125 = vector.multi_reduction <add>, %124, %cst_49 [1] : vector<8x32xf32> to vector<8xf32>
    %126 = vector.shape_cast %125 : vector<8xf32> to vector<8x1xf32>
    %cst_50 = arith.constant 3.200000e+01 : f32
    %127 = vector.broadcast %cst_50 : f32 to vector<8x1xf32>
    %128 = arith.divf %126, %127 : vector<8x1xf32>
    %129 = vector.broadcast %119 : vector<8x1xf32> to vector<8x32xf32>
    %130 = arith.subf %115, %129 : vector<8x32xf32>
    %cst_51 = arith.constant 9.99999974E-6 : f32
    %131 = vector.broadcast %cst_51 : f32 to vector<8x1xf32>
    %132 = arith.addf %128, %131 : vector<8x1xf32>
    %133 = math.rsqrt %132 : vector<8x1xf32>
    %134 = vector.broadcast %133 : vector<8x1xf32> to vector<8x32xf32>
    %135 = arith.mulf %130, %134 : vector<8x32xf32>
    %c0_52 = arith.constant 0 : index
    %c0_53 = arith.constant 0 : index
    %136 = vector.load %arg12[%c0_52, %c0_53] : memref<1x32xf32, #tpu.memory_space<vmem>>, vector<1x32xf32>
    %137 = vector.broadcast %136 : vector<1x32xf32> to vector<8x32xf32>
    %138 = arith.mulf %135, %137 : vector<8x32xf32>
    %c0_54 = arith.constant 0 : index
    %c0_55 = arith.constant 0 : index
    %139 = vector.load %arg13[%c0_54, %c0_55] : memref<1x32xf32, #tpu.memory_space<vmem>>, vector<1x32xf32>
    %140 = vector.broadcast %139 : vector<1x32xf32> to vector<8x32xf32>
    %141 = arith.addf %138, %140 : vector<8x32xf32>
    %c0_56 = arith.constant 0 : index
    %c0_57 = arith.constant 0 : index
    %c0_58 = arith.constant 0 : index
    %142 = vector.load %arg14[%c0_56, %c0_57, %c0_58] : memref<1x8x32xf32, #tpu.memory_space<vmem>>, vector<1x8x32xf32>
    %143 = vector.shape_cast %142 : vector<1x8x32xf32> to vector<8x32xf32>
    %144 = vector.shape_cast %141 : vector<8x32xf32> to vector<1x8x32xf32>
    tpu.vector_store %arg14[%c0_56, %c0_57, %c0_58], %144 {strides = array<i32>} : memref<1x8x32xf32, #tpu.memory_space<vmem>>, vector<1x8x32xf32>,
    return
  }
  func.func @transform_0(%arg0: i32) -> (i32, i32, i32) {
    %c0_i32 = arith.constant 0 : i32
    %c0_i32_0 = arith.constant 0 : i32
    %c0_i32_1 = arith.constant 0 : i32
    return %arg0, %c0_i32, %c0_i32_0 : i32, i32, i32
  }
  func.func @transform_1(%arg0: i32) -> (i32, i32) {
    %c0_i32 = arith.constant 0 : i32
    %c0_i32_0 = arith.constant 0 : i32
    %c0_i32_1 = arith.constant 0 : i32
    return %c0_i32, %c0_i32_0 : i32, i32
  }
  func.func @transform_2(%arg0: i32) -> (i32, i32) {
    %c0_i32 = arith.constant 0 : i32
    %c0_i32_0 = arith.constant 0 : i32
    %c0_i32_1 = arith.constant 0 : i32
    return %c0_i32, %c0_i32_0 : i32, i32
  }
  func.func @transform_3(%arg0: i32) -> (i32, i32) {
    %c0_i32 = arith.constant 0 : i32
    %c0_i32_0 = arith.constant 0 : i32
    %c0_i32_1 = arith.constant 0 : i32
    return %c0_i32, %c0_i32_0 : i32, i32
  }
  func.func @transform_4(%arg0: i32) -> (i32, i32) {
    %c0_i32 = arith.constant 0 : i32
    %c0_i32_0 = arith.constant 0 : i32
    %c0_i32_1 = arith.constant 0 : i32
    return %c0_i32, %c0_i32_0 : i32, i32
  }
  func.func @transform_5(%arg0: i32) -> (i32, i32) {
    %c0_i32 = arith.constant 0 : i32
    %c0_i32_0 = arith.constant 0 : i32
    %c0_i32_1 = arith.constant 0 : i32
    return %c0_i32, %c0_i32_0 : i32, i32
  }
  func.func @transform_6(%arg0: i32) -> (i32, i32) {
    %c0_i32 = arith.constant 0 : i32
    %c0_i32_0 = arith.constant 0 : i32
    %c0_i32_1 = arith.constant 0 : i32
    return %c0_i32, %c0_i32_0 : i32, i32
  }
  func.func @transform_7(%arg0: i32) -> (i32, i32) {
    %c0_i32 = arith.constant 0 : i32
    %c0_i32_0 = arith.constant 0 : i32
    %c0_i32_1 = arith.constant 0 : i32
    return %c0_i32, %c0_i32_0 : i32, i32
  }
  func.func @transform_8(%arg0: i32) -> (i32, i32) {
    %c0_i32 = arith.constant 0 : i32
    %c0_i32_0 = arith.constant 0 : i32
    %c0_i32_1 = arith.constant 0 : i32
    return %c0_i32, %c0_i32_0 : i32, i32
  }
  func.func @transform_9(%arg0: i32) -> (i32, i32) {
    %c0_i32 = arith.constant 0 : i32
    %c0_i32_0 = arith.constant 0 : i32
    %c0_i32_1 = arith.constant 0 : i32
    return %c0_i32, %c0_i32_0 : i32, i32
  }
  func.func @transform_10(%arg0: i32) -> (i32, i32) {
    %c0_i32 = arith.constant 0 : i32
    %c0_i32_0 = arith.constant 0 : i32
    %c0_i32_1 = arith.constant 0 : i32
    return %c0_i32, %c0_i32_0 : i32, i32
  }
  func.func @transform_11(%arg0: i32) -> (i32, i32) {
    %c0_i32 = arith.constant 0 : i32
    %c0_i32_0 = arith.constant 0 : i32
    %c0_i32_1 = arith.constant 0 : i32
    return %c0_i32, %c0_i32_0 : i32, i32
  }
  func.func @transform_12(%arg0: i32) -> (i32, i32) {
    %c0_i32 = arith.constant 0 : i32
    %c0_i32_0 = arith.constant 0 : i32
    %c0_i32_1 = arith.constant 0 : i32
    return %c0_i32, %c0_i32_0 : i32, i32
  }
  func.func @transform_13(%arg0: i32) -> (i32, i32, i32) {
    %c0_i32 = arith.constant 0 : i32
    %c0_i32_0 = arith.constant 0 : i32
    %c0_i32_1 = arith.constant 0 : i32
    return %arg0, %c0_i32, %c0_i32_0 : i32, i32, i32
  }
}

module attributes {stable_mosaic.version = 11 : i64} {
  func.func @_pool_classifier_kernel(%arg0: memref<2x8x32xf32, #tpu.memory_space<vmem>>, %arg1: memref<32x64xf32, #tpu.memory_space<vmem>>, %arg2: memref<1x64xf32, #tpu.memory_space<vmem>>, %arg3: memref<64x1xf32, #tpu.memory_space<vmem>>, %arg4: memref<1x1xf32, #tpu.memory_space<vmem>>, %arg5: memref<2x1xf32, #tpu.memory_space<vmem>>) attributes {dimension_semantics = [], scalar_prefetch = 0 : i64, scratch_operands = 0 : i64, tpu.core_type = #tpu.core_type<tc>} {
    %c0 = arith.constant 0 : index
    %c0_0 = arith.constant 0 : index
    %c0_1 = arith.constant 0 : index
    %0 = vector.load %arg0[%c0, %c0_0, %c0_1] : memref<2x8x32xf32, #tpu.memory_space<vmem>>, vector<2x8x32xf32>
    %cst = arith.constant dense<0.000000e+00> : vector<2x32xf32>
    %1 = vector.multi_reduction <add>, %0, %cst [1] : vector<2x8x32xf32> to vector<2x32xf32>
    %cst_2 = arith.constant 8.000000e+00 : f32
    %2 = vector.broadcast %cst_2 : f32 to vector<2x32xf32>
    %3 = arith.divf %1, %2 : vector<2x32xf32>
    %c0_3 = arith.constant 0 : index
    %c0_4 = arith.constant 0 : index
    %4 = vector.load %arg1[%c0_3, %c0_4] : memref<32x64xf32, #tpu.memory_space<vmem>>, vector<32x64xf32>
    %cst_5 = arith.constant dense<0.000000e+00> : vector<2x64xf32>
    %5 = tpu.matmul %3, %4, %cst_5 {dimension_numbers = #tpu.dot_dimension_numbers<[1], [0], [0], [1], [0, 0, 1, 1], [], []>} : vector<2x32xf32>, vector<32x64xf32>, vector<2x64xf32> -> vector<2x64xf32>
    %c0_6 = arith.constant 0 : index
    %c0_7 = arith.constant 0 : index
    %6 = vector.load %arg2[%c0_6, %c0_7] : memref<1x64xf32, #tpu.memory_space<vmem>>, vector<1x64xf32>
    %7 = vector.broadcast %6 : vector<1x64xf32> to vector<2x64xf32>
    %8 = arith.addf %5, %7 : vector<2x64xf32>
    %cst_8 = arith.constant 0.000000e+00 : f32
    %9 = vector.broadcast %cst_8 : f32 to vector<2x64xf32>
    %10 = arith.maximumf %8, %9 : vector<2x64xf32>
    %c0_9 = arith.constant 0 : index
    %c0_10 = arith.constant 0 : index
    %11 = vector.load %arg3[%c0_9, %c0_10] : memref<64x1xf32, #tpu.memory_space<vmem>>, vector<64x1xf32>
    %cst_11 = arith.constant dense<0.000000e+00> : vector<2x1xf32>
    %12 = tpu.matmul %10, %11, %cst_11 {dimension_numbers = #tpu.dot_dimension_numbers<[1], [0], [0], [1], [0, 0, 1, 1], [], []>} : vector<2x64xf32>, vector<64x1xf32>, vector<2x1xf32> -> vector<2x1xf32>
    %c0_12 = arith.constant 0 : index
    %c0_13 = arith.constant 0 : index
    %13 = vector.load %arg4[%c0_12, %c0_13] : memref<1x1xf32, #tpu.memory_space<vmem>>, vector<1x1xf32>
    %14 = vector.broadcast %13 : vector<1x1xf32> to vector<2x1xf32>
    %15 = arith.addf %12, %14 : vector<2x1xf32>
    %cst_14 = arith.constant 0.000000e+00 : f32
    %16 = vector.broadcast %cst_14 : f32 to vector<2x1xf32>
    %17 = arith.subf %16, %15 : vector<2x1xf32>
    %18 = math.exp %17 : vector<2x1xf32>
    %cst_15 = arith.constant 1.000000e+00 : f32
    %19 = vector.broadcast %cst_15 : f32 to vector<2x1xf32>
    %20 = arith.addf %19, %18 : vector<2x1xf32>
    %cst_16 = arith.constant 1.000000e+00 : f32
    %21 = vector.broadcast %cst_16 : f32 to vector<2x1xf32>
    %22 = arith.divf %21, %20 : vector<2x1xf32>
    %c0_17 = arith.constant 0 : index
    %c0_18 = arith.constant 0 : index
    %23 = vector.load %arg5[%c0_17, %c0_18] : memref<2x1xf32, #tpu.memory_space<vmem>>, vector<2x1xf32>
    tpu.vector_store %arg5[%c0_17, %c0_18], %22 {strides = array<i32>} : memref<2x1xf32, #tpu.memory_space<vmem>>, vector<2x1xf32>,
    return
  }
}

</mosaic_0001>

<llo_original>
// kernel: transformer_model_forward.7
$region0: #{transformer_model_forward.7}
  #allocation0 [shape = 'u32[]', space=smem, size = 0x4, offset = 0x4, fixed_abs, tag = 'smem constant byte address 0x4 - core index']
  #allocation1 [shape = 'u32[144,128]{1,0:T(1,128)}', space=vmem, size = 0x12000, scoped, tag = 'internal scratch']
  #allocation2 [shape = 'f32[1,1]{1,0:T(1,128)S(1)}', space=vmem, size = 0x200, scoped, tag = 'scoped memory for transformer_model_forward.7']
  %s0 = inlined_call_operand.vmem [shape: f32[2,8,32], index: 0, kind: input, shape index: {}]
  %s1 = inlined_call_operand.vmem [shape: f32[32,64], index: 1, kind: input, shape index: {}]
  %s2 = inlined_call_operand.vmem [shape: f32[1,64], index: 2, kind: input, shape index: {}]
  %s3 = inlined_call_operand.vmem [shape: f32[64,1], index: 3, kind: input, shape index: {}]
  %s4 = inlined_call_operand.<no memory space> [shape: f32[1,1], index: 4, kind: input, shape index: {}]
  %s5 = inlined_call_operand.vmem [shape: f32[2,1], index: 5, kind: output, shape index: {}]
  %s6 = sld [smem:[#allocation0]]
  $region30: #{transformer_model_forward.7} parent=0
    _
  %s8 = ssub.s32 1, %s6
  %s9 = scalar_select 0, %s8, %s6
  %v10 = vstv %s4
  %11 = vst [vmem:[#allocation2] sm:$0x1] %v10
  // Predicated region
  $region2: #{transformer_model_forward.7} parent=0 // pred_check
    _
  $region3: #{transformer_model_forward.7} parent=0 // pred_check_branch
    %13 = sbr.rel (0) target = $region5
  $region4: #{transformer_model_forward.7} parent=0 // pred_region
    _
  $region5: #{transformer_model_forward.7} parent=0 // pred_fallthru
    _
  // Predicated region
  $region6: #{transformer_model_forward.7} parent=0 // pred_check
    _
  $region7: #{transformer_model_forward.7} parent=0 // pred_check_branch
    %15 = sbr.rel (0) target = $region9
  $region8: #{transformer_model_forward.7} parent=0 // pred_region
    _
  $region9: #{transformer_model_forward.7} parent=0 // pred_fallthru
    _
  // Predicated region
  $region10: #{transformer_model_forward.7} parent=0 // pred_check
    _
  $region11: #{transformer_model_forward.7} parent=0 // pred_check_branch
    %17 = sbr.rel (0) target = $region13
  $region12: #{transformer_model_forward.7} parent=0 // pred_region
    _
  $region13: #{transformer_model_forward.7} parent=0 // pred_fallthru
    _
  // Predicated region
  $region14: #{transformer_model_forward.7} parent=0 // pred_check
    _
  $region15: #{transformer_model_forward.7} parent=0 // pred_check_branch
    %19 = sbr.rel (0) target = $region17
  $region16: #{transformer_model_forward.7} parent=0 // pred_region
    _
  $region17: #{transformer_model_forward.7} parent=0 // pred_fallthru
    _
  // Predicated region
  $region18: #{transformer_model_forward.7} parent=0 // pred_check
    _
  $region19: #{transformer_model_forward.7} parent=0 // pred_check_branch
    %21 = sbr.rel (0) target = $region21
  $region20: #{transformer_model_forward.7} parent=0 // pred_region
    _
  $region21: #{transformer_model_forward.7} parent=0 // pred_fallthru
    _
  %v22 = vld [vmem:[%s0] sm:$0xff]
  %v23 = vld [vmem:[%s0 + $0x8] sm:$0xff]
  %vm24 = vcmask 261120
  %v25 = vsel %vm24, %v22, 0.0
  %v26 = vrot.slane %v25, 4
  %v27 = vadd.f32 %v25, %v26
  %v28 = vrot.slane %v27, 2
  %v29 = vadd.f32 %v27, %v28
  %v30 = vrot.slane %v29, 1
  %v31 = vadd.f32 %v29, %v30
  %v32 = vsel %vm24, %v23, 0.0
  %v33 = vrot.slane %v32, 4
  %v34 = vadd.f32 %v32, %v33
  %v35 = vrot.slane %v34, 2
  %v36 = vadd.f32 %v34, %v35
  %v37 = vrot.slane %v36, 1
  %v38 = vadd.f32 %v36, %v37
  %v39 = vrcp.pop 8.0
  %v40 = vmul.f32 %v31, %v39
  %v41 = vmul.f32 %v38, %v39
  %v42 = vld [vmem:[%s1] sm:$0xff]
  %v43 = vld [vmem:[%s1 + $0x8] sm:$0xff]
  %v44 = vld [vmem:[%s1 + $0x10] sm:$0xff]
  %v45 = vld [vmem:[%s1 + $0x18] sm:$0xff]
  %v46 = vld [vmem:[%s2] sm:$0x1]
  %v48 = vlaneseq
  %v49 = vshrl.u32 %v48, 7
  %v50 = vsub.s32 0, %v49
  %v51 = vrot.slane %v46, %v50
  %vm55 = vcmask 1041409
  %v56 = vsel %vm55, %v41, %v40
  %v57 = vsel %vm24, %v56, 0
  %59 = vmatprep.subr.mxu0 0.0
  %60 = vmatpush1.msra.mxu0 %v42
  %61 = vmatprep.subr.mxu0 0.0
  %62 = vmatpush1.msra.mxu0 %v43
  %63 = vmatprep.subr.mxu0 0.0
  %64 = vmatpush1.msra.mxu0 %v44
  %65 = vmatprep.subr.mxu0 0.0
  %66 = vmatpush1.msra.mxu0 %v45
  %67 = vmatprep.subr.mxu0 0.0
  %68 = vmatpush1.msra.mxu0 0.0
  %69 = vmatprep.subr.mxu0 0.0
  %70 = vmatpush1.msra.mxu0 0.0
  %71 = vmatprep.subr.mxu0 0.0
  %72 = vmatpush1.msra.mxu0 0.0
  %73 = vmatprep.subr.mxu0 0.0
  %74 = vmatpush1.msra.mxu0 0.0
  %75 = vmatprep.subr.mxu0 0.0
  %76 = vmatpush1.msra.mxu0 0.0
  %77 = vmatprep.subr.mxu0 0.0
  %78 = vmatpush1.msra.mxu0 0.0
  %79 = vmatprep.subr.mxu0 0.0
  %80 = vmatpush1.msra.mxu0 0.0
  %81 = vmatprep.subr.mxu0 0.0
  %82 = vmatpush1.msra.mxu0 0.0
  %83 = vmatprep.subr.mxu0 0.0
  %84 = vmatpush1.msra.mxu0 0.0
  %85 = vmatprep.subr.mxu0 0.0
  %86 = vmatpush1.msra.mxu0 0.0
  %87 = vmatprep.subr.mxu0 0.0
  %88 = vmatpush1.msra.mxu0 0.0
  %89 = vmatprep.subr.mxu0 0.0
  %90 = vmatpush1.msra.mxu0 0.0
  %91 = vmatprep.subr.mxu0 0.0
  %92 = vmatpush1.msra.mxu0 0.0
  %93 = vmatprep.subr.mxu0 0.0
  %94 = vmatpush1.msra.mxu0 0.0
  %95 = vmatprep.subr.mxu0 0.0
  %96 = vmatpush1.msra.mxu0 0.0
  %97 = vmatprep.subr.mxu0 0.0
  %98 = vmatpush1.msra.mxu0 0.0
  %99 = vmatprep.subr.mxu0 0.0
  %100 = vmatpush1.msra.mxu0 0.0
  %101 = vmatprep.subr.mxu0 0.0
  %102 = vmatpush1.msra.mxu0 0.0
  %103 = vmatprep.subr.mxu0 0.0
  %104 = vmatpush1.msra.mxu0 0.0
  %105 = vmatprep.subr.mxu0 0.0
  %106 = vmatpush1.msra.mxu0 0.0
  %107 = vmatprep.subr.mxu0 0.0
  %108 = vmatpush1.msra.mxu0 0.0
  %109 = vmatprep.subr.mxu0 0.0
  %110 = vmatpush1.msra.mxu0 0.0
  %111 = vmatprep.subr.mxu0 0.0
  %112 = vmatpush1.msra.mxu0 0.0
  %113 = vmatprep.subr.mxu0 0.0
  %114 = vmatpush1.msra.mxu0 0.0
  %115 = vmatprep.subr.mxu0 0.0
  %116 = vmatpush1.msra.mxu0 0.0
  %117 = vmatprep.subr.mxu0 0.0
  %118 = vmatpush1.msra.mxu0 0.0
  %119 = vmatprep.subr.mxu0 0.0
  %120 = vmatpush1.msra.mxu0 0.0
  %121 = vmatprep.subr.mxu0 0.0
  %122 = vmatpush1.msra.mxu0 0.0
  %123 = vmatprep.mubr.f32.mxu0 0.0
  %124 = vmatmul.mubr.f32.gmra.mrb[0].mxu0 %v57
  %v125 = vpop.f32.mrb[0].mxu0
  %v126 = vadd.f32 %v51, %v125
  %v127 = vpop.f32.mrb[0].mxu0
  %128 = vdwg.mxu0
  %v129 = vmax.f32 %v126, 0.0
  %v130 = vld [vmem:[%s3] sm:$0xff]
  %v131 = vld [vmem:[%s3 + $0x8] sm:$0xff]
  %v132 = vld [vmem:[%s3 + $0x10] sm:$0xff]
  %v133 = vld [vmem:[%s3 + $0x18] sm:$0xff]
  %v134 = vld [vmem:[%s3 + $0x20] sm:$0xff]
  %v135 = vld [vmem:[%s3 + $0x28] sm:$0xff]
  %v136 = vld [vmem:[%s3 + $0x30] sm:$0xff]
  %v137 = vld [vmem:[%s3 + $0x38] sm:$0xff]
  %v138 = vld [vmem:[#allocation2] sm:$0x1]
  %v140 = vlaneseq
  %v141 = vshrl.u32 %v140, 7
  %v142 = vsub.s32 0, %v141
  %v143 = vrot.slane %v138, %v142
  %vm145 = vcmask 523264
  %v147 = vsel %vm145, %v129, 0
  %149 = vmatprep.subr.mxu0 0.0
  %150 = vmatpush1.msra.mxu0 %v130
  %151 = vmatprep.subr.mxu0 0.0
  %152 = vmatpush1.msra.mxu0 %v131
  %153 = vmatprep.subr.mxu0 0.0
  %154 = vmatpush1.msra.mxu0 %v132
  %155 = vmatprep.subr.mxu0 0.0
  %156 = vmatpush1.msra.mxu0 %v133
  %157 = vmatprep.subr.mxu0 0.0
  %158 = vmatpush1.msra.mxu0 %v134
  %159 = vmatprep.subr.mxu0 0.0
  %160 = vmatpush1.msra.mxu0 %v135
  %161 = vmatprep.subr.mxu0 0.0
  %162 = vmatpush1.msra.mxu0 %v136
  %163 = vmatprep.subr.mxu0 0.0
  %164 = vmatpush1.msra.mxu0 %v137
  %165 = vmatprep.subr.mxu0 0.0
  %166 = vmatpush1.msra.mxu0 0.0
  %167 = vmatprep.subr.mxu0 0.0
  %168 = vmatpush1.msra.mxu0 0.0
  %169 = vmatprep.subr.mxu0 0.0
  %170 = vmatpush1.msra.mxu0 0.0
  %171 = vmatprep.subr.mxu0 0.0
  %172 = vmatpush1.msra.mxu0 0.0
  %173 = vmatprep.subr.mxu0 0.0
  %174 = vmatpush1.msra.mxu0 0.0
  %175 = vmatprep.subr.mxu0 0.0
  %176 = vmatpush1.msra.mxu0 0.0
  %177 = vmatprep.subr.mxu0 0.0
  %178 = vmatpush1.msra.mxu0 0.0
  %179 = vmatprep.subr.mxu0 0.0
  %180 = vmatpush1.msra.mxu0 0.0
  %181 = vmatprep.subr.mxu0 0.0
  %182 = vmatpush1.msra.mxu0 0.0
  %183 = vmatprep.subr.mxu0 0.0
  %184 = vmatpush1.msra.mxu0 0.0
  %185 = vmatprep.subr.mxu0 0.0
  %186 = vmatpush1.msra.mxu0 0.0
  %187 = vmatprep.subr.mxu0 0.0
  %188 = vmatpush1.msra.mxu0 0.0
  %189 = vmatprep.subr.mxu0 0.0
  %190 = vmatpush1.msra.mxu0 0.0
  %191 = vmatprep.subr.mxu0 0.0
  %192 = vmatpush1.msra.mxu0 0.0
  %193 = vmatprep.subr.mxu0 0.0
  %194 = vmatpush1.msra.mxu0 0.0
  %195 = vmatprep.subr.mxu0 0.0
  %196 = vmatpush1.msra.mxu0 0.0
  %197 = vmatprep.subr.mxu0 0.0
  %198 = vmatpush1.msra.mxu0 0.0
  %199 = vmatprep.subr.mxu0 0.0
  %200 = vmatpush1.msra.mxu0 0.0
  %201 = vmatprep.subr.mxu0 0.0
  %202 = vmatpush1.msra.mxu0 0.0
  %203 = vmatprep.subr.mxu0 0.0
  %204 = vmatpush1.msra.mxu0 0.0
  %205 = vmatprep.subr.mxu0 0.0
  %206 = vmatpush1.msra.mxu0 0.0
  %207 = vmatprep.subr.mxu0 0.0
  %208 = vmatpush1.msra.mxu0 0.0
  %209 = vmatprep.subr.mxu0 0.0
  %210 = vmatpush1.msra.mxu0 0.0
  %211 = vmatprep.subr.mxu0 0.0
  %212 = vmatpush1.msra.mxu0 0.0
  %213 = vmatprep.mubr.f32.mxu0 0.0
  %214 = vmatmul.mubr.f32.gmra.mrb[0].mxu0 %v147
  %v215 = vpop.f32.mrb[0].mxu0
  %v216 = vadd.f32 %v143, %v215
  %v217 = vpop.f32.mrb[0].mxu0
  %218 = vdwg.mxu0
  %v219 = vsub.f32 0.0, %v216
  %v220 = vmul.f32 %v219, 1.442695
  %v221 = vpow.pop %v220
  %v222 = vadd.f32 %v221, 1.0
  %v223 = vrcp.pop %v222
  %v224 = vmul.f32 1.0, %v223
  %vm225 = vcmask 1024
  %226 = vst.msk [vmem:[%s5] sm:$0x3] %vm225, %v224
  // Predicated region
  $region22: #{transformer_model_forward.7} parent=0 // pred_check
    _
  $region23: #{transformer_model_forward.7} parent=0 // pred_check_branch
    %228 = sbr.rel (0) target = $region25
  $region24: #{transformer_model_forward.7} parent=0 // pred_region
    _
  $region25: #{transformer_model_forward.7} parent=0 // pred_fallthru
    _
  // Predicated region
  $region26: #{transformer_model_forward.7} parent=0 // pred_check
    _
  $region27: #{transformer_model_forward.7} parent=0 // pred_check_branch
    %230 = sbr.rel (0) target = $region29
  $region28: #{transformer_model_forward.7} parent=0 // pred_region
    _
  $region29: #{transformer_model_forward.7} parent=0 // pred_fallthru
    _

// kernel: transformer_model_forward.4
$region0: #{transformer_model_forward.4}
  #allocation0 [shape = 'u32[]', space=smem, size = 0x4, offset = 0x4, fixed_abs, tag = 'smem constant byte address 0x4 - core index']
  #allocation1 [shape = 'u32[144,128]{1,0:T(1,128)}', space=vmem, size = 0x12000, scoped, tag = 'internal scratch']
  %s0 = inlined_call_operand.vmem [shape: f32[2,9,16], index: 0, kind: input, shape index: {}]
  %s1 = inlined_call_operand.vmem [shape: f32[5,4,32], index: 1, kind: input, shape index: {}]
  %s2 = inlined_call_operand.vmem [shape: f32[1,32], index: 2, kind: input, shape index: {}]
  %s3 = inlined_call_operand.vmem [shape: f32[2,8,32], index: 3, kind: output, shape index: {}]
  %s4 = sld [smem:[#allocation0]]
  $region45: #{transformer_model_forward.4} parent=0
    _
  %s6 = ssub.s32 1, %s4
  %s7 = scalar_select 0, %s6, %s4
  loop: start=0, step=1, limit=4
  $region2: #{transformer_model_forward.4} parent=0 // loop_pre_header
    _
  $region3: #{transformer_model_forward.4} parent=0 // loop_header
    %s9 = sphi 0, %s13
    %p10 = scmp.ge.s32.totalorder %s9, 4
    %s19 = sphi 0, %s21
    %s22 = sphi 0, %s19
    %s23 = sphi 0, %s22
    %s39 = sphi 0, %s23
    %s43 = sphi 0, %s43
    %s45 = sphi 0, %s43
    %s46 = sphi 0, %s45
    %s60 = sphi 0, %s46
    %s64 = sphi 0, %s64
    %s66 = sphi 0, %s64
    %s67 = sphi 0, %s66
    %s81 = sphi 0, %s67
    %s87 = sphi 0, %s89
    %s90 = sphi 0, %s87
    %s91 = sphi 0, %s90
    %s107 = sphi 0, %s91
  $region4: #{transformer_model_forward.4} parent=0 // loop_header_branch
    %12 = sbr.rel (%p10) target = $region8
  $region5: #{transformer_model_forward.4} parent=0 // loop_body
    %s14 = ssub.s32 %s9, 1
    %s15 = ssub.s32 %s9, 2
    %s16 = sadd.s32 %s9, 1
    %s17 = ssub.s32 %s9, %s16
    %p18 = scmp.eq.s32.totalorder %s17, 0
    %s20 = sadd.s32 %s19, 1
    %s21 = scalar_select %p18, %s19, %s20
    %p24 = pneg %p18
    %p25 = scmp.eq.s32.totalorder %s9, 1
    %p26 = por %p24, %p25
    %p27 = scmp.ne.s32.totalorder %s19, %s22
    %p28 = scmp.eq.s32.totalorder %s9, 0
    %p29 = por %p27, %p28
    %p30 = scmp.ne.s32.totalorder %s19, %s22
    %p31 = scmp.eq.s32.totalorder %s14, 1
    %p32 = por %p30, %p31
    %p33 = scmp.ne.s32.totalorder %s22, %s23
    %p34 = scmp.eq.s32.totalorder %s14, 0
    %p35 = por %p33, %p34
    %p36 = scmp.ne.s32.totalorder %s22, %s23
    %p37 = scmp.eq.s32.totalorder %s15, 1
    %p38 = por %p36, %p37
    %p40 = scmp.ne.s32.totalorder %s23, %s39
    %p41 = scmp.eq.s32.totalorder %s15, 0
    %p42 = por %p40, %p41
    %s44 = sadd.s32 %s43, 1
    %p47 = scmp.eq.s32.totalorder %s9, 1
    %p48 = scmp.ne.s32.totalorder %s43, %s45
    %p49 = scmp.eq.s32.totalorder %s9, 0
    %p50 = por %p48, %p49
    %p51 = scmp.ne.s32.totalorder %s43, %s45
    %p52 = scmp.eq.s32.totalorder %s14, 1
    %p53 = por %p51, %p52
    %p54 = scmp.ne.s32.totalorder %s45, %s46
    %p55 = scmp.eq.s32.totalorder %s14, 0
    %p56 = por %p54, %p55
    %p57 = scmp.ne.s32.totalorder %s45, %s46
    %p58 = scmp.eq.s32.totalorder %s15, 1
    %p59 = por %p57, %p58
    %p61 = scmp.ne.s32.totalorder %s46, %s60
    %p62 = scmp.eq.s32.totalorder %s15, 0
    %p63 = por %p61, %p62
    %s65 = sadd.s32 %s64, 1
    %p68 = scmp.eq.s32.totalorder %s9, 1
    %p69 = scmp.ne.s32.totalorder %s64, %s66
    %p70 = scmp.eq.s32.totalorder %s9, 0
    %p71 = por %p69, %p70
    %p72 = scmp.ne.s32.totalorder %s64, %s66
    %p73 = scmp.eq.s32.totalorder %s14, 1
    %p74 = por %p72, %p73
    %p75 = scmp.ne.s32.totalorder %s66, %s67
    %p76 = scmp.eq.s32.totalorder %s14, 0
    %p77 = por %p75, %p76
    %p78 = scmp.ne.s32.totalorder %s66, %s67
    %p79 = scmp.eq.s32.totalorder %s15, 1
    %p80 = por %p78, %p79
    %p82 = scmp.ne.s32.totalorder %s67, %s81
    %p83 = scmp.eq.s32.totalorder %s15, 0
    %p84 = por %p82, %p83
    %s85 = ssub.s32 %s9, %s16
    %p86 = scmp.eq.s32.totalorder %s85, 0
    %s88 = sadd.s32 %s87, 1
    %s89 = scalar_select %p86, %s87, %s88
    %p92 = pneg %p86
    %p93 = scmp.eq.s32.totalorder %s9, 1
    %p94 = por %p92, %p93
    %p95 = scmp.ne.s32.totalorder %s87, %s90
    %p96 = scmp.eq.s32.totalorder %s9, 0
    %p97 = por %p95, %p96
    %p98 = scmp.ne.s32.totalorder %s87, %s90
    %p99 = scmp.eq.s32.totalorder %s14, 1
    %p100 = por %p98, %p99
    %p101 = scmp.ne.s32.totalorder %s90, %s91
    %p102 = scmp.eq.s32.totalorder %s14, 0
    %p103 = por %p101, %p102
    %p104 = scmp.ne.s32.totalorder %s90, %s91
    %p105 = scmp.eq.s32.totalorder %s15, 1
    %p106 = por %p104, %p105
    %p108 = scmp.ne.s32.totalorder %s91, %s107
    %p109 = scmp.eq.s32.totalorder %s15, 0
    %p110 = por %p108, %p109
    %p111 = scmp.le.s32.totalorder 1, %s9
    %p112 = scmp.lt.s32.totalorder %s9, 3
    %p113 = pnand %p111, %p112
    %p114 = pneg %p113
    // Predicated region
    $region9: #{transformer_model_forward.4} parent=5 // pred_check
      _
    $region10: #{transformer_model_forward.4} parent=5 // pred_check_branch
      %116 = sbr.rel (%p113) target = $region12
    $region11: #{transformer_model_forward.4} parent=5 // pred_region
      %s117 = ssub.s32 %s9, 1
      // Predicated region
      $region13: #{transformer_model_forward.4} parent=11 // pred_check
        %p118 = pneg %p56
      $region14: #{transformer_model_forward.4} parent=11 // pred_check_branch
        %120 = sbr.rel (%p118) target = $region16
      $region15: #{transformer_model_forward.4} parent=11 // pred_region
        _
      $region16: #{transformer_model_forward.4} parent=11 // pred_fallthru
        _
      // Predicated region
      $region17: #{transformer_model_forward.4} parent=11 // pred_check
        %p121 = pneg %p77
      $region18: #{transformer_model_forward.4} parent=11 // pred_check_branch
        %123 = sbr.rel (%p121) target = $region20
      $region19: #{transformer_model_forward.4} parent=11 // pred_region
        _
      $region20: #{transformer_model_forward.4} parent=11 // pred_fallthru
        _
    $region12: #{transformer_model_forward.4} parent=5 // pred_fallthru
      _
    %p124 = scmp.lt.s32.totalorder %s9, 2
    // Predicated region
    $region21: #{transformer_model_forward.4} parent=5 // pred_check
      %p125 = pneg %p124
    $region22: #{transformer_model_forward.4} parent=5 // pred_check_branch
      %127 = sbr.rel (%p125) target = $region24
    $region23: #{transformer_model_forward.4} parent=5 // pred_region
      // Predicated region
      $region25: #{transformer_model_forward.4} parent=23 // pred_check
        %p128 = pneg %p29
      $region26: #{transformer_model_forward.4} parent=23 // pred_check_branch
        %130 = sbr.rel (%p128) target = $region28
      $region27: #{transformer_model_forward.4} parent=23 // pred_region
        %p131 = scmp.lt.s32.totalorder %s9, 1
        %s132 = scalar_select %p131, %s9, 1
        %s133 = smul.addr %s132, 2
        %s134 = smul.addr %s133, 8
        %s135 = scalar_lea.vmem %s0, %s134
      $region28: #{transformer_model_forward.4} parent=23 // pred_fallthru
        _
    $region24: #{transformer_model_forward.4} parent=5 // pred_fallthru
      _
    %p136 = scmp.le.s32.totalorder 1, %s9
    %p137 = scmp.lt.s32.totalorder %s9, 3
    %p138 = pnand %p136, %p137
    %p139 = pneg %p138
    // Predicated region
    $region29: #{transformer_model_forward.4} parent=5 // pred_check
      _
    $region30: #{transformer_model_forward.4} parent=5 // pred_check_branch
      %141 = sbr.rel (%p138) target = $region32
    $region31: #{transformer_model_forward.4} parent=5 // pred_region
      %s142 = ssub.s32 %s9, 1
      %p143 = scmp.lt.s32.totalorder %s14, 1
      %s144 = scalar_select %p143, %s14, 1
      %s145 = smul.addr %s144, 2
      %s146 = smul.addr %s145, 8
      %s147 = scalar_lea.vmem %s0, %s146
      %p148 = pneg %p35
      %p149 = pneg %p32
      %p150 = pneg %p56
      %p151 = pneg %p53
      %p152 = pneg %p77
      %p153 = pneg %p74
      %p154 = pneg %p103
      %p155 = pneg %p100
      %p156 = scmp.lt.s32.totalorder %s14, 1
      %s157 = scalar_select %p156, %s14, 1
      %s158 = smul.addr %s157, 8
      %s159 = scalar_lea.vmem %s3, %s158
      %p160 = scmp.lt.s32.totalorder %s14, 1
      %s161 = scalar_select %p160, %s14, 1
      %s162 = smul.addr %s161, 2
      %s163 = smul.addr %s162, 8
      %s164 = scalar_lea.vmem %s0, %s163
      %p165 = scmp.lt.s32.totalorder %s14, 1
      %s166 = scalar_select %p165, %s14, 1
      %s167 = smul.addr %s166, 8
      %s168 = scalar_lea.vmem %s3, %s167
      %v169 = vld [vmem:[%s164] sm:$0xff]
      %v170 = vld [vmem:[%s164 + $0x8] sm:$0x1]
      %v171 = vld [vmem:[%s2] sm:$0x1]
      %v172 = vld [vmem:[%s1] sm:$0xf]
      %s173 = scalar_lea.vmem %s1, 4
      %v174 = vld [vmem:[%s173] sm:$0xf]
      %176 = vrot.lane.b32.xlu0 %v169, 124
      %v177 = vpop.permute.xlu0 %176
      %vm178 = vcmask 31744
      %v179 = vsel %vm178, %v177, 0
      %vm181 = vcmask 1043456
      %v183 = vsel %vm181, %v174, 0
      %185 = vmatprep.subr.mxu0 0.0
      %186 = vmatpush1.msra.mxu0 %v183
      %187 = vmatprep.subr.mxu0 0.0
      %188 = vmatpush1.msra.mxu0 0.0
      %189 = vmatprep.subr.mxu0 0.0
      %190 = vmatpush1.msra.mxu0 0.0
      %191 = vmatprep.subr.mxu0 0.0
      %192 = vmatpush1.msra.mxu0 0.0
      %193 = vmatprep.subr.mxu0 0.0
      %194 = vmatpush1.msra.mxu0 0.0
      %195 = vmatprep.subr.mxu0 0.0
      %196 = vmatpush1.msra.mxu0 0.0
      %197 = vmatprep.subr.mxu0 0.0
      %198 = vmatpush1.msra.mxu0 0.0
      %199 = vmatprep.subr.mxu0 0.0
      %200 = vmatpush1.msra.mxu0 0.0
      %201 = vmatprep.subr.mxu0 0.0
      %202 = vmatpush1.msra.mxu0 0.0
      %203 = vmatprep.subr.mxu0 0.0
      %204 = vmatpush1.msra.mxu0 0.0
      %205 = vmatprep.subr.mxu0 0.0
      %206 = vmatpush1.msra.mxu0 0.0
      %207 = vmatprep.subr.mxu0 0.0
      %208 = vmatpush1.msra.mxu0 0.0
      %209 = vmatprep.subr.mxu0 0.0
      %210 = vmatpush1.msra.mxu0 0.0
      %211 = vmatprep.subr.mxu0 0.0
      %212 = vmatpush1.msra.mxu0 0.0
      %213 = vmatprep.subr.mxu0 0.0
      %214 = vmatpush1.msra.mxu0 0.0
      %215 = vmatprep.subr.mxu0 0.0
      %216 = vmatpush1.msra.mxu0 0.0
      %217 = vmatprep.subr.mxu0 0.0
      %218 = vmatpush1.msra.mxu0 0.0
      %219 = vmatprep.subr.mxu0 0.0
      %220 = vmatpush1.msra.mxu0 0.0
      %221 = vmatprep.subr.mxu0 0.0
      %222 = vmatpush1.msra.mxu0 0.0
      %223 = vmatprep.subr.mxu0 0.0
      %224 = vmatpush1.msra.mxu0 0.0
      %225 = vmatprep.subr.mxu0 0.0
      %226 = vmatpush1.msra.mxu0 0.0
      %227 = vmatprep.subr.mxu0 0.0
      %228 = vmatpush1.msra.mxu0 0.0
      %229 = vmatprep.subr.mxu0 0.0
      %230 = vmatpush1.msra.mxu0 0.0
      %231 = vmatprep.subr.mxu0 0.0
      %232 = vmatpush1.msra.mxu0 0.0
      %233 = vmatprep.subr.mxu0 0.0
      %234 = vmatpush1.msra.mxu0 0.0
      %235 = vmatprep.subr.mxu0 0.0
      %236 = vmatpush1.msra.mxu0 0.0
      %237 = vmatprep.subr.mxu0 0.0
      %238 = vmatpush1.msra.mxu0 0.0
      %239 = vmatprep.subr.mxu0 0.0
      %240 = vmatpush1.msra.mxu0 0.0
      %241 = vmatprep.subr.mxu0 0.0
      %242 = vmatpush1.msra.mxu0 0.0
      %243 = vmatprep.subr.mxu0 0.0
      %244 = vmatpush1.msra.mxu0 0.0
      %245 = vmatprep.subr.mxu0 0.0
      %246 = vmatpush1.msra.mxu0 0.0
      %247 = vmatprep.subr.mxu0 0.0
      %248 = vmatpush1.msra.mxu0 0.0
      %249 = vmatprep.mubr.f32.mxu0 0.0
      %250 = vmatmul.mubr.f32.gmra.mrb[0].mxu0 %v179
      %v251 = vpop.f32.mrb[0].mxu0
      %v252 = vadd.f32 0.0, %v251
      %v253 = vpop.f32.mrb[0].mxu0
      %254 = vdwg.mxu0
      %v255 = vsel %vm178, %v169, 0
      %v258 = vsel %vm181, %v172, 0
      %260 = vmatprep.subr.mxu0 0.0
      %261 = vmatpush1.msra.mxu0 %v258
      %262 = vmatprep.subr.mxu0 0.0
      %263 = vmatpush1.msra.mxu0 0.0
      %264 = vmatprep.subr.mxu0 0.0
      %265 = vmatpush1.msra.mxu0 0.0
      %266 = vmatprep.subr.mxu0 0.0
      %267 = vmatpush1.msra.mxu0 0.0
      %268 = vmatprep.subr.mxu0 0.0
      %269 = vmatpush1.msra.mxu0 0.0
      %270 = vmatprep.subr.mxu0 0.0
      %271 = vmatpush1.msra.mxu0 0.0
      %272 = vmatprep.subr.mxu0 0.0
      %273 = vmatpush1.msra.mxu0 0.0
      %274 = vmatprep.subr.mxu0 0.0
      %275 = vmatpush1.msra.mxu0 0.0
      %276 = vmatprep.subr.mxu0 0.0
      %277 = vmatpush1.msra.mxu0 0.0
      %278 = vmatprep.subr.mxu0 0.0
      %279 = vmatpush1.msra.mxu0 0.0
      %280 = vmatprep.subr.mxu0 0.0
      %281 = vmatpush1.msra.mxu0 0.0
      %282 = vmatprep.subr.mxu0 0.0
      %283 = vmatpush1.msra.mxu0 0.0
      %284 = vmatprep.subr.mxu0 0.0
      %285 = vmatpush1.msra.mxu0 0.0
      %286 = vmatprep.subr.mxu0 0.0
      %287 = vmatpush1.msra.mxu0 0.0
      %288 = vmatprep.subr.mxu0 0.0
      %289 = vmatpush1.msra.mxu0 0.0
      %290 = vmatprep.subr.mxu0 0.0
      %291 = vmatpush1.msra.mxu0 0.0
      %292 = vmatprep.subr.mxu0 0.0
      %293 = vmatpush1.msra.mxu0 0.0
      %294 = vmatprep.subr.mxu0 0.0
      %295 = vmatpush1.msra.mxu0 0.0
      %296 = vmatprep.subr.mxu0 0.0
      %297 = vmatpush1.msra.mxu0 0.0
      %298 = vmatprep.subr.mxu0 0.0
      %299 = vmatpush1.msra.mxu0 0.0
      %300 = vmatprep.subr.mxu0 0.0
      %301 = vmatpush1.msra.mxu0 0.0
      %302 = vmatprep.subr.mxu0 0.0
      %303 = vmatpush1.msra.mxu0 0.0
      %304 = vmatprep.subr.mxu0 0.0
      %305 = vmatpush1.msra.mxu0 0.0
      %306 = vmatprep.subr.mxu0 0.0
      %307 = vmatpush1.msra.mxu0 0.0
      %308 = vmatprep.subr.mxu0 0.0
      %309 = vmatpush1.msra.mxu0 0.0
      %310 = vmatprep.subr.mxu0 0.0
      %311 = vmatpush1.msra.mxu0 0.0
      %312 = vmatprep.subr.mxu0 0.0
      %313 = vmatpush1.msra.mxu0 0.0
      %314 = vmatprep.subr.mxu0 0.0
      %315 = vmatpush1.msra.mxu0 0.0
      %316 = vmatprep.subr.mxu0 0.0
      %317 = vmatpush1.msra.mxu0 0.0
      %318 = vmatprep.subr.mxu0 0.0
      %319 = vmatpush1.msra.mxu0 0.0
      %320 = vmatprep.subr.mxu0 0.0
      %321 = vmatpush1.msra.mxu0 0.0
      %322 = vmatprep.subr.mxu0 0.0
      %323 = vmatpush1.msra.mxu0 0.0
      %324 = vmatprep.mubr.f32.mxu0 0.0
      %325 = vmatmul.mubr.f32.gmra.mrb[0].mxu0 %v255
      %v326 = vpop.f32.mrb[0].mxu0
      %v327 = vadd.f32 %v252, %v326
      %v328 = vpop.f32.mrb[0].mxu0
      %329 = vdwg.mxu0
      %s330 = scalar_lea.vmem %s1, 8
      %v331 = vld [vmem:[%s330] sm:$0xf]
      %332 = vrot.lane.b32.xlu0 %v169, 120
      %v333 = vpop.permute.xlu0 %332
      %v334 = vsel %vm178, %v333, 0
      %v337 = vsel %vm181, %v331, 0
      %339 = vmatprep.subr.mxu0 0.0
      %340 = vmatpush1.msra.mxu0 %v337
      %341 = vmatprep.subr.mxu0 0.0
      %342 = vmatpush1.msra.mxu0 0.0
      %343 = vmatprep.subr.mxu0 0.0
      %344 = vmatpush1.msra.mxu0 0.0
      %345 = vmatprep.subr.mxu0 0.0
      %346 = vmatpush1.msra.mxu0 0.0
      %347 = vmatprep.subr.mxu0 0.0
      %348 = vmatpush1.msra.mxu0 0.0
      %349 = vmatprep.subr.mxu0 0.0
      %350 = vmatpush1.msra.mxu0 0.0
      %351 = vmatprep.subr.mxu0 0.0
      %352 = vmatpush1.msra.mxu0 0.0
      %353 = vmatprep.subr.mxu0 0.0
      %354 = vmatpush1.msra.mxu0 0.0
      %355 = vmatprep.subr.mxu0 0.0
      %356 = vmatpush1.msra.mxu0 0.0
      %357 = vmatprep.subr.mxu0 0.0
      %358 = vmatpush1.msra.mxu0 0.0
      %359 = vmatprep.subr.mxu0 0.0
      %360 = vmatpush1.msra.mxu0 0.0
      %361 = vmatprep.subr.mxu0 0.0
      %362 = vmatpush1.msra.mxu0 0.0
      %363 = vmatprep.subr.mxu0 0.0
      %364 = vmatpush1.msra.mxu0 0.0
      %365 = vmatprep.subr.mxu0 0.0
      %366 = vmatpush1.msra.mxu0 0.0
      %367 = vmatprep.subr.mxu0 0.0
      %368 = vmatpush1.msra.mxu0 0.0
      %369 = vmatprep.subr.mxu0 0.0
      %370 = vmatpush1.msra.mxu0 0.0
      %371 = vmatprep.subr.mxu0 0.0
      %372 = vmatpush1.msra.mxu0 0.0
      %373 = vmatprep.subr.mxu0 0.0
      %374 = vmatpush1.msra.mxu0 0.0
      %375 = vmatprep.subr.mxu0 0.0
      %376 = vmatpush1.msra.mxu0 0.0
      %377 = vmatprep.subr.mxu0 0.0
      %378 = vmatpush1.msra.mxu0 0.0
      %379 = vmatprep.subr.mxu0 0.0
      %380 = vmatpush1.msra.mxu0 0.0
      %381 = vmatprep.subr.mxu0 0.0
      %382 = vmatpush1.msra.mxu0 0.0
      %383 = vmatprep.subr.mxu0 0.0
      %384 = vmatpush1.msra.mxu0 0.0
      %385 = vmatprep.subr.mxu0 0.0
      %386 = vmatpush1.msra.mxu0 0.0
      %387 = vmatprep.subr.mxu0 0.0
      %388 = vmatpush1.msra.mxu0 0.0
      %389 = vmatprep.subr.mxu0 0.0
      %390 = vmatpush1.msra.mxu0 0.0
      %391 = vmatprep.subr.mxu0 0.0
      %392 = vmatpush1.msra.mxu0 0.0
      %393 = vmatprep.subr.mxu0 0.0
      %394 = vmatpush1.msra.mxu0 0.0
      %395 = vmatprep.subr.mxu0 0.0
      %396 = vmatpush1.msra.mxu0 0.0
      %397 = vmatprep.subr.mxu0 0.0
      %398 = vmatpush1.msra.mxu0 0.0
      %399 = vmatprep.subr.mxu0 0.0
      %400 = vmatpush1.msra.mxu0 0.0
      %401 = vmatprep.subr.mxu0 0.0
      %402 = vmatpush1.msra.mxu0 0.0
      %403 = vmatprep.mubr.f32.mxu0 0.0
      %404 = vmatmul.mubr.f32.gmra.mrb[0].mxu0 %v334
      %v405 = vpop.f32.mrb[0].mxu0
      %v406 = vadd.f32 0.0, %v405
      %v407 = vpop.f32.mrb[0].mxu0
      %408 = vdwg.mxu0
      %v409 = vadd.f32 %v327, %v406
      %s410 = scalar_lea.vmem %s1, 12
      %v411 = vld [vmem:[%s410] sm:$0xf]
      %412 = vrot.lane.b32.xlu0 %v169, 116
      %v413 = vpop.permute.xlu0 %412
      %v414 = vsel %vm178, %v413, 0
      %v417 = vsel %vm181, %v411, 0
      %419 = vmatprep.subr.mxu0 0.0
      %420 = vmatpush1.msra.mxu0 %v417
      %421 = vmatprep.subr.mxu0 0.0
      %422 = vmatpush1.msra.mxu0 0.0
      %423 = vmatprep.subr.mxu0 0.0
      %424 = vmatpush1.msra.mxu0 0.0
      %425 = vmatprep.subr.mxu0 0.0
      %426 = vmatpush1.msra.mxu0 0.0
      %427 = vmatprep.subr.mxu0 0.0
      %428 = vmatpush1.msra.mxu0 0.0
      %429 = vmatprep.subr.mxu0 0.0
      %430 = vmatpush1.msra.mxu0 0.0
      %431 = vmatprep.subr.mxu0 0.0
      %432 = vmatpush1.msra.mxu0 0.0
      %433 = vmatprep.subr.mxu0 0.0
      %434 = vmatpush1.msra.mxu0 0.0
      %435 = vmatprep.subr.mxu0 0.0
      %436 = vmatpush1.msra.mxu0 0.0
      %437 = vmatprep.subr.mxu0 0.0
      %438 = vmatpush1.msra.mxu0 0.0
      %439 = vmatprep.subr.mxu0 0.0
      %440 = vmatpush1.msra.mxu0 0.0
      %441 = vmatprep.subr.mxu0 0.0
      %442 = vmatpush1.msra.mxu0 0.0
      %443 = vmatprep.subr.mxu0 0.0
      %444 = vmatpush1.msra.mxu0 0.0
      %445 = vmatprep.subr.mxu0 0.0
      %446 = vmatpush1.msra.mxu0 0.0
      %447 = vmatprep.subr.mxu0 0.0
      %448 = vmatpush1.msra.mxu0 0.0
      %449 = vmatprep.subr.mxu0 0.0
      %450 = vmatpush1.msra.mxu0 0.0
      %451 = vmatprep.subr.mxu0 0.0
      %452 = vmatpush1.msra.mxu0 0.0
      %453 = vmatprep.subr.mxu0 0.0
      %454 = vmatpush1.msra.mxu0 0.0
      %455 = vmatprep.subr.mxu0 0.0
      %456 = vmatpush1.msra.mxu0 0.0
      %457 = vmatprep.subr.mxu0 0.0
      %458 = vmatpush1.msra.mxu0 0.0
      %459 = vmatprep.subr.mxu0 0.0
      %460 = vmatpush1.msra.mxu0 0.0
      %461 = vmatprep.subr.mxu0 0.0
      %462 = vmatpush1.msra.mxu0 0.0
      %463 = vmatprep.subr.mxu0 0.0
      %464 = vmatpush1.msra.mxu0 0.0
      %465 = vmatprep.subr.mxu0 0.0
      %466 = vmatpush1.msra.mxu0 0.0
      %467 = vmatprep.subr.mxu0 0.0
      %468 = vmatpush1.msra.mxu0 0.0
      %469 = vmatprep.subr.mxu0 0.0
      %470 = vmatpush1.msra.mxu0 0.0
      %471 = vmatprep.subr.mxu0 0.0
      %472 = vmatpush1.msra.mxu0 0.0
      %473 = vmatprep.subr.mxu0 0.0
      %474 = vmatpush1.msra.mxu0 0.0
      %475 = vmatprep.subr.mxu0 0.0
      %476 = vmatpush1.msra.mxu0 0.0
      %477 = vmatprep.subr.mxu0 0.0
      %478 = vmatpush1.msra.mxu0 0.0
      %479 = vmatprep.subr.mxu0 0.0
      %480 = vmatpush1.msra.mxu0 0.0
      %481 = vmatprep.subr.mxu0 0.0
      %482 = vmatpush1.msra.mxu0 0.0
      %483 = vmatprep.mubr.f32.mxu0 0.0
      %484 = vmatmul.mubr.f32.gmra.mrb[0].mxu0 %v414
      %v485 = vpop.f32.mrb[0].mxu0
      %v486 = vadd.f32 0.0, %v485
      %v487 = vpop.f32.mrb[0].mxu0
      %488 = vdwg.mxu0
      %v489 = vadd.f32 %v409, %v486
      %s490 = scalar_lea.vmem %s1, 16
      %v491 = vld [vmem:[%s490] sm:$0xf]
      %vm493 = vcmask 1046528
      %v494 = vrot.slane %v169, 1
      %v495 = vrot.slane %v170, 1
      %v496 = vsel %vm493, %v494, %v495
      %v497 = vsel %vm178, %v496, 0
      %v500 = vsel %vm181, %v491, 0
      %502 = vmatprep.subr.mxu0 0.0
      %503 = vmatpush1.msra.mxu0 %v500
      %504 = vmatprep.subr.mxu0 0.0
      %505 = vmatpush1.msra.mxu0 0.0
      %506 = vmatprep.subr.mxu0 0.0
      %507 = vmatpush1.msra.mxu0 0.0
      %508 = vmatprep.subr.mxu0 0.0
      %509 = vmatpush1.msra.mxu0 0.0
      %510 = vmatprep.subr.mxu0 0.0
      %511 = vmatpush1.msra.mxu0 0.0
      %512 = vmatprep.subr.mxu0 0.0
      %513 = vmatpush1.msra.mxu0 0.0
      %514 = vmatprep.subr.mxu0 0.0
      %515 = vmatpush1.msra.mxu0 0.0
      %516 = vmatprep.subr.mxu0 0.0
      %517 = vmatpush1.msra.mxu0 0.0
      %518 = vmatprep.subr.mxu0 0.0
      %519 = vmatpush1.msra.mxu0 0.0
      %520 = vmatprep.subr.mxu0 0.0
      %521 = vmatpush1.msra.mxu0 0.0
      %522 = vmatprep.subr.mxu0 0.0
      %523 = vmatpush1.msra.mxu0 0.0
      %524 = vmatprep.subr.mxu0 0.0
      %525 = vmatpush1.msra.mxu0 0.0
      %526 = vmatprep.subr.mxu0 0.0
      %527 = vmatpush1.msra.mxu0 0.0
      %528 = vmatprep.subr.mxu0 0.0
      %529 = vmatpush1.msra.mxu0 0.0
      %530 = vmatprep.subr.mxu0 0.0
      %531 = vmatpush1.msra.mxu0 0.0
      %532 = vmatprep.subr.mxu0 0.0
      %533 = vmatpush1.msra.mxu0 0.0
      %534 = vmatprep.subr.mxu0 0.0
      %535 = vmatpush1.msra.mxu0 0.0
      %536 = vmatprep.subr.mxu0 0.0
      %537 = vmatpush1.msra.mxu0 0.0
      %538 = vmatprep.subr.mxu0 0.0
      %539 = vmatpush1.msra.mxu0 0.0
      %540 = vmatprep.subr.mxu0 0.0
      %541 = vmatpush1.msra.mxu0 0.0
      %542 = vmatprep.subr.mxu0 0.0
      %543 = vmatpush1.msra.mxu0 0.0
      %544 = vmatprep.subr.mxu0 0.0
      %545 = vmatpush1.msra.mxu0 0.0
      %546 = vmatprep.subr.mxu0 0.0
      %547 = vmatpush1.msra.mxu0 0.0
      %548 = vmatprep.subr.mxu0 0.0
      %549 = vmatpush1.msra.mxu0 0.0
      %550 = vmatprep.subr.mxu0 0.0
      %551 = vmatpush1.msra.mxu0 0.0
      %552 = vmatprep.subr.mxu0 0.0
      %553 = vmatpush1.msra.mxu0 0.0
      %554 = vmatprep.subr.mxu0 0.0
      %555 = vmatpush1.msra.mxu0 0.0
      %556 = vmatprep.subr.mxu0 0.0
      %557 = vmatpush1.msra.mxu0 0.0
      %558 = vmatprep.subr.mxu0 0.0
      %559 = vmatpush1.msra.mxu0 0.0
      %560 = vmatprep.subr.mxu0 0.0
      %561 = vmatpush1.msra.mxu0 0.0
      %562 = vmatprep.subr.mxu0 0.0
      %563 = vmatpush1.msra.mxu0 0.0
      %564 = vmatprep.subr.mxu0 0.0
      %565 = vmatpush1.msra.mxu0 0.0
      %566 = vmatprep.mubr.f32.mxu0 0.0
      %567 = vmatmul.mubr.f32.gmra.mrb[0].mxu0 %v497
      %v568 = vpop.f32.mrb[0].mxu0
      %v569 = vadd.f32 0.0, %v568
      %v570 = vpop.f32.mrb[0].mxu0
      %571 = vdwg.mxu0
      %v572 = vadd.f32 %v489, %v569
      %573 = vmatprep.subr.mxu0 0.0
      %574 = vmatpush1.msra.mxu0 %v183
      %575 = vmatprep.subr.mxu0 0.0
      %576 = vmatpush1.msra.mxu0 0.0
      %577 = vmatprep.subr.mxu0 0.0
      %578 = vmatpush1.msra.mxu0 0.0
      %579 = vmatprep.subr.mxu0 0.0
      %580 = vmatpush1.msra.mxu0 0.0
      %581 = vmatprep.subr.mxu0 0.0
      %582 = vmatpush1.msra.mxu0 0.0
      %583 = vmatprep.subr.mxu0 0.0
      %584 = vmatpush1.msra.mxu0 0.0
      %585 = vmatprep.subr.mxu0 0.0
      %586 = vmatpush1.msra.mxu0 0.0
      %587 = vmatprep.subr.mxu0 0.0
      %588 = vmatpush1.msra.mxu0 0.0
      %589 = vmatprep.subr.mxu0 0.0
      %590 = vmatpush1.msra.mxu0 0.0
      %591 = vmatprep.subr.mxu0 0.0
      %592 = vmatpush1.msra.mxu0 0.0
      %593 = vmatprep.subr.mxu0 0.0
      %594 = vmatpush1.msra.mxu0 0.0
      %595 = vmatprep.subr.mxu0 0.0
      %596 = vmatpush1.msra.mxu0 0.0
      %597 = vmatprep.subr.mxu0 0.0
      %598 = vmatpush1.msra.mxu0 0.0
      %599 = vmatprep.subr.mxu0 0.0
      %600 = vmatpush1.msra.mxu0 0.0
      %601 = vmatprep.subr.mxu0 0.0
      %602 = vmatpush1.msra.mxu0 0.0
      %603 = vmatprep.subr.mxu0 0.0
      %604 = vmatpush1.msra.mxu0 0.0
      %605 = vmatprep.subr.mxu0 0.0
      %606 = vmatpush1.msra.mxu0 0.0
      %607 = vmatprep.subr.mxu0 0.0
      %608 = vmatpush1.msra.mxu0 0.0
      %609 = vmatprep.subr.mxu0 0.0
      %610 = vmatpush1.msra.mxu0 0.0
      %611 = vmatprep.subr.mxu0 0.0
      %612 = vmatpush1.msra.mxu0 0.0
      %613 = vmatprep.subr.mxu0 0.0
      %614 = vmatpush1.msra.mxu0 0.0
      %615 = vmatprep.subr.mxu0 0.0
      %616 = vmatpush1.msra.mxu0 0.0
      %617 = vmatprep.subr.mxu0 0.0
      %618 = vmatpush1.msra.mxu0 0.0
      %619 = vmatprep.subr.mxu0 0.0
      %620 = vmatpush1.msra.mxu0 0.0
      %621 = vmatprep.subr.mxu0 0.0
      %622 = vmatpush1.msra.mxu0 0.0
      %623 = vmatprep.subr.mxu0 0.0
      %624 = vmatpush1.msra.mxu0 0.0
      %625 = vmatprep.subr.mxu0 0.0
      %626 = vmatpush1.msra.mxu0 0.0
      %627 = vmatprep.subr.mxu0 0.0
      %628 = vmatpush1.msra.mxu0 0.0
      %629 = vmatprep.subr.mxu0 0.0
      %630 = vmatpush1.msra.mxu0 0.0
      %631 = vmatprep.subr.mxu0 0.0
      %632 = vmatpush1.msra.mxu0 0.0
      %633 = vmatprep.subr.mxu0 0.0
      %634 = vmatpush1.msra.mxu0 0.0
      %635 = vmatprep.subr.mxu0 0.0
      %636 = vmatpush1.msra.mxu0 0.0
      %637 = vmatprep.mubr.f32.mxu0 0.0
      %638 = vmatmul.mubr.f32.gmra.mrb[0].mxu0 %v414
      %v639 = vpop.f32.mrb[0].mxu0
      %v640 = vadd.f32 0.0, %v639
      %v641 = vpop.f32.mrb[0].mxu0
      %642 = vdwg.mxu0
      %643 = vmatprep.subr.mxu0 0.0
      %644 = vmatpush1.msra.mxu0 %v258
      %645 = vmatprep.subr.mxu0 0.0
      %646 = vmatpush1.msra.mxu0 0.0
      %647 = vmatprep.subr.mxu0 0.0
      %648 = vmatpush1.msra.mxu0 0.0
      %649 = vmatprep.subr.mxu0 0.0
      %650 = vmatpush1.msra.mxu0 0.0
      %651 = vmatprep.subr.mxu0 0.0
      %652 = vmatpush1.msra.mxu0 0.0
      %653 = vmatprep.subr.mxu0 0.0
      %654 = vmatpush1.msra.mxu0 0.0
      %655 = vmatprep.subr.mxu0 0.0
      %656 = vmatpush1.msra.mxu0 0.0
      %657 = vmatprep.subr.mxu0 0.0
      %658 = vmatpush1.msra.mxu0 0.0
      %659 = vmatprep.subr.mxu0 0.0
      %660 = vmatpush1.msra.mxu0 0.0
      %661 = vmatprep.subr.mxu0 0.0
      %662 = vmatpush1.msra.mxu0 0.0
      %663 = vmatprep.subr.mxu0 0.0
      %664 = vmatpush1.msra.mxu0 0.0
      %665 = vmatprep.subr.mxu0 0.0
      %666 = vmatpush1.msra.mxu0 0.0
      %667 = vmatprep.subr.mxu0 0.0
      %668 = vmatpush1.msra.mxu0 0.0
      %669 = vmatprep.subr.mxu0 0.0
      %670 = vmatpush1.msra.mxu0 0.0
      %671 = vmatprep.subr.mxu0 0.0
      %672 = vmatpush1.msra.mxu0 0.0
      %673 = vmatprep.subr.mxu0 0.0
      %674 = vmatpush1.msra.mxu0 0.0
      %675 = vmatprep.subr.mxu0 0.0
      %676 = vmatpush1.msra.mxu0 0.0
      %677 = vmatprep.subr.mxu0 0.0
      %678 = vmatpush1.msra.mxu0 0.0
      %679 = vmatprep.subr.mxu0 0.0
      %680 = vmatpush1.msra.mxu0 0.0
      %681 = vmatprep.subr.mxu0 0.0
      %682 = vmatpush1.msra.mxu0 0.0
      %683 = vmatprep.subr.mxu0 0.0
      %684 = vmatpush1.msra.mxu0 0.0
      %685 = vmatprep.subr.mxu0 0.0
      %686 = vmatpush1.msra.mxu0 0.0
      %687 = vmatprep.subr.mxu0 0.0
      %688 = vmatpush1.msra.mxu0 0.0
      %689 = vmatprep.subr.mxu0 0.0
      %690 = vmatpush1.msra.mxu0 0.0
      %691 = vmatprep.subr.mxu0 0.0
      %692 = vmatpush1.msra.mxu0 0.0
      %693 = vmatprep.subr.mxu0 0.0
      %694 = vmatpush1.msra.mxu0 0.0
      %695 = vmatprep.subr.mxu0 0.0
      %696 = vmatpush1.msra.mxu0 0.0
      %697 = vmatprep.subr.mxu0 0.0
      %698 = vmatpush1.msra.mxu0 0.0
      %699 = vmatprep.subr.mxu0 0.0
      %700 = vmatpush1.msra.mxu0 0.0
      %701 = vmatprep.subr.mxu0 0.0
      %702 = vmatpush1.msra.mxu0 0.0
      %703 = vmatprep.subr.mxu0 0.0
      %704 = vmatpush1.msra.mxu0 0.0
      %705 = vmatprep.subr.mxu0 0.0
      %706 = vmatpush1.msra.mxu0 0.0
      %707 = vmatprep.mubr.f32.mxu0 0.0
      %708 = vmatmul.mubr.f32.gmra.mrb[0].mxu0 %v334
      %v709 = vpop.f32.mrb[0].mxu0
      %v710 = vadd.f32 %v640, %v709
      %v711 = vpop.f32.mrb[0].mxu0
      %712 = vdwg.mxu0
      %713 = vmatprep.subr.mxu0 0.0
      %714 = vmatpush1.msra.mxu0 %v337
      %715 = vmatprep.subr.mxu0 0.0
      %716 = vmatpush1.msra.mxu0 0.0
      %717 = vmatprep.subr.mxu0 0.0
      %718 = vmatpush1.msra.mxu0 0.0
      %719 = vmatprep.subr.mxu0 0.0
      %720 = vmatpush1.msra.mxu0 0.0
      %721 = vmatprep.subr.mxu0 0.0
      %722 = vmatpush1.msra.mxu0 0.0
      %723 = vmatprep.subr.mxu0 0.0
      %724 = vmatpush1.msra.mxu0 0.0
      %725 = vmatprep.subr.mxu0 0.0
      %726 = vmatpush1.msra.mxu0 0.0
      %727 = vmatprep.subr.mxu0 0.0
      %728 = vmatpush1.msra.mxu0 0.0
      %729 = vmatprep.subr.mxu0 0.0
      %730 = vmatpush1.msra.mxu0 0.0
      %731 = vmatprep.subr.mxu0 0.0
      %732 = vmatpush1.msra.mxu0 0.0
      %733 = vmatprep.subr.mxu0 0.0
      %734 = vmatpush1.msra.mxu0 0.0
      %735 = vmatprep.subr.mxu0 0.0
      %736 = vmatpush1.msra.mxu0 0.0
      %737 = vmatprep.subr.mxu0 0.0
      %738 = vmatpush1.msra.mxu0 0.0
      %739 = vmatprep.subr.mxu0 0.0
      %740 = vmatpush1.msra.mxu0 0.0
      %741 = vmatprep.subr.mxu0 0.0
      %742 = vmatpush1.msra.mxu0 0.0
      %743 = vmatprep.subr.mxu0 0.0
      %744 = vmatpush1.msra.mxu0 0.0
      %745 = vmatprep.subr.mxu0 0.0
      %746 = vmatpush1.msra.mxu0 0.0
      %747 = vmatprep.subr.mxu0 0.0
      %748 = vmatpush1.msra.mxu0 0.0
      %749 = vmatprep.subr.mxu0 0.0
      %750 = vmatpush1.msra.mxu0 0.0
      %751 = vmatprep.subr.mxu0 0.0
      %752 = vmatpush1.msra.mxu0 0.0
      %753 = vmatprep.subr.mxu0 0.0
      %754 = vmatpush1.msra.mxu0 0.0
      %755 = vmatprep.subr.mxu0 0.0
      %756 = vmatpush1.msra.mxu0 0.0
      %757 = vmatprep.subr.mxu0 0.0
      %758 = vmatpush1.msra.mxu0 0.0
      %759 = vmatprep.subr.mxu0 0.0
      %760 = vmatpush1.msra.mxu0 0.0
      %761 = vmatprep.subr.mxu0 0.0
      %762 = vmatpush1.msra.mxu0 0.0
      %763 = vmatprep.subr.mxu0 0.0
      %764 = vmatpush1.msra.mxu0 0.0
      %765 = vmatprep.subr.mxu0 0.0
      %766 = vmatpush1.msra.mxu0 0.0
      %767 = vmatprep.subr.mxu0 0.0
      %768 = vmatpush1.msra.mxu0 0.0
      %769 = vmatprep.subr.mxu0 0.0
      %770 = vmatpush1.msra.mxu0 0.0
      %771 = vmatprep.subr.mxu0 0.0
      %772 = vmatpush1.msra.mxu0 0.0
      %773 = vmatprep.subr.mxu0 0.0
      %774 = vmatpush1.msra.mxu0 0.0
      %775 = vmatprep.subr.mxu0 0.0
      %776 = vmatpush1.msra.mxu0 0.0
      %777 = vmatprep.mubr.f32.mxu0 0.0
      %778 = vmatmul.mubr.f32.gmra.mrb[0].mxu0 %v497
      %v779 = vpop.f32.mrb[0].mxu0
      %v780 = vadd.f32 0.0, %v779
      %v781 = vpop.f32.mrb[0].mxu0
      %782 = vdwg.mxu0
      %v783 = vadd.f32 %v710, %v780
      %784 = vrot.lane.b32.xlu0 %v496, 124
      %v785 = vpop.permute.xlu0 %784
      %v786 = vsel %vm178, %v785, 0
      %788 = vmatprep.subr.mxu0 0.0
      %789 = vmatpush1.msra.mxu0 %v417
      %790 = vmatprep.subr.mxu0 0.0
      %791 = vmatpush1.msra.mxu0 0.0
      %792 = vmatprep.subr.mxu0 0.0
      %793 = vmatpush1.msra.mxu0 0.0
      %794 = vmatprep.subr.mxu0 0.0
      %795 = vmatpush1.msra.mxu0 0.0
      %796 = vmatprep.subr.mxu0 0.0
      %797 = vmatpush1.msra.mxu0 0.0
      %798 = vmatprep.subr.mxu0 0.0
      %799 = vmatpush1.msra.mxu0 0.0
      %800 = vmatprep.subr.mxu0 0.0
      %801 = vmatpush1.msra.mxu0 0.0
      %802 = vmatprep.subr.mxu0 0.0
      %803 = vmatpush1.msra.mxu0 0.0
      %804 = vmatprep.subr.mxu0 0.0
      %805 = vmatpush1.msra.mxu0 0.0
      %806 = vmatprep.subr.mxu0 0.0
      %807 = vmatpush1.msra.mxu0 0.0
      %808 = vmatprep.subr.mxu0 0.0
      %809 = vmatpush1.msra.mxu0 0.0
      %810 = vmatprep.subr.mxu0 0.0
      %811 = vmatpush1.msra.mxu0 0.0
      %812 = vmatprep.subr.mxu0 0.0
      %813 = vmatpush1.msra.mxu0 0.0
      %814 = vmatprep.subr.mxu0 0.0
      %815 = vmatpush1.msra.mxu0 0.0
      %816 = vmatprep.subr.mxu0 0.0
      %817 = vmatpush1.msra.mxu0 0.0
      %818 = vmatprep.subr.mxu0 0.0
      %819 = vmatpush1.msra.mxu0 0.0
      %820 = vmatprep.subr.mxu0 0.0
      %821 = vmatpush1.msra.mxu0 0.0
      %822 = vmatprep.subr.mxu0 0.0
      %823 = vmatpush1.msra.mxu0 0.0
      %824 = vmatprep.subr.mxu0 0.0
      %825 = vmatpush1.msra.mxu0 0.0
      %826 = vmatprep.subr.mxu0 0.0
      %827 = vmatpush1.msra.mxu0 0.0
      %828 = vmatprep.subr.mxu0 0.0
      %829 = vmatpush1.msra.mxu0 0.0
      %830 = vmatprep.subr.mxu0 0.0
      %831 = vmatpush1.msra.mxu0 0.0
      %832 = vmatprep.subr.mxu0 0.0
      %833 = vmatpush1.msra.mxu0 0.0
      %834 = vmatprep.subr.mxu0 0.0
      %835 = vmatpush1.msra.mxu0 0.0
      %836 = vmatprep.subr.mxu0 0.0
      %837 = vmatpush1.msra.mxu0 0.0
      %838 = vmatprep.subr.mxu0 0.0
      %839 = vmatpush1.msra.mxu0 0.0
      %840 = vmatprep.subr.mxu0 0.0
      %841 = vmatpush1.msra.mxu0 0.0
      %842 = vmatprep.subr.mxu0 0.0
      %843 = vmatpush1.msra.mxu0 0.0
      %844 = vmatprep.subr.mxu0 0.0
      %845 = vmatpush1.msra.mxu0 0.0
      %846 = vmatprep.subr.mxu0 0.0
      %847 = vmatpush1.msra.mxu0 0.0
      %848 = vmatprep.subr.mxu0 0.0
      %849 = vmatpush1.msra.mxu0 0.0
      %850 = vmatprep.subr.mxu0 0.0
      %851 = vmatpush1.msra.mxu0 0.0
      %852 = vmatprep.mubr.f32.mxu0 0.0
      %853 = vmatmul.mubr.f32.gmra.mrb[0].mxu0 %v786
      %v854 = vpop.f32.mrb[0].mxu0
      %v855 = vadd.f32 0.0, %v854
      %v856 = vpop.f32.mrb[0].mxu0
      %857 = vdwg.mxu0
      %v858 = vadd.f32 %v783, %v855
      %859 = vrot.lane.b32.xlu0 %v496, 120
      %v860 = vpop.permute.xlu0 %859
      %v861 = vsel %vm178, %v860, 0
      %863 = vmatprep.subr.mxu0 0.0
      %864 = vmatpush1.msra.mxu0 %v500
      %865 = vmatprep.subr.mxu0 0.0
      %866 = vmatpush1.msra.mxu0 0.0
      %867 = vmatprep.subr.mxu0 0.0
      %868 = vmatpush1.msra.mxu0 0.0
      %869 = vmatprep.subr.mxu0 0.0
      %870 = vmatpush1.msra.mxu0 0.0
      %871 = vmatprep.subr.mxu0 0.0
      %872 = vmatpush1.msra.mxu0 0.0
      %873 = vmatprep.subr.mxu0 0.0
      %874 = vmatpush1.msra.mxu0 0.0
      %875 = vmatprep.subr.mxu0 0.0
      %876 = vmatpush1.msra.mxu0 0.0
      %877 = vmatprep.subr.mxu0 0.0
      %878 = vmatpush1.msra.mxu0 0.0
      %879 = vmatprep.subr.mxu0 0.0
      %880 = vmatpush1.msra.mxu0 0.0
      %881 = vmatprep.subr.mxu0 0.0
      %882 = vmatpush1.msra.mxu0 0.0
      %883 = vmatprep.subr.mxu0 0.0
      %884 = vmatpush1.msra.mxu0 0.0
      %885 = vmatprep.subr.mxu0 0.0
      %886 = vmatpush1.msra.mxu0 0.0
      %887 = vmatprep.subr.mxu0 0.0
      %888 = vmatpush1.msra.mxu0 0.0
      %889 = vmatprep.subr.mxu0 0.0
      %890 = vmatpush1.msra.mxu0 0.0
      %891 = vmatprep.subr.mxu0 0.0
      %892 = vmatpush1.msra.mxu0 0.0
      %893 = vmatprep.subr.mxu0 0.0
      %894 = vmatpush1.msra.mxu0 0.0
      %895 = vmatprep.subr.mxu0 0.0
      %896 = vmatpush1.msra.mxu0 0.0
      %897 = vmatprep.subr.mxu0 0.0
      %898 = vmatpush1.msra.mxu0 0.0
      %899 = vmatprep.subr.mxu0 0.0
      %900 = vmatpush1.msra.mxu0 0.0
      %901 = vmatprep.subr.mxu0 0.0
      %902 = vmatpush1.msra.mxu0 0.0
      %903 = vmatprep.subr.mxu0 0.0
      %904 = vmatpush1.msra.mxu0 0.0
      %905 = vmatprep.subr.mxu0 0.0
      %906 = vmatpush1.msra.mxu0 0.0
      %907 = vmatprep.subr.mxu0 0.0
      %908 = vmatpush1.msra.mxu0 0.0
      %909 = vmatprep.subr.mxu0 0.0
      %910 = vmatpush1.msra.mxu0 0.0
      %911 = vmatprep.subr.mxu0 0.0
      %912 = vmatpush1.msra.mxu0 0.0
      %913 = vmatprep.subr.mxu0 0.0
      %914 = vmatpush1.msra.mxu0 0.0
      %915 = vmatprep.subr.mxu0 0.0
      %916 = vmatpush1.msra.mxu0 0.0
      %917 = vmatprep.subr.mxu0 0.0
      %918 = vmatpush1.msra.mxu0 0.0
      %919 = vmatprep.subr.mxu0 0.0
      %920 = vmatpush1.msra.mxu0 0.0
      %921 = vmatprep.subr.mxu0 0.0
      %922 = vmatpush1.msra.mxu0 0.0
      %923 = vmatprep.subr.mxu0 0.0
      %924 = vmatpush1.msra.mxu0 0.0
      %925 = vmatprep.subr.mxu0 0.0
      %926 = vmatpush1.msra.mxu0 0.0
      %927 = vmatprep.mubr.f32.mxu0 0.0
      %928 = vmatmul.mubr.f32.gmra.mrb[0].mxu0 %v861
      %v929 = vpop.f32.mrb[0].mxu0
      %v930 = vadd.f32 0.0, %v929
      %v931 = vpop.f32.mrb[0].mxu0
      %932 = vdwg.mxu0
      %v933 = vadd.f32 %v858, %v930
      %v935 = vlaneseq
      %v936 = vshrl.u32 %v935, 7
      %v937 = vsub.s32 0, %v936
      %v938 = vrot.slane %v171, %v937
      %v940 = vadd.f32 %v572, %v938
      %v941 = vmax.f32 %v940, 0.0
      %v942 = vadd.f32 %v933, %v938
      %v943 = vmax.f32 %v942, 0.0
      %v944 = vmax.f32 %v941, %v943
      %vm945 = vcmask 261120
      %946 = vst.msk [vmem:[%s168] sm:$0xff] %vm945, %v944
      %p947 = scmp.lt.s32.totalorder %s14, 1
      %s948 = scalar_select %p947, %s14, 1
      %s949 = smul.addr %s948, 8
      %s950 = scalar_lea.vmem %s3, %s949
      // Predicated region
      $region33: #{transformer_model_forward.4} parent=31 // pred_check
        %p951 = pneg %p100
      $region34: #{transformer_model_forward.4} parent=31 // pred_check_branch
        %953 = sbr.rel (%p951) target = $region36
      $region35: #{transformer_model_forward.4} parent=31 // pred_region
        _
      $region36: #{transformer_model_forward.4} parent=31 // pred_fallthru
        _
    $region32: #{transformer_model_forward.4} parent=5 // pred_fallthru
      _
    %p954 = scmp.le.s32.totalorder 2, %s9
    // Predicated region
    $region37: #{transformer_model_forward.4} parent=5 // pred_check
      %p955 = pneg %p954
    $region38: #{transformer_model_forward.4} parent=5 // pred_check_branch
      %957 = sbr.rel (%p955) target = $region40
    $region39: #{transformer_model_forward.4} parent=5 // pred_region
      %s958 = ssub.s32 %s9, 2
      // Predicated region
      $region41: #{transformer_model_forward.4} parent=39 // pred_check
        %p959 = pneg %p106
      $region42: #{transformer_model_forward.4} parent=39 // pred_check_branch
        %961 = sbr.rel (%p959) target = $region44
      $region43: #{transformer_model_forward.4} parent=39 // pred_region
        %p962 = scmp.lt.s32.totalorder %s15, 1
        %s963 = scalar_select %p962, %s15, 1
        %s964 = smul.addr %s963, 8
        %s965 = scalar_lea.vmem %s3, %s964
      $region44: #{transformer_model_forward.4} parent=39 // pred_fallthru
        _
    $region40: #{transformer_model_forward.4} parent=5 // pred_fallthru
      _
  $region6: #{transformer_model_forward.4} parent=0 // loop_footer
    %s13 = sadd.s32 1, %s9
  $region7: #{transformer_model_forward.4} parent=0 // loop_footer_branch
    %8 = sbr.rel target = $region3
  $region8: #{transformer_model_forward.4} parent=0 // loop_exit
    _

// kernel: transformer_model_forward.5
$region0: #{transformer_model_forward.5}
  #allocation0 [shape = 'u32[]', space=smem, size = 0x4, offset = 0x4, fixed_abs, tag = 'smem constant byte address 0x4 - core index']
  #allocation1 [shape = 'u32[144,128]{1,0:T(1,128)}', space=vmem, size = 0x12000, scoped, tag = 'internal scratch']
  %s0 = inlined_call_operand.vmem [shape: f32[2,8,32], index: 0, kind: input, shape index: {}]
  %s1 = inlined_call_operand.vmem [shape: f32[32,96], index: 1, kind: input, shape index: {}]
  %s2 = inlined_call_operand.vmem [shape: f32[1,96], index: 2, kind: input, shape index: {}]
  %s3 = inlined_call_operand.vmem [shape: f32[32,32], index: 3, kind: input, shape index: {}]
  %s4 = inlined_call_operand.vmem [shape: f32[1,32], index: 4, kind: input, shape index: {}]
  %s5 = inlined_call_operand.vmem [shape: f32[1,32], index: 5, kind: input, shape index: {}]
  %s6 = inlined_call_operand.vmem [shape: f32[1,32], index: 6, kind: input, shape index: {}]
  %s7 = inlined_call_operand.vmem [shape: f32[32,64], index: 7, kind: input, shape index: {}]
  %s8 = inlined_call_operand.vmem [shape: f32[1,64], index: 8, kind: input, shape index: {}]
  %s9 = inlined_call_operand.vmem [shape: f32[64,32], index: 9, kind: input, shape index: {}]
  %s10 = inlined_call_operand.vmem [shape: f32[1,32], index: 10, kind: input, shape index: {}]
  %s11 = inlined_call_operand.vmem [shape: f32[1,32], index: 11, kind: input, shape index: {}]
  %s12 = inlined_call_operand.vmem [shape: f32[1,32], index: 12, kind: input, shape index: {}]
  %s13 = inlined_call_operand.vmem [shape: f32[2,8,32], index: 13, kind: output, shape index: {}]
  %s14 = sld [smem:[#allocation0]]
  $region85: #{transformer_model_forward.5} parent=0
    _
  %s16 = ssub.s32 1, %s14
  %s17 = scalar_select 0, %s16, %s14
  loop: start=0, step=1, limit=4
  $region2: #{transformer_model_forward.5} parent=0 // loop_pre_header
    _
  $region3: #{transformer_model_forward.5} parent=0 // loop_header
    %s19 = sphi 0, %s23
    %p20 = scmp.ge.s32.totalorder %s19, 4
    %s29 = sphi 0, %s31
    %s32 = sphi 0, %s29
    %s33 = sphi 0, %s32
    %s49 = sphi 0, %s33
    %s53 = sphi 0, %s53
    %s55 = sphi 0, %s53
    %s56 = sphi 0, %s55
    %s70 = sphi 0, %s56
    %s74 = sphi 0, %s74
    %s76 = sphi 0, %s74
    %s77 = sphi 0, %s76
    %s91 = sphi 0, %s77
    %s95 = sphi 0, %s95
    %s97 = sphi 0, %s95
    %s98 = sphi 0, %s97
    %s112 = sphi 0, %s98
    %s116 = sphi 0, %s116
    %s118 = sphi 0, %s116
    %s119 = sphi 0, %s118
    %s133 = sphi 0, %s119
    %s137 = sphi 0, %s137
    %s139 = sphi 0, %s137
    %s140 = sphi 0, %s139
    %s154 = sphi 0, %s140
    %s158 = sphi 0, %s158
    %s160 = sphi 0, %s158
    %s161 = sphi 0, %s160
    %s175 = sphi 0, %s161
    %s179 = sphi 0, %s179
    %s181 = sphi 0, %s179
    %s182 = sphi 0, %s181
    %s196 = sphi 0, %s182
    %s200 = sphi 0, %s200
    %s202 = sphi 0, %s200
    %s203 = sphi 0, %s202
    %s217 = sphi 0, %s203
    %s221 = sphi 0, %s221
    %s223 = sphi 0, %s221
    %s224 = sphi 0, %s223
    %s238 = sphi 0, %s224
    %s242 = sphi 0, %s242
    %s244 = sphi 0, %s242
    %s245 = sphi 0, %s244
    %s259 = sphi 0, %s245
    %s263 = sphi 0, %s263
    %s265 = sphi 0, %s263
    %s266 = sphi 0, %s265
    %s280 = sphi 0, %s266
    %s284 = sphi 0, %s284
    %s286 = sphi 0, %s284
    %s287 = sphi 0, %s286
    %s301 = sphi 0, %s287
    %s307 = sphi 0, %s309
    %s310 = sphi 0, %s307
    %s311 = sphi 0, %s310
    %s327 = sphi 0, %s311
  $region4: #{transformer_model_forward.5} parent=0 // loop_header_branch
    %22 = sbr.rel (%p20) target = $region8
  $region5: #{transformer_model_forward.5} parent=0 // loop_body
    %s24 = ssub.s32 %s19, 1
    %s25 = ssub.s32 %s19, 2
    %s26 = sadd.s32 %s19, 1
    %s27 = ssub.s32 %s19, %s26
    %p28 = scmp.eq.s32.totalorder %s27, 0
    %s30 = sadd.s32 %s29, 1
    %s31 = scalar_select %p28, %s29, %s30
    %p34 = pneg %p28
    %p35 = scmp.eq.s32.totalorder %s19, 1
    %p36 = por %p34, %p35
    %p37 = scmp.ne.s32.totalorder %s29, %s32
    %p38 = scmp.eq.s32.totalorder %s19, 0
    %p39 = por %p37, %p38
    %p40 = scmp.ne.s32.totalorder %s29, %s32
    %p41 = scmp.eq.s32.totalorder %s24, 1
    %p42 = por %p40, %p41
    %p43 = scmp.ne.s32.totalorder %s32, %s33
    %p44 = scmp.eq.s32.totalorder %s24, 0
    %p45 = por %p43, %p44
    %p46 = scmp.ne.s32.totalorder %s32, %s33
    %p47 = scmp.eq.s32.totalorder %s25, 1
    %p48 = por %p46, %p47
    %p50 = scmp.ne.s32.totalorder %s33, %s49
    %p51 = scmp.eq.s32.totalorder %s25, 0
    %p52 = por %p50, %p51
    %s54 = sadd.s32 %s53, 1
    %p57 = scmp.eq.s32.totalorder %s19, 1
    %p58 = scmp.ne.s32.totalorder %s53, %s55
    %p59 = scmp.eq.s32.totalorder %s19, 0
    %p60 = por %p58, %p59
    %p61 = scmp.ne.s32.totalorder %s53, %s55
    %p62 = scmp.eq.s32.totalorder %s24, 1
    %p63 = por %p61, %p62
    %p64 = scmp.ne.s32.totalorder %s55, %s56
    %p65 = scmp.eq.s32.totalorder %s24, 0
    %p66 = por %p64, %p65
    %p67 = scmp.ne.s32.totalorder %s55, %s56
    %p68 = scmp.eq.s32.totalorder %s25, 1
    %p69 = por %p67, %p68
    %p71 = scmp.ne.s32.totalorder %s56, %s70
    %p72 = scmp.eq.s32.totalorder %s25, 0
    %p73 = por %p71, %p72
    %s75 = sadd.s32 %s74, 1
    %p78 = scmp.eq.s32.totalorder %s19, 1
    %p79 = scmp.ne.s32.totalorder %s74, %s76
    %p80 = scmp.eq.s32.totalorder %s19, 0
    %p81 = por %p79, %p80
    %p82 = scmp.ne.s32.totalorder %s74, %s76
    %p83 = scmp.eq.s32.totalorder %s24, 1
    %p84 = por %p82, %p83
    %p85 = scmp.ne.s32.totalorder %s76, %s77
    %p86 = scmp.eq.s32.totalorder %s24, 0
    %p87 = por %p85, %p86
    %p88 = scmp.ne.s32.totalorder %s76, %s77
    %p89 = scmp.eq.s32.totalorder %s25, 1
    %p90 = por %p88, %p89
    %p92 = scmp.ne.s32.totalorder %s77, %s91
    %p93 = scmp.eq.s32.totalorder %s25, 0
    %p94 = por %p92, %p93
    %s96 = sadd.s32 %s95, 1
    %p99 = scmp.eq.s32.totalorder %s19, 1
    %p100 = scmp.ne.s32.totalorder %s95, %s97
    %p101 = scmp.eq.s32.totalorder %s19, 0
    %p102 = por %p100, %p101
    %p103 = scmp.ne.s32.totalorder %s95, %s97
    %p104 = scmp.eq.s32.totalorder %s24, 1
    %p105 = por %p103, %p104
    %p106 = scmp.ne.s32.totalorder %s97, %s98
    %p107 = scmp.eq.s32.totalorder %s24, 0
    %p108 = por %p106, %p107
    %p109 = scmp.ne.s32.totalorder %s97, %s98
    %p110 = scmp.eq.s32.totalorder %s25, 1
    %p111 = por %p109, %p110
    %p113 = scmp.ne.s32.totalorder %s98, %s112
    %p114 = scmp.eq.s32.totalorder %s25, 0
    %p115 = por %p113, %p114
    %s117 = sadd.s32 %s116, 1
    %p120 = scmp.eq.s32.totalorder %s19, 1
    %p121 = scmp.ne.s32.totalorder %s116, %s118
    %p122 = scmp.eq.s32.totalorder %s19, 0
    %p123 = por %p121, %p122
    %p124 = scmp.ne.s32.totalorder %s116, %s118
    %p125 = scmp.eq.s32.totalorder %s24, 1
    %p126 = por %p124, %p125
    %p127 = scmp.ne.s32.totalorder %s118, %s119
    %p128 = scmp.eq.s32.totalorder %s24, 0
    %p129 = por %p127, %p128
    %p130 = scmp.ne.s32.totalorder %s118, %s119
    %p131 = scmp.eq.s32.totalorder %s25, 1
    %p132 = por %p130, %p131
    %p134 = scmp.ne.s32.totalorder %s119, %s133
    %p135 = scmp.eq.s32.totalorder %s25, 0
    %p136 = por %p134, %p135
    %s138 = sadd.s32 %s137, 1
    %p141 = scmp.eq.s32.totalorder %s19, 1
    %p142 = scmp.ne.s32.totalorder %s137, %s139
    %p143 = scmp.eq.s32.totalorder %s19, 0
    %p144 = por %p142, %p143
    %p145 = scmp.ne.s32.totalorder %s137, %s139
    %p146 = scmp.eq.s32.totalorder %s24, 1
    %p147 = por %p145, %p146
    %p148 = scmp.ne.s32.totalorder %s139, %s140
    %p149 = scmp.eq.s32.totalorder %s24, 0
    %p150 = por %p148, %p149
    %p151 = scmp.ne.s32.totalorder %s139, %s140
    %p152 = scmp.eq.s32.totalorder %s25, 1
    %p153 = por %p151, %p152
    %p155 = scmp.ne.s32.totalorder %s140, %s154
    %p156 = scmp.eq.s32.totalorder %s25, 0
    %p157 = por %p155, %p156
    %s159 = sadd.s32 %s158, 1
    %p162 = scmp.eq.s32.totalorder %s19, 1
    %p163 = scmp.ne.s32.totalorder %s158, %s160
    %p164 = scmp.eq.s32.totalorder %s19, 0
    %p165 = por %p163, %p164
    %p166 = scmp.ne.s32.totalorder %s158, %s160
    %p167 = scmp.eq.s32.totalorder %s24, 1
    %p168 = por %p166, %p167
    %p169 = scmp.ne.s32.totalorder %s160, %s161
    %p170 = scmp.eq.s32.totalorder %s24, 0
    %p171 = por %p169, %p170
    %p172 = scmp.ne.s32.totalorder %s160, %s161
    %p173 = scmp.eq.s32.totalorder %s25, 1
    %p174 = por %p172, %p173
    %p176 = scmp.ne.s32.totalorder %s161, %s175
    %p177 = scmp.eq.s32.totalorder %s25, 0
    %p178 = por %p176, %p177
    %s180 = sadd.s32 %s179, 1
    %p183 = scmp.eq.s32.totalorder %s19, 1
    %p184 = scmp.ne.s32.totalorder %s179, %s181
    %p185 = scmp.eq.s32.totalorder %s19, 0
    %p186 = por %p184, %p185
    %p187 = scmp.ne.s32.totalorder %s179, %s181
    %p188 = scmp.eq.s32.totalorder %s24, 1
    %p189 = por %p187, %p188
    %p190 = scmp.ne.s32.totalorder %s181, %s182
    %p191 = scmp.eq.s32.totalorder %s24, 0
    %p192 = por %p190, %p191
    %p193 = scmp.ne.s32.totalorder %s181, %s182
    %p194 = scmp.eq.s32.totalorder %s25, 1
    %p195 = por %p193, %p194
    %p197 = scmp.ne.s32.totalorder %s182, %s196
    %p198 = scmp.eq.s32.totalorder %s25, 0
    %p199 = por %p197, %p198
    %s201 = sadd.s32 %s200, 1
    %p204 = scmp.eq.s32.totalorder %s19, 1
    %p205 = scmp.ne.s32.totalorder %s200, %s202
    %p206 = scmp.eq.s32.totalorder %s19, 0
    %p207 = por %p205, %p206
    %p208 = scmp.ne.s32.totalorder %s200, %s202
    %p209 = scmp.eq.s32.totalorder %s24, 1
    %p210 = por %p208, %p209
    %p211 = scmp.ne.s32.totalorder %s202, %s203
    %p212 = scmp.eq.s32.totalorder %s24, 0
    %p213 = por %p211, %p212
    %p214 = scmp.ne.s32.totalorder %s202, %s203
    %p215 = scmp.eq.s32.totalorder %s25, 1
    %p216 = por %p214, %p215
    %p218 = scmp.ne.s32.totalorder %s203, %s217
    %p219 = scmp.eq.s32.totalorder %s25, 0
    %p220 = por %p218, %p219
    %s222 = sadd.s32 %s221, 1
    %p225 = scmp.eq.s32.totalorder %s19, 1
    %p226 = scmp.ne.s32.totalorder %s221, %s223
    %p227 = scmp.eq.s32.totalorder %s19, 0
    %p228 = por %p226, %p227
    %p229 = scmp.ne.s32.totalorder %s221, %s223
    %p230 = scmp.eq.s32.totalorder %s24, 1
    %p231 = por %p229, %p230
    %p232 = scmp.ne.s32.totalorder %s223, %s224
    %p233 = scmp.eq.s32.totalorder %s24, 0
    %p234 = por %p232, %p233
    %p235 = scmp.ne.s32.totalorder %s223, %s224
    %p236 = scmp.eq.s32.totalorder %s25, 1
    %p237 = por %p235, %p236
    %p239 = scmp.ne.s32.totalorder %s224, %s238
    %p240 = scmp.eq.s32.totalorder %s25, 0
    %p241 = por %p239, %p240
    %s243 = sadd.s32 %s242, 1
    %p246 = scmp.eq.s32.totalorder %s19, 1
    %p247 = scmp.ne.s32.totalorder %s242, %s244
    %p248 = scmp.eq.s32.totalorder %s19, 0
    %p249 = por %p247, %p248
    %p250 = scmp.ne.s32.totalorder %s242, %s244
    %p251 = scmp.eq.s32.totalorder %s24, 1
    %p252 = por %p250, %p251
    %p253 = scmp.ne.s32.totalorder %s244, %s245
    %p254 = scmp.eq.s32.totalorder %s24, 0
    %p255 = por %p253, %p254
    %p256 = scmp.ne.s32.totalorder %s244, %s245
    %p257 = scmp.eq.s32.totalorder %s25, 1
    %p258 = por %p256, %p257
    %p260 = scmp.ne.s32.totalorder %s245, %s259
    %p261 = scmp.eq.s32.totalorder %s25, 0
    %p262 = por %p260, %p261
    %s264 = sadd.s32 %s263, 1
    %p267 = scmp.eq.s32.totalorder %s19, 1
    %p268 = scmp.ne.s32.totalorder %s263, %s265
    %p269 = scmp.eq.s32.totalorder %s19, 0
    %p270 = por %p268, %p269
    %p271 = scmp.ne.s32.totalorder %s263, %s265
    %p272 = scmp.eq.s32.totalorder %s24, 1
    %p273 = por %p271, %p272
    %p274 = scmp.ne.s32.totalorder %s265, %s266
    %p275 = scmp.eq.s32.totalorder %s24, 0
    %p276 = por %p274, %p275
    %p277 = scmp.ne.s32.totalorder %s265, %s266
    %p278 = scmp.eq.s32.totalorder %s25, 1
    %p279 = por %p277, %p278
    %p281 = scmp.ne.s32.totalorder %s266, %s280
    %p282 = scmp.eq.s32.totalorder %s25, 0
    %p283 = por %p281, %p282
    %s285 = sadd.s32 %s284, 1
    %p288 = scmp.eq.s32.totalorder %s19, 1
    %p289 = scmp.ne.s32.totalorder %s284, %s286
    %p290 = scmp.eq.s32.totalorder %s19, 0
    %p291 = por %p289, %p290
    %p292 = scmp.ne.s32.totalorder %s284, %s286
    %p293 = scmp.eq.s32.totalorder %s24, 1
    %p294 = por %p292, %p293
    %p295 = scmp.ne.s32.totalorder %s286, %s287
    %p296 = scmp.eq.s32.totalorder %s24, 0
    %p297 = por %p295, %p296
    %p298 = scmp.ne.s32.totalorder %s286, %s287
    %p299 = scmp.eq.s32.totalorder %s25, 1
    %p300 = por %p298, %p299
    %p302 = scmp.ne.s32.totalorder %s287, %s301
    %p303 = scmp.eq.s32.totalorder %s25, 0
    %p304 = por %p302, %p303
    %s305 = ssub.s32 %s19, %s26
    %p306 = scmp.eq.s32.totalorder %s305, 0
    %s308 = sadd.s32 %s307, 1
    %s309 = scalar_select %p306, %s307, %s308
    %p312 = pneg %p306
    %p313 = scmp.eq.s32.totalorder %s19, 1
    %p314 = por %p312, %p313
    %p315 = scmp.ne.s32.totalorder %s307, %s310
    %p316 = scmp.eq.s32.totalorder %s19, 0
    %p317 = por %p315, %p316
    %p318 = scmp.ne.s32.totalorder %s307, %s310
    %p319 = scmp.eq.s32.totalorder %s24, 1
    %p320 = por %p318, %p319
    %p321 = scmp.ne.s32.totalorder %s310, %s311
    %p322 = scmp.eq.s32.totalorder %s24, 0
    %p323 = por %p321, %p322
    %p324 = scmp.ne.s32.totalorder %s310, %s311
    %p325 = scmp.eq.s32.totalorder %s25, 1
    %p326 = por %p324, %p325
    %p328 = scmp.ne.s32.totalorder %s311, %s327
    %p329 = scmp.eq.s32.totalorder %s25, 0
    %p330 = por %p328, %p329
    %p331 = scmp.le.s32.totalorder 1, %s19
    %p332 = scmp.lt.s32.totalorder %s19, 3
    %p333 = pnand %p331, %p332
    %p334 = pneg %p333
    // Predicated region
    $region9: #{transformer_model_forward.5} parent=5 // pred_check
      _
    $region10: #{transformer_model_forward.5} parent=5 // pred_check_branch
      %336 = sbr.rel (%p333) target = $region12
    $region11: #{transformer_model_forward.5} parent=5 // pred_region
      %s337 = ssub.s32 %s19, 1
      // Predicated region
      $region13: #{transformer_model_forward.5} parent=11 // pred_check
        %p338 = pneg %p66
      $region14: #{transformer_model_forward.5} parent=11 // pred_check_branch
        %340 = sbr.rel (%p338) target = $region16
      $region15: #{transformer_model_forward.5} parent=11 // pred_region
        _
      $region16: #{transformer_model_forward.5} parent=11 // pred_fallthru
        _
      // Predicated region
      $region17: #{transformer_model_forward.5} parent=11 // pred_check
        %p341 = pneg %p87
      $region18: #{transformer_model_forward.5} parent=11 // pred_check_branch
        %343 = sbr.rel (%p341) target = $region20
      $region19: #{transformer_model_forward.5} parent=11 // pred_region
        _
      $region20: #{transformer_model_forward.5} parent=11 // pred_fallthru
        _
      // Predicated region
      $region21: #{transformer_model_forward.5} parent=11 // pred_check
        %p344 = pneg %p108
      $region22: #{transformer_model_forward.5} parent=11 // pred_check_branch
        %346 = sbr.rel (%p344) target = $region24
      $region23: #{transformer_model_forward.5} parent=11 // pred_region
        _
      $region24: #{transformer_model_forward.5} parent=11 // pred_fallthru
        _
      // Predicated region
      $region25: #{transformer_model_forward.5} parent=11 // pred_check
        %p347 = pneg %p129
      $region26: #{transformer_model_forward.5} parent=11 // pred_check_branch
        %349 = sbr.rel (%p347) target = $region28
      $region27: #{transformer_model_forward.5} parent=11 // pred_region
        _
      $region28: #{transformer_model_forward.5} parent=11 // pred_fallthru
        _
      // Predicated region
      $region29: #{transformer_model_forward.5} parent=11 // pred_check
        %p350 = pneg %p150
      $region30: #{transformer_model_forward.5} parent=11 // pred_check_branch
        %352 = sbr.rel (%p350) target = $region32
      $region31: #{transformer_model_forward.5} parent=11 // pred_region
        _
      $region32: #{transformer_model_forward.5} parent=11 // pred_fallthru
        _
      // Predicated region
      $region33: #{transformer_model_forward.5} parent=11 // pred_check
        %p353 = pneg %p171
      $region34: #{transformer_model_forward.5} parent=11 // pred_check_branch
        %355 = sbr.rel (%p353) target = $region36
      $region35: #{transformer_model_forward.5} parent=11 // pred_region
        _
      $region36: #{transformer_model_forward.5} parent=11 // pred_fallthru
        _
      // Predicated region
      $region37: #{transformer_model_forward.5} parent=11 // pred_check
        %p356 = pneg %p192
      $region38: #{transformer_model_forward.5} parent=11 // pred_check_branch
        %358 = sbr.rel (%p356) target = $region40
      $region39: #{transformer_model_forward.5} parent=11 // pred_region
        _
      $region40: #{transformer_model_forward.5} parent=11 // pred_fallthru
        _
      // Predicated region
      $region41: #{transformer_model_forward.5} parent=11 // pred_check
        %p359 = pneg %p213
      $region42: #{transformer_model_forward.5} parent=11 // pred_check_branch
        %361 = sbr.rel (%p359) target = $region44
      $region43: #{transformer_model_forward.5} parent=11 // pred_region
        _
      $region44: #{transformer_model_forward.5} parent=11 // pred_fallthru
        _
      // Predicated region
      $region45: #{transformer_model_forward.5} parent=11 // pred_check
        %p362 = pneg %p234
      $region46: #{transformer_model_forward.5} parent=11 // pred_check_branch
        %364 = sbr.rel (%p362) target = $region48
      $region47: #{transformer_model_forward.5} parent=11 // pred_region
        _
      $region48: #{transformer_model_forward.5} parent=11 // pred_fallthru
        _
      // Predicated region
      $region49: #{transformer_model_forward.5} parent=11 // pred_check
        %p365 = pneg %p255
      $region50: #{transformer_model_forward.5} parent=11 // pred_check_branch
        %367 = sbr.rel (%p365) target = $region52
      $region51: #{transformer_model_forward.5} parent=11 // pred_region
        _
      $region52: #{transformer_model_forward.5} parent=11 // pred_fallthru
        _
      // Predicated region
      $region53: #{transformer_model_forward.5} parent=11 // pred_check
        %p368 = pneg %p276
      $region54: #{transformer_model_forward.5} parent=11 // pred_check_branch
        %370 = sbr.rel (%p368) target = $region56
      $region55: #{transformer_model_forward.5} parent=11 // pred_region
        _
      $region56: #{transformer_model_forward.5} parent=11 // pred_fallthru
        _
      // Predicated region
      $region57: #{transformer_model_forward.5} parent=11 // pred_check
        %p371 = pneg %p297
      $region58: #{transformer_model_forward.5} parent=11 // pred_check_branch
        %373 = sbr.rel (%p371) target = $region60
      $region59: #{transformer_model_forward.5} parent=11 // pred_region
        _
      $region60: #{transformer_model_forward.5} parent=11 // pred_fallthru
        _
    $region12: #{transformer_model_forward.5} parent=5 // pred_fallthru
      _
    %p374 = scmp.lt.s32.totalorder %s19, 2
    // Predicated region
    $region61: #{transformer_model_forward.5} parent=5 // pred_check
      %p375 = pneg %p374
    $region62: #{transformer_model_forward.5} parent=5 // pred_check_branch
      %377 = sbr.rel (%p375) target = $region64
    $region63: #{transformer_model_forward.5} parent=5 // pred_region
      // Predicated region
      $region65: #{transformer_model_forward.5} parent=63 // pred_check
        %p378 = pneg %p39
      $region66: #{transformer_model_forward.5} parent=63 // pred_check_branch
        %380 = sbr.rel (%p378) target = $region68
      $region67: #{transformer_model_forward.5} parent=63 // pred_region
        %p381 = scmp.lt.s32.totalorder %s19, 1
        %s382 = scalar_select %p381, %s19, 1
        %s383 = smul.addr %s382, 8
        %s384 = scalar_lea.vmem %s0, %s383
      $region68: #{transformer_model_forward.5} parent=63 // pred_fallthru
        _
    $region64: #{transformer_model_forward.5} parent=5 // pred_fallthru
      _
    %p385 = scmp.le.s32.totalorder 1, %s19
    %p386 = scmp.lt.s32.totalorder %s19, 3
    %p387 = pnand %p385, %p386
    %p388 = pneg %p387
    // Predicated region
    $region69: #{transformer_model_forward.5} parent=5 // pred_check
      _
    $region70: #{transformer_model_forward.5} parent=5 // pred_check_branch
      %390 = sbr.rel (%p387) target = $region72
    $region71: #{transformer_model_forward.5} parent=5 // pred_region
      %s391 = ssub.s32 %s19, 1
      %p392 = scmp.lt.s32.totalorder %s24, 1
      %s393 = scalar_select %p392, %s24, 1
      %s394 = smul.addr %s393, 8
      %s395 = scalar_lea.vmem %s0, %s394
      %p396 = pneg %p45
      %p397 = pneg %p42
      %p398 = pneg %p66
      %p399 = pneg %p63
      %p400 = pneg %p87
      %p401 = pneg %p84
      %p402 = pneg %p108
      %p403 = pneg %p105
      %p404 = pneg %p129
      %p405 = pneg %p126
      %p406 = pneg %p150
      %p407 = pneg %p147
      %p408 = pneg %p171
      %p409 = pneg %p168
      %p410 = pneg %p192
      %p411 = pneg %p189
      %p412 = pneg %p213
      %p413 = pneg %p210
      %p414 = pneg %p234
      %p415 = pneg %p231
      %p416 = pneg %p255
      %p417 = pneg %p252
      %p418 = pneg %p276
      %p419 = pneg %p273
      %p420 = pneg %p297
      %p421 = pneg %p294
      %p422 = pneg %p323
      %p423 = pneg %p320
      %p424 = scmp.lt.s32.totalorder %s24, 1
      %s425 = scalar_select %p424, %s24, 1
      %s426 = smul.addr %s425, 8
      %s427 = scalar_lea.vmem %s13, %s426
      %p428 = scmp.lt.s32.totalorder %s24, 1
      %s429 = scalar_select %p428, %s24, 1
      %s430 = smul.addr %s429, 8
      %s431 = scalar_lea.vmem %s0, %s430
      %p432 = scmp.lt.s32.totalorder %s24, 1
      %s433 = scalar_select %p432, %s24, 1
      %s434 = smul.addr %s433, 8
      %s435 = scalar_lea.vmem %s13, %s434
      %v436 = vld [vmem:[%s431] sm:$0xff]
      %v437 = vld [vmem:[%s1] sm:$0xff]
      %v438 = vld [vmem:[%s1 + $0x8] sm:$0xff]
      %v439 = vld [vmem:[%s1 + $0x10] sm:$0xff]
      %v440 = vld [vmem:[%s1 + $0x18] sm:$0xff]
      %v441 = vld [vmem:[%s2] sm:$0x1]
      %v443 = vlaneseq
      %v444 = vshrl.u32 %v443, 7
      %v445 = vsub.s32 0, %v444
      %v446 = vrot.slane %v441, %v445
      %vm448 = vcmask 261120
      %v450 = vsel %vm448, %v436, 0
      %452 = vmatprep.subr.mxu0 0.0
      %453 = vmatpush1.msra.mxu0 %v437
      %454 = vmatprep.subr.mxu0 0.0
      %455 = vmatpush1.msra.mxu0 %v438
      %456 = vmatprep.subr.mxu0 0.0
      %457 = vmatpush1.msra.mxu0 %v439
      %458 = vmatprep.subr.mxu0 0.0
      %459 = vmatpush1.msra.mxu0 %v440
      %460 = vmatprep.subr.mxu0 0.0
      %461 = vmatpush1.msra.mxu0 0.0
      %462 = vmatprep.subr.mxu0 0.0
      %463 = vmatpush1.msra.mxu0 0.0
      %464 = vmatprep.subr.mxu0 0.0
      %465 = vmatpush1.msra.mxu0 0.0
      %466 = vmatprep.subr.mxu0 0.0
      %467 = vmatpush1.msra.mxu0 0.0
      %468 = vmatprep.subr.mxu0 0.0
      %469 = vmatpush1.msra.mxu0 0.0
      %470 = vmatprep.subr.mxu0 0.0
      %471 = vmatpush1.msra.mxu0 0.0
      %472 = vmatprep.subr.mxu0 0.0
      %473 = vmatpush1.msra.mxu0 0.0
      %474 = vmatprep.subr.mxu0 0.0
      %475 = vmatpush1.msra.mxu0 0.0
      %476 = vmatprep.subr.mxu0 0.0
      %477 = vmatpush1.msra.mxu0 0.0
      %478 = vmatprep.subr.mxu0 0.0
      %479 = vmatpush1.msra.mxu0 0.0
      %480 = vmatprep.subr.mxu0 0.0
      %481 = vmatpush1.msra.mxu0 0.0
      %482 = vmatprep.subr.mxu0 0.0
      %483 = vmatpush1.msra.mxu0 0.0
      %484 = vmatprep.subr.mxu0 0.0
      %485 = vmatpush1.msra.mxu0 0.0
      %486 = vmatprep.subr.mxu0 0.0
      %487 = vmatpush1.msra.mxu0 0.0
      %488 = vmatprep.subr.mxu0 0.0
      %489 = vmatpush1.msra.mxu0 0.0
      %490 = vmatprep.subr.mxu0 0.0
      %491 = vmatpush1.msra.mxu0 0.0
      %492 = vmatprep.subr.mxu0 0.0
      %493 = vmatpush1.msra.mxu0 0.0
      %494 = vmatprep.subr.mxu0 0.0
      %495 = vmatpush1.msra.mxu0 0.0
      %496 = vmatprep.subr.mxu0 0.0
      %497 = vmatpush1.msra.mxu0 0.0
      %498 = vmatprep.subr.mxu0 0.0
      %499 = vmatpush1.msra.mxu0 0.0
      %500 = vmatprep.subr.mxu0 0.0
      %501 = vmatpush1.msra.mxu0 0.0
      %502 = vmatprep.subr.mxu0 0.0
      %503 = vmatpush1.msra.mxu0 0.0
      %504 = vmatprep.subr.mxu0 0.0
      %505 = vmatpush1.msra.mxu0 0.0
      %506 = vmatprep.subr.mxu0 0.0
      %507 = vmatpush1.msra.mxu0 0.0
      %508 = vmatprep.subr.mxu0 0.0
      %509 = vmatpush1.msra.mxu0 0.0
      %510 = vmatprep.subr.mxu0 0.0
      %511 = vmatpush1.msra.mxu0 0.0
      %512 = vmatprep.subr.mxu0 0.0
      %513 = vmatpush1.msra.mxu0 0.0
      %514 = vmatprep.subr.mxu0 0.0
      %515 = vmatpush1.msra.mxu0 0.0
      %516 = vmatprep.mubr.f32.mxu0 0.0
      %517 = vmatmul.mubr.f32.gmra.mrb[0].mxu0 %v450
      %v518 = vpop.f32.mrb[0].mxu0
      %v519 = vadd.f32 %v446, %v518
      %v520 = vpop.f32.mrb[0].mxu0
      %521 = vdwg.mxu0
      %523 = vrot.lane.b32.xlu0 %v519, 96
      %v524 = vpop.permute.xlu0 %523
      %vm525 = vcmask 64512
      %v526 = vsel %vm525, %v519, 0
      %v528 = vsel %vm525, %v524, 0
      %530 = vmatprep.subr.mxu0 0.0
      %531 = vmatpush1.xpose.msra.mxu0 %v528
      %532 = vmatprep.subr.mxu0 0.0
      %533 = vmatpush1.xpose.msra.mxu0 0.0
      %534 = vmatprep.subr.mxu0 0.0
      %535 = vmatpush1.xpose.msra.mxu0 0.0
      %536 = vmatprep.subr.mxu0 0.0
      %537 = vmatpush1.xpose.msra.mxu0 0.0
      %538 = vmatprep.subr.mxu0 0.0
      %539 = vmatpush1.xpose.msra.mxu0 0.0
      %540 = vmatprep.subr.mxu0 0.0
      %541 = vmatpush1.xpose.msra.mxu0 0.0
      %542 = vmatprep.subr.mxu0 0.0
      %543 = vmatpush1.xpose.msra.mxu0 0.0
      %544 = vmatprep.subr.mxu0 0.0
      %545 = vmatpush1.xpose.msra.mxu0 0.0
      %546 = vmatprep.subr.mxu0 0.0
      %547 = vmatpush1.xpose.msra.mxu0 0.0
      %548 = vmatprep.subr.mxu0 0.0
      %549 = vmatpush1.xpose.msra.mxu0 0.0
      %550 = vmatprep.subr.mxu0 0.0
      %551 = vmatpush1.xpose.msra.mxu0 0.0
      %552 = vmatprep.subr.mxu0 0.0
      %553 = vmatpush1.xpose.msra.mxu0 0.0
      %554 = vmatprep.subr.mxu0 0.0
      %555 = vmatpush1.xpose.msra.mxu0 0.0
      %556 = vmatprep.subr.mxu0 0.0
      %557 = vmatpush1.xpose.msra.mxu0 0.0
      %558 = vmatprep.subr.mxu0 0.0
      %559 = vmatpush1.xpose.msra.mxu0 0.0
      %560 = vmatprep.subr.mxu0 0.0
      %561 = vmatpush1.xpose.msra.mxu0 0.0
      %562 = vmatprep.subr.mxu0 0.0
      %563 = vmatpush1.xpose.msra.mxu0 0.0
      %564 = vmatprep.subr.mxu0 0.0
      %565 = vmatpush1.xpose.msra.mxu0 0.0
      %566 = vmatprep.subr.mxu0 0.0
      %567 = vmatpush1.xpose.msra.mxu0 0.0
      %568 = vmatprep.subr.mxu0 0.0
      %569 = vmatpush1.xpose.msra.mxu0 0.0
      %570 = vmatprep.subr.mxu0 0.0
      %571 = vmatpush1.xpose.msra.mxu0 0.0
      %572 = vmatprep.subr.mxu0 0.0
      %573 = vmatpush1.xpose.msra.mxu0 0.0
      %574 = vmatprep.subr.mxu0 0.0
      %575 = vmatpush1.xpose.msra.mxu0 0.0
      %576 = vmatprep.subr.mxu0 0.0
      %577 = vmatpush1.xpose.msra.mxu0 0.0
      %578 = vmatprep.subr.mxu0 0.0
      %579 = vmatpush1.xpose.msra.mxu0 0.0
      %580 = vmatprep.subr.mxu0 0.0
      %581 = vmatpush1.xpose.msra.mxu0 0.0
      %582 = vmatprep.subr.mxu0 0.0
      %583 = vmatpush1.xpose.msra.mxu0 0.0
      %584 = vmatprep.subr.mxu0 0.0
      %585 = vmatpush1.xpose.msra.mxu0 0.0
      %586 = vmatprep.subr.mxu0 0.0
      %587 = vmatpush1.xpose.msra.mxu0 0.0
      %588 = vmatprep.subr.mxu0 0.0
      %589 = vmatpush1.xpose.msra.mxu0 0.0
      %590 = vmatprep.subr.mxu0 0.0
      %591 = vmatpush1.xpose.msra.mxu0 0.0
      %592 = vmatprep.subr.mxu0 0.0
      %593 = vmatpush1.xpose.msra.mxu0 0.0
      %594 = vmatprep.mubr.f32.mxu0 0.0
      %595 = vmatmul.mubr.f32.gmra.mrb[0].mxu0 %v526
      %v596 = vpop.f32.mrb[0].mxu0
      %v597 = vadd.f32 0.0, %v596
      %v598 = vpop.f32.mrb[0].mxu0
      %599 = vdwg.mxu0
      %v600 = vsel %vm525, %v597, -inf
      %601 = vmax.xlane.f32.xlu0 %v600
      %v602 = vpop.xlane.xlu0 %601
      %v603 = vsub.f32 %v597, %v602
      %v604 = vmul.f32 %v603, 1.442695
      %v605 = vpow.pop %v604
      %v606 = vsel %vm525, %v605, 0.0
      %607 = vadd.xlane.f32.xlu0 %v606
      %v608 = vpop.xlane.xlu0 %607
      %v609 = vrcp.pop %v608
      %v610 = vmul.f32 %v605, %v609
      %611 = vrot.lane.b32.xlu0 %v519, 64
      %v612 = vpop.permute.xlu0 %611
      %v615 = vsel %vm525, %v610, 0
      %617 = vmatprep.subr.mxu0 0.0
      %618 = vmatpush1.msra.mxu0 %v612
      %619 = vmatprep.subr.mxu0 0.0
      %620 = vmatpush1.msra.mxu0 0.0
      %621 = vmatprep.subr.mxu0 0.0
      %622 = vmatpush1.msra.mxu0 0.0
      %623 = vmatprep.subr.mxu0 0.0
      %624 = vmatpush1.msra.mxu0 0.0
      %625 = vmatprep.subr.mxu0 0.0
      %626 = vmatpush1.msra.mxu0 0.0
      %627 = vmatprep.subr.mxu0 0.0
      %628 = vmatpush1.msra.mxu0 0.0
      %629 = vmatprep.subr.mxu0 0.0
      %630 = vmatpush1.msra.mxu0 0.0
      %631 = vmatprep.subr.mxu0 0.0
      %632 = vmatpush1.msra.mxu0 0.0
      %633 = vmatprep.subr.mxu0 0.0
      %634 = vmatpush1.msra.mxu0 0.0
      %635 = vmatprep.subr.mxu0 0.0
      %636 = vmatpush1.msra.mxu0 0.0
      %637 = vmatprep.subr.mxu0 0.0
      %638 = vmatpush1.msra.mxu0 0.0
      %639 = vmatprep.subr.mxu0 0.0
      %640 = vmatpush1.msra.mxu0 0.0
      %641 = vmatprep.subr.mxu0 0.0
      %642 = vmatpush1.msra.mxu0 0.0
      %643 = vmatprep.subr.mxu0 0.0
      %644 = vmatpush1.msra.mxu0 0.0
      %645 = vmatprep.subr.mxu0 0.0
      %646 = vmatpush1.msra.mxu0 0.0
      %647 = vmatprep.subr.mxu0 0.0
      %648 = vmatpush1.msra.mxu0 0.0
      %649 = vmatprep.subr.mxu0 0.0
      %650 = vmatpush1.msra.mxu0 0.0
      %651 = vmatprep.subr.mxu0 0.0
      %652 = vmatpush1.msra.mxu0 0.0
      %653 = vmatprep.subr.mxu0 0.0
      %654 = vmatpush1.msra.mxu0 0.0
      %655 = vmatprep.subr.mxu0 0.0
      %656 = vmatpush1.msra.mxu0 0.0
      %657 = vmatprep.subr.mxu0 0.0
      %658 = vmatpush1.msra.mxu0 0.0
      %659 = vmatprep.subr.mxu0 0.0
      %660 = vmatpush1.msra.mxu0 0.0
      %661 = vmatprep.subr.mxu0 0.0
      %662 = vmatpush1.msra.mxu0 0.0
      %663 = vmatprep.subr.mxu0 0.0
      %664 = vmatpush1.msra.mxu0 0.0
      %665 = vmatprep.subr.mxu0 0.0
      %666 = vmatpush1.msra.mxu0 0.0
      %667 = vmatprep.subr.mxu0 0.0
      %668 = vmatpush1.msra.mxu0 0.0
      %669 = vmatprep.subr.mxu0 0.0
      %670 = vmatpush1.msra.mxu0 0.0
      %671 = vmatprep.subr.mxu0 0.0
      %672 = vmatpush1.msra.mxu0 0.0
      %673 = vmatprep.subr.mxu0 0.0
      %674 = vmatpush1.msra.mxu0 0.0
      %675 = vmatprep.subr.mxu0 0.0
      %676 = vmatpush1.msra.mxu0 0.0
      %677 = vmatprep.subr.mxu0 0.0
      %678 = vmatpush1.msra.mxu0 0.0
      %679 = vmatprep.subr.mxu0 0.0
      %680 = vmatpush1.msra.mxu0 0.0
      %681 = vmatprep.mubr.f32.mxu0 0.0
      %682 = vmatmul.mubr.f32.gmra.mrb[0].mxu0 %v615
      %v683 = vpop.f32.mrb[0].mxu0
      %v684 = vadd.f32 0.0, %v683
      %v685 = vpop.f32.mrb[0].mxu0
      %686 = vdwg.mxu0
      %687 = vrot.lane.b32.xlu0 %v519, 120
      %v688 = vpop.permute.xlu0 %687
      %689 = vrot.lane.b32.xlu0 %v519, 88
      %v690 = vpop.permute.xlu0 %689
      %v691 = vsel %vm525, %v688, 0
      %v693 = vsel %vm525, %v690, 0
      %695 = vmatprep.subr.mxu0 0.0
      %696 = vmatpush1.xpose.msra.mxu0 %v693
      %697 = vmatprep.subr.mxu0 0.0
      %698 = vmatpush1.xpose.msra.mxu0 0.0
      %699 = vmatprep.subr.mxu0 0.0
      %700 = vmatpush1.xpose.msra.mxu0 0.0
      %701 = vmatprep.subr.mxu0 0.0
      %702 = vmatpush1.xpose.msra.mxu0 0.0
      %703 = vmatprep.subr.mxu0 0.0
      %704 = vmatpush1.xpose.msra.mxu0 0.0
      %705 = vmatprep.subr.mxu0 0.0
      %706 = vmatpush1.xpose.msra.mxu0 0.0
      %707 = vmatprep.subr.mxu0 0.0
      %708 = vmatpush1.xpose.msra.mxu0 0.0
      %709 = vmatprep.subr.mxu0 0.0
      %710 = vmatpush1.xpose.msra.mxu0 0.0
      %711 = vmatprep.subr.mxu0 0.0
      %712 = vmatpush1.xpose.msra.mxu0 0.0
      %713 = vmatprep.subr.mxu0 0.0
      %714 = vmatpush1.xpose.msra.mxu0 0.0
      %715 = vmatprep.subr.mxu0 0.0
      %716 = vmatpush1.xpose.msra.mxu0 0.0
      %717 = vmatprep.subr.mxu0 0.0
      %718 = vmatpush1.xpose.msra.mxu0 0.0
      %719 = vmatprep.subr.mxu0 0.0
      %720 = vmatpush1.xpose.msra.mxu0 0.0
      %721 = vmatprep.subr.mxu0 0.0
      %722 = vmatpush1.xpose.msra.mxu0 0.0
      %723 = vmatprep.subr.mxu0 0.0
      %724 = vmatpush1.xpose.msra.mxu0 0.0
      %725 = vmatprep.subr.mxu0 0.0
      %726 = vmatpush1.xpose.msra.mxu0 0.0
      %727 = vmatprep.subr.mxu0 0.0
      %728 = vmatpush1.xpose.msra.mxu0 0.0
      %729 = vmatprep.subr.mxu0 0.0
      %730 = vmatpush1.xpose.msra.mxu0 0.0
      %731 = vmatprep.subr.mxu0 0.0
      %732 = vmatpush1.xpose.msra.mxu0 0.0
      %733 = vmatprep.subr.mxu0 0.0
      %734 = vmatpush1.xpose.msra.mxu0 0.0
      %735 = vmatprep.subr.mxu0 0.0
      %736 = vmatpush1.xpose.msra.mxu0 0.0
      %737 = vmatprep.subr.mxu0 0.0
      %738 = vmatpush1.xpose.msra.mxu0 0.0
      %739 = vmatprep.subr.mxu0 0.0
      %740 = vmatpush1.xpose.msra.mxu0 0.0
      %741 = vmatprep.subr.mxu0 0.0
      %742 = vmatpush1.xpose.msra.mxu0 0.0
      %743 = vmatprep.subr.mxu0 0.0
      %744 = vmatpush1.xpose.msra.mxu0 0.0
      %745 = vmatprep.subr.mxu0 0.0
      %746 = vmatpush1.xpose.msra.mxu0 0.0
      %747 = vmatprep.subr.mxu0 0.0
      %748 = vmatpush1.xpose.msra.mxu0 0.0
      %749 = vmatprep.subr.mxu0 0.0
      %750 = vmatpush1.xpose.msra.mxu0 0.0
      %751 = vmatprep.subr.mxu0 0.0
      %752 = vmatpush1.xpose.msra.mxu0 0.0
      %753 = vmatprep.subr.mxu0 0.0
      %754 = vmatpush1.xpose.msra.mxu0 0.0
      %755 = vmatprep.subr.mxu0 0.0
      %756 = vmatpush1.xpose.msra.mxu0 0.0
      %757 = vmatprep.subr.mxu0 0.0
      %758 = vmatpush1.xpose.msra.mxu0 0.0
      %759 = vmatprep.mubr.f32.mxu0 0.0
      %760 = vmatmul.mubr.f32.gmra.mrb[0].mxu0 %v691
      %v761 = vpop.f32.mrb[0].mxu0
      %v762 = vadd.f32 0.0, %v761
      %v763 = vpop.f32.mrb[0].mxu0
      %764 = vdwg.mxu0
      %v765 = vsel %vm525, %v762, -inf
      %766 = vmax.xlane.f32.xlu0 %v765
      %v767 = vpop.xlane.xlu0 %766
      %v768 = vsub.f32 %v762, %v767
      %v769 = vmul.f32 %v768, 1.442695
      %v770 = vpow.pop %v769
      %v771 = vsel %vm525, %v770, 0.0
      %772 = vadd.xlane.f32.xlu0 %v771
      %v773 = vpop.xlane.xlu0 %772
      %v774 = vrcp.pop %v773
      %v775 = vmul.f32 %v770, %v774
      %776 = vrot.lane.b32.xlu0 %v519, 56
      %v777 = vpop.permute.xlu0 %776
      %v780 = vsel %vm525, %v775, 0
      %782 = vmatprep.subr.mxu0 0.0
      %783 = vmatpush1.msra.mxu0 %v777
      %784 = vmatprep.subr.mxu0 0.0
      %785 = vmatpush1.msra.mxu0 0.0
      %786 = vmatprep.subr.mxu0 0.0
      %787 = vmatpush1.msra.mxu0 0.0
      %788 = vmatprep.subr.mxu0 0.0
      %789 = vmatpush1.msra.mxu0 0.0
      %790 = vmatprep.subr.mxu0 0.0
      %791 = vmatpush1.msra.mxu0 0.0
      %792 = vmatprep.subr.mxu0 0.0
      %793 = vmatpush1.msra.mxu0 0.0
      %794 = vmatprep.subr.mxu0 0.0
      %795 = vmatpush1.msra.mxu0 0.0
      %796 = vmatprep.subr.mxu0 0.0
      %797 = vmatpush1.msra.mxu0 0.0
      %798 = vmatprep.subr.mxu0 0.0
      %799 = vmatpush1.msra.mxu0 0.0
      %800 = vmatprep.subr.mxu0 0.0
      %801 = vmatpush1.msra.mxu0 0.0
      %802 = vmatprep.subr.mxu0 0.0
      %803 = vmatpush1.msra.mxu0 0.0
      %804 = vmatprep.subr.mxu0 0.0
      %805 = vmatpush1.msra.mxu0 0.0
      %806 = vmatprep.subr.mxu0 0.0
      %807 = vmatpush1.msra.mxu0 0.0
      %808 = vmatprep.subr.mxu0 0.0
      %809 = vmatpush1.msra.mxu0 0.0
      %810 = vmatprep.subr.mxu0 0.0
      %811 = vmatpush1.msra.mxu0 0.0
      %812 = vmatprep.subr.mxu0 0.0
      %813 = vmatpush1.msra.mxu0 0.0
      %814 = vmatprep.subr.mxu0 0.0
      %815 = vmatpush1.msra.mxu0 0.0
      %816 = vmatprep.subr.mxu0 0.0
      %817 = vmatpush1.msra.mxu0 0.0
      %818 = vmatprep.subr.mxu0 0.0
      %819 = vmatpush1.msra.mxu0 0.0
      %820 = vmatprep.subr.mxu0 0.0
      %821 = vmatpush1.msra.mxu0 0.0
      %822 = vmatprep.subr.mxu0 0.0
      %823 = vmatpush1.msra.mxu0 0.0
      %824 = vmatprep.subr.mxu0 0.0
      %825 = vmatpush1.msra.mxu0 0.0
      %826 = vmatprep.subr.mxu0 0.0
      %827 = vmatpush1.msra.mxu0 0.0
      %828 = vmatprep.subr.mxu0 0.0
      %829 = vmatpush1.msra.mxu0 0.0
      %830 = vmatprep.subr.mxu0 0.0
      %831 = vmatpush1.msra.mxu0 0.0
      %832 = vmatprep.subr.mxu0 0.0
      %833 = vmatpush1.msra.mxu0 0.0
      %834 = vmatprep.subr.mxu0 0.0
      %835 = vmatpush1.msra.mxu0 0.0
      %836 = vmatprep.subr.mxu0 0.0
      %837 = vmatpush1.msra.mxu0 0.0
      %838 = vmatprep.subr.mxu0 0.0
      %839 = vmatpush1.msra.mxu0 0.0
      %840 = vmatprep.subr.mxu0 0.0
      %841 = vmatpush1.msra.mxu0 0.0
      %842 = vmatprep.subr.mxu0 0.0
      %843 = vmatpush1.msra.mxu0 0.0
      %844 = vmatprep.subr.mxu0 0.0
      %845 = vmatpush1.msra.mxu0 0.0
      %846 = vmatprep.mubr.f32.mxu0 0.0
      %847 = vmatmul.mubr.f32.gmra.mrb[0].mxu0 %v780
      %v848 = vpop.f32.mrb[0].mxu0
      %v849 = vadd.f32 0.0, %v848
      %v850 = vpop.f32.mrb[0].mxu0
      %851 = vdwg.mxu0
      %852 = vrot.lane.b32.xlu0 %v519, 112
      %v853 = vpop.permute.xlu0 %852
      %854 = vrot.lane.b32.xlu0 %v519, 80
      %v855 = vpop.permute.xlu0 %854
      %v856 = vsel %vm525, %v853, 0
      %v858 = vsel %vm525, %v855, 0
      %860 = vmatprep.subr.mxu0 0.0
      %861 = vmatpush1.xpose.msra.mxu0 %v858
      %862 = vmatprep.subr.mxu0 0.0
      %863 = vmatpush1.xpose.msra.mxu0 0.0
      %864 = vmatprep.subr.mxu0 0.0
      %865 = vmatpush1.xpose.msra.mxu0 0.0
      %866 = vmatprep.subr.mxu0 0.0
      %867 = vmatpush1.xpose.msra.mxu0 0.0
      %868 = vmatprep.subr.mxu0 0.0
      %869 = vmatpush1.xpose.msra.mxu0 0.0
      %870 = vmatprep.subr.mxu0 0.0
      %871 = vmatpush1.xpose.msra.mxu0 0.0
      %872 = vmatprep.subr.mxu0 0.0
      %873 = vmatpush1.xpose.msra.mxu0 0.0
      %874 = vmatprep.subr.mxu0 0.0
      %875 = vmatpush1.xpose.msra.mxu0 0.0
      %876 = vmatprep.subr.mxu0 0.0
      %877 = vmatpush1.xpose.msra.mxu0 0.0
      %878 = vmatprep.subr.mxu0 0.0
      %879 = vmatpush1.xpose.msra.mxu0 0.0
      %880 = vmatprep.subr.mxu0 0.0
      %881 = vmatpush1.xpose.msra.mxu0 0.0
      %882 = vmatprep.subr.mxu0 0.0
      %883 = vmatpush1.xpose.msra.mxu0 0.0
      %884 = vmatprep.subr.mxu0 0.0
      %885 = vmatpush1.xpose.msra.mxu0 0.0
      %886 = vmatprep.subr.mxu0 0.0
      %887 = vmatpush1.xpose.msra.mxu0 0.0
      %888 = vmatprep.subr.mxu0 0.0
      %889 = vmatpush1.xpose.msra.mxu0 0.0
      %890 = vmatprep.subr.mxu0 0.0
      %891 = vmatpush1.xpose.msra.mxu0 0.0
      %892 = vmatprep.subr.mxu0 0.0
      %893 = vmatpush1.xpose.msra.mxu0 0.0
      %894 = vmatprep.subr.mxu0 0.0
      %895 = vmatpush1.xpose.msra.mxu0 0.0
      %896 = vmatprep.subr.mxu0 0.0
      %897 = vmatpush1.xpose.msra.mxu0 0.0
      %898 = vmatprep.subr.mxu0 0.0
      %899 = vmatpush1.xpose.msra.mxu0 0.0
      %900 = vmatprep.subr.mxu0 0.0
      %901 = vmatpush1.xpose.msra.mxu0 0.0
      %902 = vmatprep.subr.mxu0 0.0
      %903 = vmatpush1.xpose.msra.mxu0 0.0
      %904 = vmatprep.subr.mxu0 0.0
      %905 = vmatpush1.xpose.msra.mxu0 0.0
      %906 = vmatprep.subr.mxu0 0.0
      %907 = vmatpush1.xpose.msra.mxu0 0.0
      %908 = vmatprep.subr.mxu0 0.0
      %909 = vmatpush1.xpose.msra.mxu0 0.0
      %910 = vmatprep.subr.mxu0 0.0
      %911 = vmatpush1.xpose.msra.mxu0 0.0
      %912 = vmatprep.subr.mxu0 0.0
      %913 = vmatpush1.xpose.msra.mxu0 0.0
      %914 = vmatprep.subr.mxu0 0.0
      %915 = vmatpush1.xpose.msra.mxu0 0.0
      %916 = vmatprep.subr.mxu0 0.0
      %917 = vmatpush1.xpose.msra.mxu0 0.0
      %918 = vmatprep.subr.mxu0 0.0
      %919 = vmatpush1.xpose.msra.mxu0 0.0
      %920 = vmatprep.subr.mxu0 0.0
      %921 = vmatpush1.xpose.msra.mxu0 0.0
      %922 = vmatprep.subr.mxu0 0.0
      %923 = vmatpush1.xpose.msra.mxu0 0.0
      %924 = vmatprep.mubr.f32.mxu0 0.0
      %925 = vmatmul.mubr.f32.gmra.mrb[0].mxu0 %v856
      %v926 = vpop.f32.mrb[0].mxu0
      %v927 = vadd.f32 0.0, %v926
      %v928 = vpop.f32.mrb[0].mxu0
      %929 = vdwg.mxu0
      %v930 = vsel %vm525, %v927, -inf
      %931 = vmax.xlane.f32.xlu0 %v930
      %v932 = vpop.xlane.xlu0 %931
      %v933 = vsub.f32 %v927, %v932
      %v934 = vmul.f32 %v933, 1.442695
      %v935 = vpow.pop %v934
      %v936 = vsel %vm525, %v935, 0.0
      %937 = vadd.xlane.f32.xlu0 %v936
      %v938 = vpop.xlane.xlu0 %937
      %v939 = vrcp.pop %v938
      %v940 = vmul.f32 %v935, %v939
      %941 = vrot.lane.b32.xlu0 %v519, 48
      %v942 = vpop.permute.xlu0 %941
      %v945 = vsel %vm525, %v940, 0
      %947 = vmatprep.subr.mxu0 0.0
      %948 = vmatpush1.msra.mxu0 %v942
      %949 = vmatprep.subr.mxu0 0.0
      %950 = vmatpush1.msra.mxu0 0.0
      %951 = vmatprep.subr.mxu0 0.0
      %952 = vmatpush1.msra.mxu0 0.0
      %953 = vmatprep.subr.mxu0 0.0
      %954 = vmatpush1.msra.mxu0 0.0
      %955 = vmatprep.subr.mxu0 0.0
      %956 = vmatpush1.msra.mxu0 0.0
      %957 = vmatprep.subr.mxu0 0.0
      %958 = vmatpush1.msra.mxu0 0.0
      %959 = vmatprep.subr.mxu0 0.0
      %960 = vmatpush1.msra.mxu0 0.0
      %961 = vmatprep.subr.mxu0 0.0
      %962 = vmatpush1.msra.mxu0 0.0
      %963 = vmatprep.subr.mxu0 0.0
      %964 = vmatpush1.msra.mxu0 0.0
      %965 = vmatprep.subr.mxu0 0.0
      %966 = vmatpush1.msra.mxu0 0.0
      %967 = vmatprep.subr.mxu0 0.0
      %968 = vmatpush1.msra.mxu0 0.0
      %969 = vmatprep.subr.mxu0 0.0
      %970 = vmatpush1.msra.mxu0 0.0
      %971 = vmatprep.subr.mxu0 0.0
      %972 = vmatpush1.msra.mxu0 0.0
      %973 = vmatprep.subr.mxu0 0.0
      %974 = vmatpush1.msra.mxu0 0.0
      %975 = vmatprep.subr.mxu0 0.0
      %976 = vmatpush1.msra.mxu0 0.0
      %977 = vmatprep.subr.mxu0 0.0
      %978 = vmatpush1.msra.mxu0 0.0
      %979 = vmatprep.subr.mxu0 0.0
      %980 = vmatpush1.msra.mxu0 0.0
      %981 = vmatprep.subr.mxu0 0.0
      %982 = vmatpush1.msra.mxu0 0.0
      %983 = vmatprep.subr.mxu0 0.0
      %984 = vmatpush1.msra.mxu0 0.0
      %985 = vmatprep.subr.mxu0 0.0
      %986 = vmatpush1.msra.mxu0 0.0
      %987 = vmatprep.subr.mxu0 0.0
      %988 = vmatpush1.msra.mxu0 0.0
      %989 = vmatprep.subr.mxu0 0.0
      %990 = vmatpush1.msra.mxu0 0.0
      %991 = vmatprep.subr.mxu0 0.0
      %992 = vmatpush1.msra.mxu0 0.0
      %993 = vmatprep.subr.mxu0 0.0
      %994 = vmatpush1.msra.mxu0 0.0
      %995 = vmatprep.subr.mxu0 0.0
      %996 = vmatpush1.msra.mxu0 0.0
      %997 = vmatprep.subr.mxu0 0.0
      %998 = vmatpush1.msra.mxu0 0.0
      %999 = vmatprep.subr.mxu0 0.0
      %1000 = vmatpush1.msra.mxu0 0.0
      %1001 = vmatprep.subr.mxu0 0.0
      %1002 = vmatpush1.msra.mxu0 0.0
      %1003 = vmatprep.subr.mxu0 0.0
      %1004 = vmatpush1.msra.mxu0 0.0
      %1005 = vmatprep.subr.mxu0 0.0
      %1006 = vmatpush1.msra.mxu0 0.0
      %1007 = vmatprep.subr.mxu0 0.0
      %1008 = vmatpush1.msra.mxu0 0.0
      %1009 = vmatprep.subr.mxu0 0.0
      %1010 = vmatpush1.msra.mxu0 0.0
      %1011 = vmatprep.mubr.f32.mxu0 0.0
      %1012 = vmatmul.mubr.f32.gmra.mrb[0].mxu0 %v945
      %v1013 = vpop.f32.mrb[0].mxu0
      %v1014 = vadd.f32 0.0, %v1013
      %v1015 = vpop.f32.mrb[0].mxu0
      %1016 = vdwg.mxu0
      %1017 = vrot.lane.b32.xlu0 %v519, 104
      %v1018 = vpop.permute.xlu0 %1017
      %1019 = vrot.lane.b32.xlu0 %v519, 72
      %v1020 = vpop.permute.xlu0 %1019
      %v1021 = vsel %vm525, %v1018, 0
      %v1023 = vsel %vm525, %v1020, 0
      %1025 = vmatprep.subr.mxu0 0.0
      %1026 = vmatpush1.xpose.msra.mxu0 %v1023
      %1027 = vmatprep.subr.mxu0 0.0
      %1028 = vmatpush1.xpose.msra.mxu0 0.0
      %1029 = vmatprep.subr.mxu0 0.0
      %1030 = vmatpush1.xpose.msra.mxu0 0.0
      %1031 = vmatprep.subr.mxu0 0.0
      %1032 = vmatpush1.xpose.msra.mxu0 0.0
      %1033 = vmatprep.subr.mxu0 0.0
      %1034 = vmatpush1.xpose.msra.mxu0 0.0
      %1035 = vmatprep.subr.mxu0 0.0
      %1036 = vmatpush1.xpose.msra.mxu0 0.0
      %1037 = vmatprep.subr.mxu0 0.0
      %1038 = vmatpush1.xpose.msra.mxu0 0.0
      %1039 = vmatprep.subr.mxu0 0.0
      %1040 = vmatpush1.xpose.msra.mxu0 0.0
      %1041 = vmatprep.subr.mxu0 0.0
      %1042 = vmatpush1.xpose.msra.mxu0 0.0
      %1043 = vmatprep.subr.mxu0 0.0
      %1044 = vmatpush1.xpose.msra.mxu0 0.0
      %1045 = vmatprep.subr.mxu0 0.0
      %1046 = vmatpush1.xpose.msra.mxu0 0.0
      %1047 = vmatprep.subr.mxu0 0.0
      %1048 = vmatpush1.xpose.msra.mxu0 0.0
      %1049 = vmatprep.subr.mxu0 0.0
      %1050 = vmatpush1.xpose.msra.mxu0 0.0
      %1051 = vmatprep.subr.mxu0 0.0
      %1052 = vmatpush1.xpose.msra.mxu0 0.0
      %1053 = vmatprep.subr.mxu0 0.0
      %1054 = vmatpush1.xpose.msra.mxu0 0.0
      %1055 = vmatprep.subr.mxu0 0.0
      %1056 = vmatpush1.xpose.msra.mxu0 0.0
      %1057 = vmatprep.subr.mxu0 0.0
      %1058 = vmatpush1.xpose.msra.mxu0 0.0
      %1059 = vmatprep.subr.mxu0 0.0
      %1060 = vmatpush1.xpose.msra.mxu0 0.0
      %1061 = vmatprep.subr.mxu0 0.0
      %1062 = vmatpush1.xpose.msra.mxu0 0.0
      %1063 = vmatprep.subr.mxu0 0.0
      %1064 = vmatpush1.xpose.msra.mxu0 0.0
      %1065 = vmatprep.subr.mxu0 0.0
      %1066 = vmatpush1.xpose.msra.mxu0 0.0
      %1067 = vmatprep.subr.mxu0 0.0
      %1068 = vmatpush1.xpose.msra.mxu0 0.0
      %1069 = vmatprep.subr.mxu0 0.0
      %1070 = vmatpush1.xpose.msra.mxu0 0.0
      %1071 = vmatprep.subr.mxu0 0.0
      %1072 = vmatpush1.xpose.msra.mxu0 0.0
      %1073 = vmatprep.subr.mxu0 0.0
      %1074 = vmatpush1.xpose.msra.mxu0 0.0
      %1075 = vmatprep.subr.mxu0 0.0
      %1076 = vmatpush1.xpose.msra.mxu0 0.0
      %1077 = vmatprep.subr.mxu0 0.0
      %1078 = vmatpush1.xpose.msra.mxu0 0.0
      %1079 = vmatprep.subr.mxu0 0.0
      %1080 = vmatpush1.xpose.msra.mxu0 0.0
      %1081 = vmatprep.subr.mxu0 0.0
      %1082 = vmatpush1.xpose.msra.mxu0 0.0
      %1083 = vmatprep.subr.mxu0 0.0
      %1084 = vmatpush1.xpose.msra.mxu0 0.0
      %1085 = vmatprep.subr.mxu0 0.0
      %1086 = vmatpush1.xpose.msra.mxu0 0.0
      %1087 = vmatprep.subr.mxu0 0.0
      %1088 = vmatpush1.xpose.msra.mxu0 0.0
      %1089 = vmatprep.mubr.f32.mxu0 0.0
      %1090 = vmatmul.mubr.f32.gmra.mrb[0].mxu0 %v1021
      %v1091 = vpop.f32.mrb[0].mxu0
      %v1092 = vadd.f32 0.0, %v1091
      %v1093 = vpop.f32.mrb[0].mxu0
      %1094 = vdwg.mxu0
      %v1095 = vsel %vm525, %v1092, -inf
      %1096 = vmax.xlane.f32.xlu0 %v1095
      %v1097 = vpop.xlane.xlu0 %1096
      %v1098 = vsub.f32 %v1092, %v1097
      %v1099 = vmul.f32 %v1098, 1.442695
      %v1100 = vpow.pop %v1099
      %v1101 = vsel %vm525, %v1100, 0.0
      %1102 = vadd.xlane.f32.xlu0 %v1101
      %v1103 = vpop.xlane.xlu0 %1102
      %v1104 = vrcp.pop %v1103
      %v1105 = vmul.f32 %v1100, %v1104
      %1106 = vrot.lane.b32.xlu0 %v519, 40
      %v1107 = vpop.permute.xlu0 %1106
      %v1110 = vsel %vm525, %v1105, 0
      %1112 = vmatprep.subr.mxu0 0.0
      %1113 = vmatpush1.msra.mxu0 %v1107
      %1114 = vmatprep.subr.mxu0 0.0
      %1115 = vmatpush1.msra.mxu0 0.0
      %1116 = vmatprep.subr.mxu0 0.0
      %1117 = vmatpush1.msra.mxu0 0.0
      %1118 = vmatprep.subr.mxu0 0.0
      %1119 = vmatpush1.msra.mxu0 0.0
      %1120 = vmatprep.subr.mxu0 0.0
      %1121 = vmatpush1.msra.mxu0 0.0
      %1122 = vmatprep.subr.mxu0 0.0
      %1123 = vmatpush1.msra.mxu0 0.0
      %1124 = vmatprep.subr.mxu0 0.0
      %1125 = vmatpush1.msra.mxu0 0.0
      %1126 = vmatprep.subr.mxu0 0.0
      %1127 = vmatpush1.msra.mxu0 0.0
      %1128 = vmatprep.subr.mxu0 0.0
      %1129 = vmatpush1.msra.mxu0 0.0
      %1130 = vmatprep.subr.mxu0 0.0
      %1131 = vmatpush1.msra.mxu0 0.0
      %1132 = vmatprep.subr.mxu0 0.0
      %1133 = vmatpush1.msra.mxu0 0.0
      %1134 = vmatprep.subr.mxu0 0.0
      %1135 = vmatpush1.msra.mxu0 0.0
      %1136 = vmatprep.subr.mxu0 0.0
      %1137 = vmatpush1.msra.mxu0 0.0
      %1138 = vmatprep.subr.mxu0 0.0
      %1139 = vmatpush1.msra.mxu0 0.0
      %1140 = vmatprep.subr.mxu0 0.0
      %1141 = vmatpush1.msra.mxu0 0.0
      %1142 = vmatprep.subr.mxu0 0.0
      %1143 = vmatpush1.msra.mxu0 0.0
      %1144 = vmatprep.subr.mxu0 0.0
      %1145 = vmatpush1.msra.mxu0 0.0
      %1146 = vmatprep.subr.mxu0 0.0
      %1147 = vmatpush1.msra.mxu0 0.0
      %1148 = vmatprep.subr.mxu0 0.0
      %1149 = vmatpush1.msra.mxu0 0.0
      %1150 = vmatprep.subr.mxu0 0.0
      %1151 = vmatpush1.msra.mxu0 0.0
      %1152 = vmatprep.subr.mxu0 0.0
      %1153 = vmatpush1.msra.mxu0 0.0
      %1154 = vmatprep.subr.mxu0 0.0
      %1155 = vmatpush1.msra.mxu0 0.0
      %1156 = vmatprep.subr.mxu0 0.0
      %1157 = vmatpush1.msra.mxu0 0.0
      %1158 = vmatprep.subr.mxu0 0.0
      %1159 = vmatpush1.msra.mxu0 0.0
      %1160 = vmatprep.subr.mxu0 0.0
      %1161 = vmatpush1.msra.mxu0 0.0
      %1162 = vmatprep.subr.mxu0 0.0
      %1163 = vmatpush1.msra.mxu0 0.0
      %1164 = vmatprep.subr.mxu0 0.0
      %1165 = vmatpush1.msra.mxu0 0.0
      %1166 = vmatprep.subr.mxu0 0.0
      %1167 = vmatpush1.msra.mxu0 0.0
      %1168 = vmatprep.subr.mxu0 0.0
      %1169 = vmatpush1.msra.mxu0 0.0
      %1170 = vmatprep.subr.mxu0 0.0
      %1171 = vmatpush1.msra.mxu0 0.0
      %1172 = vmatprep.subr.mxu0 0.0
      %1173 = vmatpush1.msra.mxu0 0.0
      %1174 = vmatprep.subr.mxu0 0.0
      %1175 = vmatpush1.msra.mxu0 0.0
      %1176 = vmatprep.mubr.f32.mxu0 0.0
      %1177 = vmatmul.mubr.f32.gmra.mrb[0].mxu0 %v1110
      %v1178 = vpop.f32.mrb[0].mxu0
      %v1179 = vadd.f32 0.0, %v1178
      %v1180 = vpop.f32.mrb[0].mxu0
      %1181 = vdwg.mxu0
      %1183 = vrot.lane.b32.xlu0 %v849, 8
      %v1184 = vpop.permute.xlu0 %1183
      %1187 = vrot.lane.b32.xlu0 %v1014, 16
      %v1188 = vpop.permute.xlu0 %1187
      %1191 = vrot.lane.b32.xlu0 %v1179, 24
      %v1192 = vpop.permute.xlu0 %1191
      %v1194 = vsel %vm525, %v684, %v1184
      %vm1195 = vcmask 130048
      %v1196 = vsel %vm1195, %v1194, %v1188
      %vm1197 = vcmask 195584
      %v1198 = vsel %vm1197, %v1196, %v1192
      %v1199 = vld [vmem:[%s3] sm:$0xff]
      %v1200 = vld [vmem:[%s3 + $0x8] sm:$0xff]
      %v1201 = vld [vmem:[%s3 + $0x10] sm:$0xff]
      %v1202 = vld [vmem:[%s3 + $0x18] sm:$0xff]
      %v1203 = vld [vmem:[%s4] sm:$0x1]
      %v1205 = vlaneseq
      %v1206 = vshrl.u32 %v1205, 7
      %v1207 = vsub.s32 0, %v1206
      %v1208 = vrot.slane %v1203, %v1207
      %v1211 = vsel %vm448, %v1198, 0
      %1213 = vmatprep.subr.mxu0 0.0
      %1214 = vmatpush1.msra.mxu0 %v1199
      %1215 = vmatprep.subr.mxu0 0.0
      %1216 = vmatpush1.msra.mxu0 %v1200
      %1217 = vmatprep.subr.mxu0 0.0
      %1218 = vmatpush1.msra.mxu0 %v1201
      %1219 = vmatprep.subr.mxu0 0.0
      %1220 = vmatpush1.msra.mxu0 %v1202
      %1221 = vmatprep.subr.mxu0 0.0
      %1222 = vmatpush1.msra.mxu0 0.0
      %1223 = vmatprep.subr.mxu0 0.0
      %1224 = vmatpush1.msra.mxu0 0.0
      %1225 = vmatprep.subr.mxu0 0.0
      %1226 = vmatpush1.msra.mxu0 0.0
      %1227 = vmatprep.subr.mxu0 0.0
      %1228 = vmatpush1.msra.mxu0 0.0
      %1229 = vmatprep.subr.mxu0 0.0
      %1230 = vmatpush1.msra.mxu0 0.0
      %1231 = vmatprep.subr.mxu0 0.0
      %1232 = vmatpush1.msra.mxu0 0.0
      %1233 = vmatprep.subr.mxu0 0.0
      %1234 = vmatpush1.msra.mxu0 0.0
      %1235 = vmatprep.subr.mxu0 0.0
      %1236 = vmatpush1.msra.mxu0 0.0
      %1237 = vmatprep.subr.mxu0 0.0
      %1238 = vmatpush1.msra.mxu0 0.0
      %1239 = vmatprep.subr.mxu0 0.0
      %1240 = vmatpush1.msra.mxu0 0.0
      %1241 = vmatprep.subr.mxu0 0.0
      %1242 = vmatpush1.msra.mxu0 0.0
      %1243 = vmatprep.subr.mxu0 0.0
      %1244 = vmatpush1.msra.mxu0 0.0
      %1245 = vmatprep.subr.mxu0 0.0
      %1246 = vmatpush1.msra.mxu0 0.0
      %1247 = vmatprep.subr.mxu0 0.0
      %1248 = vmatpush1.msra.mxu0 0.0
      %1249 = vmatprep.subr.mxu0 0.0
      %1250 = vmatpush1.msra.mxu0 0.0
      %1251 = vmatprep.subr.mxu0 0.0
      %1252 = vmatpush1.msra.mxu0 0.0
      %1253 = vmatprep.subr.mxu0 0.0
      %1254 = vmatpush1.msra.mxu0 0.0
      %1255 = vmatprep.subr.mxu0 0.0
      %1256 = vmatpush1.msra.mxu0 0.0
      %1257 = vmatprep.subr.mxu0 0.0
      %1258 = vmatpush1.msra.mxu0 0.0
      %1259 = vmatprep.subr.mxu0 0.0
      %1260 = vmatpush1.msra.mxu0 0.0
      %1261 = vmatprep.subr.mxu0 0.0
      %1262 = vmatpush1.msra.mxu0 0.0
      %1263 = vmatprep.subr.mxu0 0.0
      %1264 = vmatpush1.msra.mxu0 0.0
      %1265 = vmatprep.subr.mxu0 0.0
      %1266 = vmatpush1.msra.mxu0 0.0
      %1267 = vmatprep.subr.mxu0 0.0
      %1268 = vmatpush1.msra.mxu0 0.0
      %1269 = vmatprep.subr.mxu0 0.0
      %1270 = vmatpush1.msra.mxu0 0.0
      %1271 = vmatprep.subr.mxu0 0.0
      %1272 = vmatpush1.msra.mxu0 0.0
      %1273 = vmatprep.subr.mxu0 0.0
      %1274 = vmatpush1.msra.mxu0 0.0
      %1275 = vmatprep.subr.mxu0 0.0
      %1276 = vmatpush1.msra.mxu0 0.0
      %1277 = vmatprep.mubr.f32.mxu0 0.0
      %1278 = vmatmul.mubr.f32.gmra.mrb[0].mxu0 %v1211
      %v1279 = vpop.f32.mrb[0].mxu0
      %v1280 = vadd.f32 %v1208, %v1279
      %v1281 = vpop.f32.mrb[0].mxu0
      %1282 = vdwg.mxu0
      %v1283 = vadd.f32 %v436, %v1280
      %v1284 = vsel %vm448, %v1283, 0.0
      %1285 = vadd.xlane.f32.xlu0 %v1284
      %v1286 = vpop.xlane.xlu0 %1285
      %v1287 = vrcp.pop 32.0
      %v1288 = vmul.f32 %v1286, %v1287
      %v1289 = vsub.f32 %v1283, %v1288
      %v1290 = vmul.f32 %v1289, %v1289
      %v1291 = vsel %vm448, %v1290, 0.0
      %1292 = vadd.xlane.f32.xlu0 %v1291
      %v1293 = vpop.xlane.xlu0 %1292
      %v1294 = vmul.f32 %v1293, %v1287
      %v1295 = vadd.f32 %v1294, 1e-05
      %v1296 = vrsqrt.pop %v1295
      %v1297 = vmul.f32 %v1289, %v1296
      %v1298 = vld [vmem:[%s5] sm:$0x1]
      %v1300 = vlaneseq
      %v1301 = vshrl.u32 %v1300, 7
      %v1302 = vsub.s32 0, %v1301
      %v1303 = vrot.slane %v1298, %v1302
      %v1305 = vmul.f32 %v1297, %v1303
      %v1306 = vld [vmem:[%s6] sm:$0x1]
      %v1308 = vlaneseq
      %v1309 = vshrl.u32 %v1308, 7
      %v1310 = vsub.s32 0, %v1309
      %v1311 = vrot.slane %v1306, %v1310
      %v1313 = vadd.f32 %v1305, %v1311
      %v1314 = vld [vmem:[%s7] sm:$0xff]
      %v1315 = vld [vmem:[%s7 + $0x8] sm:$0xff]
      %v1316 = vld [vmem:[%s7 + $0x10] sm:$0xff]
      %v1317 = vld [vmem:[%s7 + $0x18] sm:$0xff]
      %v1318 = vld [vmem:[%s8] sm:$0x1]
      %v1320 = vlaneseq
      %v1321 = vshrl.u32 %v1320, 7
      %v1322 = vsub.s32 0, %v1321
      %v1323 = vrot.slane %v1318, %v1322
      %v1326 = vsel %vm448, %v1313, 0
      %1328 = vmatprep.subr.mxu0 0.0
      %1329 = vmatpush1.msra.mxu0 %v1314
      %1330 = vmatprep.subr.mxu0 0.0
      %1331 = vmatpush1.msra.mxu0 %v1315
      %1332 = vmatprep.subr.mxu0 0.0
      %1333 = vmatpush1.msra.mxu0 %v1316
      %1334 = vmatprep.subr.mxu0 0.0
      %1335 = vmatpush1.msra.mxu0 %v1317
      %1336 = vmatprep.subr.mxu0 0.0
      %1337 = vmatpush1.msra.mxu0 0.0
      %1338 = vmatprep.subr.mxu0 0.0
      %1339 = vmatpush1.msra.mxu0 0.0
      %1340 = vmatprep.subr.mxu0 0.0
      %1341 = vmatpush1.msra.mxu0 0.0
      %1342 = vmatprep.subr.mxu0 0.0
      %1343 = vmatpush1.msra.mxu0 0.0
      %1344 = vmatprep.subr.mxu0 0.0
      %1345 = vmatpush1.msra.mxu0 0.0
      %1346 = vmatprep.subr.mxu0 0.0
      %1347 = vmatpush1.msra.mxu0 0.0
      %1348 = vmatprep.subr.mxu0 0.0
      %1349 = vmatpush1.msra.mxu0 0.0
      %1350 = vmatprep.subr.mxu0 0.0
      %1351 = vmatpush1.msra.mxu0 0.0
      %1352 = vmatprep.subr.mxu0 0.0
      %1353 = vmatpush1.msra.mxu0 0.0
      %1354 = vmatprep.subr.mxu0 0.0
      %1355 = vmatpush1.msra.mxu0 0.0
      %1356 = vmatprep.subr.mxu0 0.0
      %1357 = vmatpush1.msra.mxu0 0.0
      %1358 = vmatprep.subr.mxu0 0.0
      %1359 = vmatpush1.msra.mxu0 0.0
      %1360 = vmatprep.subr.mxu0 0.0
      %1361 = vmatpush1.msra.mxu0 0.0
      %1362 = vmatprep.subr.mxu0 0.0
      %1363 = vmatpush1.msra.mxu0 0.0
      %1364 = vmatprep.subr.mxu0 0.0
      %1365 = vmatpush1.msra.mxu0 0.0
      %1366 = vmatprep.subr.mxu0 0.0
      %1367 = vmatpush1.msra.mxu0 0.0
      %1368 = vmatprep.subr.mxu0 0.0
      %1369 = vmatpush1.msra.mxu0 0.0
      %1370 = vmatprep.subr.mxu0 0.0
      %1371 = vmatpush1.msra.mxu0 0.0
      %1372 = vmatprep.subr.mxu0 0.0
      %1373 = vmatpush1.msra.mxu0 0.0
      %1374 = vmatprep.subr.mxu0 0.0
      %1375 = vmatpush1.msra.mxu0 0.0
      %1376 = vmatprep.subr.mxu0 0.0
      %1377 = vmatpush1.msra.mxu0 0.0
      %1378 = vmatprep.subr.mxu0 0.0
      %1379 = vmatpush1.msra.mxu0 0.0
      %1380 = vmatprep.subr.mxu0 0.0
      %1381 = vmatpush1.msra.mxu0 0.0
      %1382 = vmatprep.subr.mxu0 0.0
      %1383 = vmatpush1.msra.mxu0 0.0
      %1384 = vmatprep.subr.mxu0 0.0
      %1385 = vmatpush1.msra.mxu0 0.0
      %1386 = vmatprep.subr.mxu0 0.0
      %1387 = vmatpush1.msra.mxu0 0.0
      %1388 = vmatprep.subr.mxu0 0.0
      %1389 = vmatpush1.msra.mxu0 0.0
      %1390 = vmatprep.subr.mxu0 0.0
      %1391 = vmatpush1.msra.mxu0 0.0
      %1392 = vmatprep.mubr.f32.mxu0 0.0
      %1393 = vmatmul.mubr.f32.gmra.mrb[0].mxu0 %v1326
      %v1394 = vpop.f32.mrb[0].mxu0
      %v1395 = vadd.f32 %v1323, %v1394
      %v1396 = vpop.f32.mrb[0].mxu0
      %1397 = vdwg.mxu0
      %v1398 = vmax.f32 %v1395, 0.0
      %v1399 = vld [vmem:[%s9] sm:$0xff]
      %v1400 = vld [vmem:[%s9 + $0x8] sm:$0xff]
      %v1401 = vld [vmem:[%s9 + $0x10] sm:$0xff]
      %v1402 = vld [vmem:[%s9 + $0x18] sm:$0xff]
      %v1403 = vld [vmem:[%s9 + $0x20] sm:$0xff]
      %v1404 = vld [vmem:[%s9 + $0x28] sm:$0xff]
      %v1405 = vld [vmem:[%s9 + $0x30] sm:$0xff]
      %v1406 = vld [vmem:[%s9 + $0x38] sm:$0xff]
      %v1407 = vld [vmem:[%s10] sm:$0x1]
      %v1409 = vlaneseq
      %v1410 = vshrl.u32 %v1409, 7
      %v1411 = vsub.s32 0, %v1410
      %v1412 = vrot.slane %v1407, %v1411
      %vm1414 = vcmask 523264
      %v1416 = vsel %vm1414, %v1398, 0
      %1418 = vmatprep.subr.mxu0 0.0
      %1419 = vmatpush1.msra.mxu0 %v1399
      %1420 = vmatprep.subr.mxu0 0.0
      %1421 = vmatpush1.msra.mxu0 %v1400
      %1422 = vmatprep.subr.mxu0 0.0
      %1423 = vmatpush1.msra.mxu0 %v1401
      %1424 = vmatprep.subr.mxu0 0.0
      %1425 = vmatpush1.msra.mxu0 %v1402
      %1426 = vmatprep.subr.mxu0 0.0
      %1427 = vmatpush1.msra.mxu0 %v1403
      %1428 = vmatprep.subr.mxu0 0.0
      %1429 = vmatpush1.msra.mxu0 %v1404
      %1430 = vmatprep.subr.mxu0 0.0
      %1431 = vmatpush1.msra.mxu0 %v1405
      %1432 = vmatprep.subr.mxu0 0.0
      %1433 = vmatpush1.msra.mxu0 %v1406
      %1434 = vmatprep.subr.mxu0 0.0
      %1435 = vmatpush1.msra.mxu0 0.0
      %1436 = vmatprep.subr.mxu0 0.0
      %1437 = vmatpush1.msra.mxu0 0.0
      %1438 = vmatprep.subr.mxu0 0.0
      %1439 = vmatpush1.msra.mxu0 0.0
      %1440 = vmatprep.subr.mxu0 0.0
      %1441 = vmatpush1.msra.mxu0 0.0
      %1442 = vmatprep.subr.mxu0 0.0
      %1443 = vmatpush1.msra.mxu0 0.0
      %1444 = vmatprep.subr.mxu0 0.0
      %1445 = vmatpush1.msra.mxu0 0.0
      %1446 = vmatprep.subr.mxu0 0.0
      %1447 = vmatpush1.msra.mxu0 0.0
      %1448 = vmatprep.subr.mxu0 0.0
      %1449 = vmatpush1.msra.mxu0 0.0
      %1450 = vmatprep.subr.mxu0 0.0
      %1451 = vmatpush1.msra.mxu0 0.0
      %1452 = vmatprep.subr.mxu0 0.0
      %1453 = vmatpush1.msra.mxu0 0.0
      %1454 = vmatprep.subr.mxu0 0.0
      %1455 = vmatpush1.msra.mxu0 0.0
      %1456 = vmatprep.subr.mxu0 0.0
      %1457 = vmatpush1.msra.mxu0 0.0
      %1458 = vmatprep.subr.mxu0 0.0
      %1459 = vmatpush1.msra.mxu0 0.0
      %1460 = vmatprep.subr.mxu0 0.0
      %1461 = vmatpush1.msra.mxu0 0.0
      %1462 = vmatprep.subr.mxu0 0.0
      %1463 = vmatpush1.msra.mxu0 0.0
      %1464 = vmatprep.subr.mxu0 0.0
      %1465 = vmatpush1.msra.mxu0 0.0
      %1466 = vmatprep.subr.mxu0 0.0
      %1467 = vmatpush1.msra.mxu0 0.0
      %1468 = vmatprep.subr.mxu0 0.0
      %1469 = vmatpush1.msra.mxu0 0.0
      %1470 = vmatprep.subr.mxu0 0.0
      %1471 = vmatpush1.msra.mxu0 0.0
      %1472 = vmatprep.subr.mxu0 0.0
      %1473 = vmatpush1.msra.mxu0 0.0
      %1474 = vmatprep.subr.mxu0 0.0
      %1475 = vmatpush1.msra.mxu0 0.0
      %1476 = vmatprep.subr.mxu0 0.0
      %1477 = vmatpush1.msra.mxu0 0.0
      %1478 = vmatprep.subr.mxu0 0.0
      %1479 = vmatpush1.msra.mxu0 0.0
      %1480 = vmatprep.subr.mxu0 0.0
      %1481 = vmatpush1.msra.mxu0 0.0
      %1482 = vmatprep.mubr.f32.mxu0 0.0
      %1483 = vmatmul.mubr.f32.gmra.mrb[0].mxu0 %v1416
      %v1484 = vpop.f32.mrb[0].mxu0
      %v1485 = vadd.f32 %v1412, %v1484
      %v1486 = vpop.f32.mrb[0].mxu0
      %1487 = vdwg.mxu0
      %v1488 = vadd.f32 %v1313, %v1485
      %v1489 = vsel %vm448, %v1488, 0.0
      %1490 = vadd.xlane.f32.xlu0 %v1489
      %v1491 = vpop.xlane.xlu0 %1490
      %v1492 = vmul.f32 %v1491, %v1287
      %v1493 = vsub.f32 %v1488, %v1492
      %v1494 = vmul.f32 %v1493, %v1493
      %v1495 = vsel %vm448, %v1494, 0.0
      %1496 = vadd.xlane.f32.xlu0 %v1495
      %v1497 = vpop.xlane.xlu0 %1496
      %v1498 = vmul.f32 %v1497, %v1287
      %v1499 = vadd.f32 %v1498, 1e-05
      %v1500 = vrsqrt.pop %v1499
      %v1501 = vmul.f32 %v1493, %v1500
      %v1502 = vld [vmem:[%s11] sm:$0x1]
      %v1504 = vlaneseq
      %v1505 = vshrl.u32 %v1504, 7
      %v1506 = vsub.s32 0, %v1505
      %v1507 = vrot.slane %v1502, %v1506
      %v1509 = vmul.f32 %v1501, %v1507
      %v1510 = vld [vmem:[%s12] sm:$0x1]
      %v1512 = vlaneseq
      %v1513 = vshrl.u32 %v1512, 7
      %v1514 = vsub.s32 0, %v1513
      %v1515 = vrot.slane %v1510, %v1514
      %v1517 = vadd.f32 %v1509, %v1515
      %1518 = vst.msk [vmem:[%s435] sm:$0xff] %vm448, %v1517
      %p1519 = scmp.lt.s32.totalorder %s24, 1
      %s1520 = scalar_select %p1519, %s24, 1
      %s1521 = smul.addr %s1520, 8
      %s1522 = scalar_lea.vmem %s13, %s1521
      // Predicated region
      $region73: #{transformer_model_forward.5} parent=71 // pred_check
        %p1523 = pneg %p320
      $region74: #{transformer_model_forward.5} parent=71 // pred_check_branch
        %1525 = sbr.rel (%p1523) target = $region76
      $region75: #{transformer_model_forward.5} parent=71 // pred_region
        _
      $region76: #{transformer_model_forward.5} parent=71 // pred_fallthru
        _
    $region72: #{transformer_model_forward.5} parent=5 // pred_fallthru
      _
    %p1526 = scmp.le.s32.totalorder 2, %s19
    // Predicated region
    $region77: #{transformer_model_forward.5} parent=5 // pred_check
      %p1527 = pneg %p1526
    $region78: #{transformer_model_forward.5} parent=5 // pred_check_branch
      %1529 = sbr.rel (%p1527) target = $region80
    $region79: #{transformer_model_forward.5} parent=5 // pred_region
      %s1530 = ssub.s32 %s19, 2
      // Predicated region
      $region81: #{transformer_model_forward.5} parent=79 // pred_check
        %p1531 = pneg %p326
      $region82: #{transformer_model_forward.5} parent=79 // pred_check_branch
        %1533 = sbr.rel (%p1531) target = $region84
      $region83: #{transformer_model_forward.5} parent=79 // pred_region
        %p1534 = scmp.lt.s32.totalorder %s25, 1
        %s1535 = scalar_select %p1534, %s25, 1
        %s1536 = smul.addr %s1535, 8
        %s1537 = scalar_lea.vmem %s13, %s1536
      $region84: #{transformer_model_forward.5} parent=79 // pred_fallthru
        _
    $region80: #{transformer_model_forward.5} parent=5 // pred_fallthru
      _
  $region6: #{transformer_model_forward.5} parent=0 // loop_footer
    %s23 = sadd.s32 1, %s19
  $region7: #{transformer_model_forward.5} parent=0 // loop_footer_branch
    %18 = sbr.rel target = $region3
  $region8: #{transformer_model_forward.5} parent=0 // loop_exit
    _

</llo_original>
